<compile_context>
chip_gen: v7x
topology: tpu7x:2x2x1
jax: 0.10.0
libtpu: 0.0.40
codegen_flags: <defaults>
</compile_context>

<pallas_src>
import functools

import jax
import jax.numpy as jnp
from jax import lax
from jax.experimental import pallas as pl
from jax.experimental.pallas import tpu as pltpu

# ----------------------------- configuration -----------------------------
EMBED_DIM = 32          # embed_dim
NUM_HEADS = 4           # num_transformer_heads
NUM_LAYERS = 2          # num_transformer_layers (module default 6; kept small for demo)
FFN_DIM = 64
REL_DIM = EMBED_DIM * NUM_HEADS   # 128  (SoftSelectPrototype dim)
NUM_SYMBOLS = 100
LN_EPS = 1e-5
_SUB = 8                # sublane granule


def _rup(n, m=_SUB):
    return (n + m - 1) // m * m


# ----------------------------- Pallas kernel -----------------------------
def _layernorm(x, g, b):
    mu = jnp.mean(x, axis=-1, keepdims=True)
    xc = x - mu
    var = jnp.mean(xc * xc, axis=-1, keepdims=True)
    return xc * lax.rsqrt(var + LN_EPS) * g + b


def _swap_halves(x, n):
    # exchange rows [0, n) <-> [n, 2n); n is a sublane multiple so both slices are aligned
    return jnp.concatenate([x[n:, :], x[:n, :]], axis=0)


def matcher_fused_kernel(left_ref, right_ref, pos_ref, smask_ref, hmask_ref,
                         wq_ref, bq_ref, wk_ref, bk_ref, wv_ref, bv_ref,
                         wo_ref, bo_ref, ln1g_ref, ln1b_ref,
                         w1_ref, b1_ref, w2_ref, b2_ref, ln2g_ref, ln2b_ref,
                         wout0_ref, wout1_ref, bout_ref,
                         score_ref, *, kp):
    """Fused forward.

    left/right: [Np, D] head/tail entity embeddings, rows laid out as
                (support padded to kp) | (query padded) | (false padded).
    Output    : [Np - kp, 128] — row i = score of query-row i broadcast over 128 lanes.
    """
    np_, d = left_ref.shape
    h = NUM_HEADS
    hd = d // h
    nl = wq_ref.shape[0]
    scale = 1.0 / (hd ** 0.5)

    # stack the two tokens on the sublane axis: rows [0,Np) = token0, [Np,2Np) = token1
    x = jnp.concatenate(
        [left_ref[...] + pos_ref[0:1, :], right_ref[...] + pos_ref[1:2, :]], axis=0)
    hmask = hmask_ref[...]                       # [D, D] block-diagonal per-head ones

    for l in range(nl):                          # static unroll over layers
        q = jnp.dot(x, wq_ref[l], preferred_element_type=jnp.float32) + bq_ref[l]
        k = jnp.dot(x, wk_ref[l], preferred_element_type=jnp.float32) + bk_ref[l]
        v = jnp.dot(x, wv_ref[l], preferred_element_type=jnp.float32) + bv_ref[l]

        k_sw = _swap_halves(k, np_)              # other token's keys/values, row-aligned
        v_sw = _swap_halves(v, np_)

        # per-head (self - cross) score, reduced & broadcast to full lane width via the
        # block-diagonal one-hot matmul; 2-way softmax == sigmoid of the difference.
        s_diff = jnp.dot(q * (k - k_sw), hmask,
                         preferred_element_type=jnp.float32) * scale    # [2Np, D]
        a = jax.nn.sigmoid(s_diff)                                      # self-key weight
        attn = v_sw + a * (v - v_sw)                                    # a*v + (1-a)*v_sw

        o = jnp.dot(attn, wo_ref[l], preferred_element_type=jnp.float32) + bo_ref[l]
        x = _layernorm(x + o, ln1g_ref[l], ln1b_ref[l])

        hmid = jnp.maximum(
            jnp.dot(x, w1_ref[l], preferred_element_type=jnp.float32) + b1_ref[l], 0.0)
        f = jnp.dot(hmid, w2_ref[l], preferred_element_type=jnp.float32) + b2_ref[l]
        x = _layernorm(x + f, ln2g_ref[l], ln2b_ref[l])

    # output projection of concat(token0, token1) without a lane concat
    x0 = x[:np_, :]
    x1 = x[np_:, :]
    rel = (jnp.dot(x0, wout0_ref[...], preferred_element_type=jnp.float32)
           + jnp.dot(x1, wout1_ref[...], preferred_element_type=jnp.float32)
           + bout_ref[...])                                             # [Np, Dr]

    # SoftSelectPrototype + score; query and false share the support tile.
    support_r = rel[:kp, :]                                             # [Kp, Dr]
    q_all = rel[kp:, :]                                                 # [Nq, Dr]
    dr = rel.shape[-1]
    logits = lax.dot_general(q_all, support_r, (((1,), (1,)), ((), ())),
                             preferred_element_type=jnp.float32) * (1.0 / (dr ** 0.5))
    logits = logits + smask_ref[...]                                    # mask padded support
    m = jnp.max(logits, axis=-1, keepdims=True)
    e = jnp.exp(logits - m)
    attn = e * pl.reciprocal(jnp.sum(e, axis=-1, keepdims=True), approx=True)
    center = jnp.dot(attn, support_r, preferred_element_type=jnp.float32)   # [Nq, Dr]
    score = jnp.sum(q_all * center, axis=-1, keepdims=True)                 # [Nq, 1]
    score_ref[...] = jnp.broadcast_to(score, score_ref.shape)               # lane-dense store


# ----------------------------- wrappers -----------------------------
def _pad_rows(x, n):
    return jnp.pad(x, ((0, n - x.shape[0]), (0, 0)))


def matcher_fused(left, right, smask, rel, kp):
    np_, _ = left.shape
    nq = np_ - kp
    args = (left, right, rel['pos'], smask, rel['hmask'],
            rel['wq'], rel['bq'], rel['wk'], rel['bk'], rel['wv'], rel['bv'],
            rel['wo'], rel['bo'], rel['ln1g'], rel['ln1b'],
            rel['w1'], rel['b1'], rel['w2'], rel['b2'], rel['ln2g'], rel['ln2b'],
            rel['wout0'], rel['wout1'], rel['bout'])
    vmem = pl.BlockSpec(memory_space=pltpu.MemorySpace.VMEM)
    return pl.pallas_call(
        functools.partial(matcher_fused_kernel, kp=kp),
        out_shape=jax.ShapeDtypeStruct((nq, REL_DIM), jnp.float32),
        in_specs=[vmem] * len(args),
        out_specs=vmem,
    )(*args)


def entity_encoder(pairs, embed_table, task_emb=None):
    """pairs: [N, 2] int32 symbol ids -> (head, tail) each [N, D]."""
    # TODO(synk): neighbor-attention aggregation over *_meta and dropout are omitted:
    # EntityEncoder internals are not part of the provided reference module.
    head = jnp.take(embed_table, pairs[:, 0], axis=0)
    tail = jnp.take(embed_table, pairs[:, 1], axis=0)
    if task_emb is not None:
        head = head + task_emb[None, :]
        tail = tail + task_emb[None, :]
    return head, tail


def matcher_forward(params, support, query, false=None, is_eval=False,
                    support_meta=None, query_meta=None, false_meta=None, task_emb=None):
    E = params['embed']
    rel = params['rel']
    if is_eval:
        task_emb = None
        false = query                       # negative branch computed then discarded
    K, B, Bf = support.shape[0], query.shape[0], false.shape[0]
    kp, bp, fp = _rup(K), _rup(B), _rup(Bf)

    s_h, s_t = entity_encoder(support, E, task_emb)
    q_h, q_t = entity_encoder(query, E, task_emb)
    f_h, f_t = entity_encoder(false, E, task_emb)

    left = jnp.concatenate(
        [_pad_rows(s_h, kp), _pad_rows(q_h, bp), _pad_rows(f_h, fp)], axis=0)
    right = jnp.concatenate(
        [_pad_rows(s_t, kp), _pad_rows(q_t, bp), _pad_rows(f_t, fp)], axis=0)
    smask = jnp.where(jnp.arange(kp)[None, :] < K, 0.0, -1e30).astype(jnp.float32)

    scores = matcher_fused(left, right, smask, rel, kp)   # [(bp+fp), 128]
    positive_score = scores[:B, 0]
    negative_score = None if is_eval else scores[bp:bp + Bf, 0]
    return positive_score, negative_score


# ----------------------------- deterministic parameters -----------------------------
def init_params(key):
    D, H, L, F, Dr = EMBED_DIM, NUM_HEADS, NUM_LAYERS, FFN_DIM, REL_DIM
    ks = jax.random.split(key, 10)

    def nrm(k, shape, scale):
        return jax.random.normal(k, shape, jnp.float32) * scale

    head_ids = jnp.arange(D) // (D // H)
    hmask = (head_ids[:, None] == head_ids[None, :]).astype(jnp.float32)   # [D, D]

    rel = dict(
        pos=nrm(ks[0], (2, D), 0.02),
        hmask=hmask,
        wq=nrm(ks[1], (L, D, D), D ** -0.5),
        bq=jnp.zeros((L, 1, D), jnp.float32),
        wk=nrm(ks[2], (L, D, D), D ** -0.5),
        bk=jnp.zeros((L, 1, D), jnp.float32),
        wv=nrm(ks[3], (L, D, D), D ** -0.5),
        bv=jnp.zeros((L, 1, D), jnp.float32),
        wo=nrm(ks[4], (L, D, D), D ** -0.5),
        bo=jnp.zeros((L, 1, D), jnp.float32),
        ln1g=jnp.ones((L, 1, D), jnp.float32),
        ln1b=jnp.zeros((L, 1, D), jnp.float32),
        w1=nrm(ks[5], (L, D, F), D ** -0.5),
        b1=jnp.zeros((L, 1, F), jnp.float32),
        w2=nrm(ks[6], (L, F, D), F ** -0.5),
        b2=jnp.zeros((L, 1, D), jnp.float32),
        ln2g=jnp.ones((L, 1, D), jnp.float32),
        ln2b=jnp.zeros((L, 1, D), jnp.float32),
        wout0=nrm(ks[7], (D, Dr), (2 * D) ** -0.5),
        wout1=nrm(ks[8], (D, Dr), (2 * D) ** -0.5),
        bout=jnp.zeros((1, Dr), jnp.float32),
    )
    embed = nrm(ks[9], (NUM_SYMBOLS, D), 0.1)
    return dict(embed=embed, rel=rel)


# ----------------------------- main -----------------------------
if __name__ == "__main__":
    key = jax.random.PRNGKey(0)
    pkey, dkey = jax.random.split(key)
    params = init_params(pkey)

    k1, k2, k3, k4 = jax.random.split(dkey, 4)
    K, B = 3, 8   # few-shot support size, query/false batch
    support = jax.random.randint(k1, (K, 2), 0, NUM_SYMBOLS, jnp.int32)
    query = jax.random.randint(k2, (B, 2), 0, NUM_SYMBOLS, jnp.int32)
    false = jax.random.randint(k3, (B, 2), 0, NUM_SYMBOLS, jnp.int32)
    task_emb = jax.random.normal(k4, (EMBED_DIM,), jnp.float32) * 0.1

    # training-mode forward
    pos_score, neg_score = matcher_forward(
        params, support, query, false=false, is_eval=False, task_emb=task_emb)
    jax.block_until_ready((pos_score, neg_score))
    assert pos_score.shape == (B,) and neg_score.shape == (B,)
    assert bool(jnp.all(jnp.isfinite(pos_score))) and bool(jnp.all(jnp.isfinite(neg_score)))

    # eval-mode forward
    pos_eval, neg_eval = matcher_forward(params, support, query, is_eval=True)
    jax.block_until_ready(pos_eval)
    assert pos_eval.shape == (B,) and neg_eval is None
    assert bool(jnp.all(jnp.isfinite(pos_eval)))

    print("KERNEL_OK")
</pallas_src>

<mosaic_0001>
module attributes {stable_mosaic.version = 11 : i64} {
  func.func @matcher_fused_kernel(%arg0: memref<24x32xf32, #tpu.memory_space<vmem>>, %arg1: memref<24x32xf32, #tpu.memory_space<vmem>>, %arg2: memref<2x32xf32, #tpu.memory_space<vmem>>, %arg3: memref<1x8xf32, #tpu.memory_space<vmem>>, %arg4: memref<32x32xf32, #tpu.memory_space<vmem>>, %arg5: memref<2x32x32xf32, #tpu.memory_space<vmem>>, %arg6: memref<2x1x32xf32, #tpu.memory_space<vmem>>, %arg7: memref<2x32x32xf32, #tpu.memory_space<vmem>>, %arg8: memref<2x1x32xf32, #tpu.memory_space<vmem>>, %arg9: memref<2x32x32xf32, #tpu.memory_space<vmem>>, %arg10: memref<2x1x32xf32, #tpu.memory_space<vmem>>, %arg11: memref<2x32x32xf32, #tpu.memory_space<vmem>>, %arg12: memref<2x1x32xf32, #tpu.memory_space<vmem>>, %arg13: memref<2x1x32xf32, #tpu.memory_space<vmem>>, %arg14: memref<2x1x32xf32, #tpu.memory_space<vmem>>, %arg15: memref<2x32x64xf32, #tpu.memory_space<vmem>>, %arg16: memref<2x1x64xf32, #tpu.memory_space<vmem>>, %arg17: memref<2x64x32xf32, #tpu.memory_space<vmem>>, %arg18: memref<2x1x32xf32, #tpu.memory_space<vmem>>, %arg19: memref<2x1x32xf32, #tpu.memory_space<vmem>>, %arg20: memref<2x1x32xf32, #tpu.memory_space<vmem>>, %arg21: memref<32x128xf32, #tpu.memory_space<vmem>>, %arg22: memref<32x128xf32, #tpu.memory_space<vmem>>, %arg23: memref<1x128xf32, #tpu.memory_space<vmem>>, %arg24: memref<16x128xf32, #tpu.memory_space<vmem>>) attributes {dimension_semantics = [], scalar_prefetch = 0 : i64, scratch_operands = 0 : i64, tpu.core_type = #tpu.core_type<tc>} {
    %c0 = arith.constant 0 : index
    %c0_0 = arith.constant 0 : index
    %0 = vector.load %arg0[%c0, %c0_0] : memref<24x32xf32, #tpu.memory_space<vmem>>, vector<24x32xf32>
    %c0_1 = arith.constant 0 : index
    %c0_2 = arith.constant 0 : index
    %1 = vector.load %arg2[%c0_1, %c0_2] : memref<2x32xf32, #tpu.memory_space<vmem>>, vector<1x32xf32>
    %2 = vector.broadcast %1 : vector<1x32xf32> to vector<24x32xf32>
    %3 = arith.addf %0, %2 : vector<24x32xf32>
    %c0_3 = arith.constant 0 : index
    %c0_4 = arith.constant 0 : index
    %4 = vector.load %arg1[%c0_3, %c0_4] : memref<24x32xf32, #tpu.memory_space<vmem>>, vector<24x32xf32>
    %c1 = arith.constant 1 : index
    %c0_5 = arith.constant 0 : index
    %5 = vector.load %arg2[%c1, %c0_5] : memref<2x32xf32, #tpu.memory_space<vmem>>, vector<1x32xf32>
    %6 = vector.broadcast %5 : vector<1x32xf32> to vector<24x32xf32>
    %7 = arith.addf %4, %6 : vector<24x32xf32>
    %8 = tpu.concatenate %3, %7 in 0 : vector<24x32xf32>, vector<24x32xf32> -> vector<48x32xf32>
    %c0_6 = arith.constant 0 : index
    %c0_7 = arith.constant 0 : index
    %9 = vector.load %arg4[%c0_6, %c0_7] : memref<32x32xf32, #tpu.memory_space<vmem>>, vector<32x32xf32>
    %c0_8 = arith.constant 0 : index
    %c0_9 = arith.constant 0 : index
    %c0_10 = arith.constant 0 : index
    %10 = vector.load %arg5[%c0_8, %c0_9, %c0_10] : memref<2x32x32xf32, #tpu.memory_space<vmem>>, vector<1x32x32xf32>
    %11 = vector.shape_cast %10 : vector<1x32x32xf32> to vector<32x32xf32>
    %cst = arith.constant dense<0.000000e+00> : vector<48x32xf32>
    %12 = tpu.matmul %8, %11, %cst {dimension_numbers = #tpu.dot_dimension_numbers<[1], [0], [0], [1], [0, 0, 1, 1], [], []>} : vector<48x32xf32>, vector<32x32xf32>, vector<48x32xf32> -> vector<48x32xf32>
    %c0_11 = arith.constant 0 : index
    %c0_12 = arith.constant 0 : index
    %c0_13 = arith.constant 0 : index
    %13 = vector.load %arg6[%c0_11, %c0_12, %c0_13] : memref<2x1x32xf32, #tpu.memory_space<vmem>>, vector<1x1x32xf32>
    %14 = vector.shape_cast %13 : vector<1x1x32xf32> to vector<1x32xf32>
    %15 = vector.broadcast %14 : vector<1x32xf32> to vector<48x32xf32>
    %16 = arith.addf %12, %15 : vector<48x32xf32>
    %c0_14 = arith.constant 0 : index
    %c0_15 = arith.constant 0 : index
    %c0_16 = arith.constant 0 : index
    %17 = vector.load %arg7[%c0_14, %c0_15, %c0_16] : memref<2x32x32xf32, #tpu.memory_space<vmem>>, vector<1x32x32xf32>
    %18 = vector.shape_cast %17 : vector<1x32x32xf32> to vector<32x32xf32>
    %cst_17 = arith.constant dense<0.000000e+00> : vector<48x32xf32>
    %19 = tpu.matmul %8, %18, %cst_17 {dimension_numbers = #tpu.dot_dimension_numbers<[1], [0], [0], [1], [0, 0, 1, 1], [], []>} : vector<48x32xf32>, vector<32x32xf32>, vector<48x32xf32> -> vector<48x32xf32>
    %c0_18 = arith.constant 0 : index
    %c0_19 = arith.constant 0 : index
    %c0_20 = arith.constant 0 : index
    %20 = vector.load %arg8[%c0_18, %c0_19, %c0_20] : memref<2x1x32xf32, #tpu.memory_space<vmem>>, vector<1x1x32xf32>
    %21 = vector.shape_cast %20 : vector<1x1x32xf32> to vector<1x32xf32>
    %22 = vector.broadcast %21 : vector<1x32xf32> to vector<48x32xf32>
    %23 = arith.addf %19, %22 : vector<48x32xf32>
    %c0_21 = arith.constant 0 : index
    %c0_22 = arith.constant 0 : index
    %c0_23 = arith.constant 0 : index
    %24 = vector.load %arg9[%c0_21, %c0_22, %c0_23] : memref<2x32x32xf32, #tpu.memory_space<vmem>>, vector<1x32x32xf32>
    %25 = vector.shape_cast %24 : vector<1x32x32xf32> to vector<32x32xf32>
    %cst_24 = arith.constant dense<0.000000e+00> : vector<48x32xf32>
    %26 = tpu.matmul %8, %25, %cst_24 {dimension_numbers = #tpu.dot_dimension_numbers<[1], [0], [0], [1], [0, 0, 1, 1], [], []>} : vector<48x32xf32>, vector<32x32xf32>, vector<48x32xf32> -> vector<48x32xf32>
    %c0_25 = arith.constant 0 : index
    %c0_26 = arith.constant 0 : index
    %c0_27 = arith.constant 0 : index
    %27 = vector.load %arg10[%c0_25, %c0_26, %c0_27] : memref<2x1x32xf32, #tpu.memory_space<vmem>>, vector<1x1x32xf32>
    %28 = vector.shape_cast %27 : vector<1x1x32xf32> to vector<1x32xf32>
    %29 = vector.broadcast %28 : vector<1x32xf32> to vector<48x32xf32>
    %30 = arith.addf %26, %29 : vector<48x32xf32>
    %31 = vector.extract_strided_slice %23 {offsets = [24, 0], sizes = [24, 32], strides = [1, 1]} : vector<48x32xf32> to vector<24x32xf32>
    %32 = vector.extract_strided_slice %23 {offsets = [0, 0], sizes = [24, 32], strides = [1, 1]} : vector<48x32xf32> to vector<24x32xf32>
    %33 = tpu.concatenate %31, %32 in 0 : vector<24x32xf32>, vector<24x32xf32> -> vector<48x32xf32>
    %34 = vector.extract_strided_slice %30 {offsets = [24, 0], sizes = [24, 32], strides = [1, 1]} : vector<48x32xf32> to vector<24x32xf32>
    %35 = vector.extract_strided_slice %30 {offsets = [0, 0], sizes = [24, 32], strides = [1, 1]} : vector<48x32xf32> to vector<24x32xf32>
    %36 = tpu.concatenate %34, %35 in 0 : vector<24x32xf32>, vector<24x32xf32> -> vector<48x32xf32>
    %37 = arith.subf %23, %33 : vector<48x32xf32>
    %38 = arith.mulf %16, %37 : vector<48x32xf32>
    %cst_28 = arith.constant dense<0.000000e+00> : vector<48x32xf32>
    %39 = tpu.matmul %38, %9, %cst_28 {dimension_numbers = #tpu.dot_dimension_numbers<[1], [0], [0], [1], [0, 0, 1, 1], [], []>} : vector<48x32xf32>, vector<32x32xf32>, vector<48x32xf32> -> vector<48x32xf32>
    %cst_29 = arith.constant 0.353553385 : f32
    %40 = vector.broadcast %cst_29 : f32 to vector<48x32xf32>
    %41 = arith.mulf %39, %40 : vector<48x32xf32>
    %42 = arith.negf %41 : vector<48x32xf32>
    %43 = math.exp %42 : vector<48x32xf32>
    %cst_30 = arith.constant 1.000000e+00 : f32
    %44 = vector.broadcast %cst_30 : f32 to vector<48x32xf32>
    %45 = arith.addf %44, %43 : vector<48x32xf32>
    %46 = arith.divf %44, %45 : vector<48x32xf32>
    %47 = arith.subf %30, %36 : vector<48x32xf32>
    %48 = arith.mulf %46, %47 : vector<48x32xf32>
    %49 = arith.addf %36, %48 : vector<48x32xf32>
    %c0_31 = arith.constant 0 : index
    %c0_32 = arith.constant 0 : index
    %c0_33 = arith.constant 0 : index
    %50 = vector.load %arg11[%c0_31, %c0_32, %c0_33] : memref<2x32x32xf32, #tpu.memory_space<vmem>>, vector<1x32x32xf32>
    %51 = vector.shape_cast %50 : vector<1x32x32xf32> to vector<32x32xf32>
    %cst_34 = arith.constant dense<0.000000e+00> : vector<48x32xf32>
    %52 = tpu.matmul %49, %51, %cst_34 {dimension_numbers = #tpu.dot_dimension_numbers<[1], [0], [0], [1], [0, 0, 1, 1], [], []>} : vector<48x32xf32>, vector<32x32xf32>, vector<48x32xf32> -> vector<48x32xf32>
    %c0_35 = arith.constant 0 : index
    %c0_36 = arith.constant 0 : index
    %c0_37 = arith.constant 0 : index
    %53 = vector.load %arg12[%c0_35, %c0_36, %c0_37] : memref<2x1x32xf32, #tpu.memory_space<vmem>>, vector<1x1x32xf32>
    %54 = vector.shape_cast %53 : vector<1x1x32xf32> to vector<1x32xf32>
    %55 = vector.broadcast %54 : vector<1x32xf32> to vector<48x32xf32>
    %56 = arith.addf %52, %55 : vector<48x32xf32>
    %57 = arith.addf %8, %56 : vector<48x32xf32>
    %c0_38 = arith.constant 0 : index
    %c0_39 = arith.constant 0 : index
    %c0_40 = arith.constant 0 : index
    %58 = vector.load %arg13[%c0_38, %c0_39, %c0_40] : memref<2x1x32xf32, #tpu.memory_space<vmem>>, vector<1x1x32xf32>
    %59 = vector.shape_cast %58 : vector<1x1x32xf32> to vector<1x32xf32>
    %c0_41 = arith.constant 0 : index
    %c0_42 = arith.constant 0 : index
    %c0_43 = arith.constant 0 : index
    %60 = vector.load %arg14[%c0_41, %c0_42, %c0_43] : memref<2x1x32xf32, #tpu.memory_space<vmem>>, vector<1x1x32xf32>
    %61 = vector.shape_cast %60 : vector<1x1x32xf32> to vector<1x32xf32>
    %cst_44 = arith.constant dense<0.000000e+00> : vector<48xf32>
    %62 = vector.multi_reduction <add>, %57, %cst_44 [1] : vector<48x32xf32> to vector<48xf32>
    %63 = vector.shape_cast %62 : vector<48xf32> to vector<48x1xf32>
    %cst_45 = arith.constant 3.200000e+01 : f32
    %64 = vector.broadcast %cst_45 : f32 to vector<48x1xf32>
    %65 = arith.divf %63, %64 : vector<48x1xf32>
    %66 = vector.broadcast %65 : vector<48x1xf32> to vector<48x32xf32>
    %67 = arith.subf %57, %66 : vector<48x32xf32>
    %68 = arith.mulf %67, %67 : vector<48x32xf32>
    %cst_46 = arith.constant dense<0.000000e+00> : vector<48xf32>
    %69 = vector.multi_reduction <add>, %68, %cst_46 [1] : vector<48x32xf32> to vector<48xf32>
    %70 = vector.shape_cast %69 : vector<48xf32> to vector<48x1xf32>
    %cst_47 = arith.constant 3.200000e+01 : f32
    %71 = vector.broadcast %cst_47 : f32 to vector<48x1xf32>
    %72 = arith.divf %70, %71 : vector<48x1xf32>
    %cst_48 = arith.constant 9.99999974E-6 : f32
    %73 = vector.broadcast %cst_48 : f32 to vector<48x1xf32>
    %74 = arith.addf %72, %73 : vector<48x1xf32>
    %75 = math.rsqrt %74 : vector<48x1xf32>
    %76 = vector.broadcast %75 : vector<48x1xf32> to vector<48x32xf32>
    %77 = arith.mulf %67, %76 : vector<48x32xf32>
    %78 = vector.broadcast %59 : vector<1x32xf32> to vector<48x32xf32>
    %79 = arith.mulf %77, %78 : vector<48x32xf32>
    %80 = vector.broadcast %61 : vector<1x32xf32> to vector<48x32xf32>
    %81 = arith.addf %79, %80 : vector<48x32xf32>
    %c0_49 = arith.constant 0 : index
    %c0_50 = arith.constant 0 : index
    %c0_51 = arith.constant 0 : index
    %82 = vector.load %arg15[%c0_49, %c0_50, %c0_51] : memref<2x32x64xf32, #tpu.memory_space<vmem>>, vector<1x32x64xf32>
    %83 = vector.shape_cast %82 : vector<1x32x64xf32> to vector<32x64xf32>
    %cst_52 = arith.constant dense<0.000000e+00> : vector<48x64xf32>
    %84 = tpu.matmul %81, %83, %cst_52 {dimension_numbers = #tpu.dot_dimension_numbers<[1], [0], [0], [1], [0, 0, 1, 1], [], []>} : vector<48x32xf32>, vector<32x64xf32>, vector<48x64xf32> -> vector<48x64xf32>
    %c0_53 = arith.constant 0 : index
    %c0_54 = arith.constant 0 : index
    %c0_55 = arith.constant 0 : index
    %85 = vector.load %arg16[%c0_53, %c0_54, %c0_55] : memref<2x1x64xf32, #tpu.memory_space<vmem>>, vector<1x1x64xf32>
    %86 = vector.shape_cast %85 : vector<1x1x64xf32> to vector<1x64xf32>
    %87 = vector.broadcast %86 : vector<1x64xf32> to vector<48x64xf32>
    %88 = arith.addf %84, %87 : vector<48x64xf32>
    %cst_56 = arith.constant 0.000000e+00 : f32
    %89 = vector.broadcast %cst_56 : f32 to vector<48x64xf32>
    %90 = arith.maximumf %88, %89 : vector<48x64xf32>
    %c0_57 = arith.constant 0 : index
    %c0_58 = arith.constant 0 : index
    %c0_59 = arith.constant 0 : index
    %91 = vector.load %arg17[%c0_57, %c0_58, %c0_59] : memref<2x64x32xf32, #tpu.memory_space<vmem>>, vector<1x64x32xf32>
    %92 = vector.shape_cast %91 : vector<1x64x32xf32> to vector<64x32xf32>
    %cst_60 = arith.constant dense<0.000000e+00> : vector<48x32xf32>
    %93 = tpu.matmul %90, %92, %cst_60 {dimension_numbers = #tpu.dot_dimension_numbers<[1], [0], [0], [1], [0, 0, 1, 1], [], []>} : vector<48x64xf32>, vector<64x32xf32>, vector<48x32xf32> -> vector<48x32xf32>
    %c0_61 = arith.constant 0 : index
    %c0_62 = arith.constant 0 : index
    %c0_63 = arith.constant 0 : index
    %94 = vector.load %arg18[%c0_61, %c0_62, %c0_63] : memref<2x1x32xf32, #tpu.memory_space<vmem>>, vector<1x1x32xf32>
    %95 = vector.shape_cast %94 : vector<1x1x32xf32> to vector<1x32xf32>
    %96 = vector.broadcast %95 : vector<1x32xf32> to vector<48x32xf32>
    %97 = arith.addf %93, %96 : vector<48x32xf32>
    %98 = arith.addf %81, %97 : vector<48x32xf32>
    %c0_64 = arith.constant 0 : index
    %c0_65 = arith.constant 0 : index
    %c0_66 = arith.constant 0 : index
    %99 = vector.load %arg19[%c0_64, %c0_65, %c0_66] : memref<2x1x32xf32, #tpu.memory_space<vmem>>, vector<1x1x32xf32>
    %100 = vector.shape_cast %99 : vector<1x1x32xf32> to vector<1x32xf32>
    %c0_67 = arith.constant 0 : index
    %c0_68 = arith.constant 0 : index
    %c0_69 = arith.constant 0 : index
    %101 = vector.load %arg20[%c0_67, %c0_68, %c0_69] : memref<2x1x32xf32, #tpu.memory_space<vmem>>, vector<1x1x32xf32>
    %102 = vector.shape_cast %101 : vector<1x1x32xf32> to vector<1x32xf32>
    %cst_70 = arith.constant dense<0.000000e+00> : vector<48xf32>
    %103 = vector.multi_reduction <add>, %98, %cst_70 [1] : vector<48x32xf32> to vector<48xf32>
    %104 = vector.shape_cast %103 : vector<48xf32> to vector<48x1xf32>
    %cst_71 = arith.constant 3.200000e+01 : f32
    %105 = vector.broadcast %cst_71 : f32 to vector<48x1xf32>
    %106 = arith.divf %104, %105 : vector<48x1xf32>
    %107 = vector.broadcast %106 : vector<48x1xf32> to vector<48x32xf32>
    %108 = arith.subf %98, %107 : vector<48x32xf32>
    %109 = arith.mulf %108, %108 : vector<48x32xf32>
    %cst_72 = arith.constant dense<0.000000e+00> : vector<48xf32>
    %110 = vector.multi_reduction <add>, %109, %cst_72 [1] : vector<48x32xf32> to vector<48xf32>
    %111 = vector.shape_cast %110 : vector<48xf32> to vector<48x1xf32>
    %cst_73 = arith.constant 3.200000e+01 : f32
    %112 = vector.broadcast %cst_73 : f32 to vector<48x1xf32>
    %113 = arith.divf %111, %112 : vector<48x1xf32>
    %cst_74 = arith.constant 9.99999974E-6 : f32
    %114 = vector.broadcast %cst_74 : f32 to vector<48x1xf32>
    %115 = arith.addf %113, %114 : vector<48x1xf32>
    %116 = math.rsqrt %115 : vector<48x1xf32>
    %117 = vector.broadcast %116 : vector<48x1xf32> to vector<48x32xf32>
    %118 = arith.mulf %108, %117 : vector<48x32xf32>
    %119 = vector.broadcast %100 : vector<1x32xf32> to vector<48x32xf32>
    %120 = arith.mulf %118, %119 : vector<48x32xf32>
    %121 = vector.broadcast %102 : vector<1x32xf32> to vector<48x32xf32>
    %122 = arith.addf %120, %121 : vector<48x32xf32>
    %c1_75 = arith.constant 1 : index
    %c0_76 = arith.constant 0 : index
    %c0_77 = arith.constant 0 : index
    %123 = vector.load %arg5[%c1_75, %c0_76, %c0_77] : memref<2x32x32xf32, #tpu.memory_space<vmem>>, vector<1x32x32xf32>
    %124 = vector.shape_cast %123 : vector<1x32x32xf32> to vector<32x32xf32>
    %cst_78 = arith.constant dense<0.000000e+00> : vector<48x32xf32>
    %125 = tpu.matmul %122, %124, %cst_78 {dimension_numbers = #tpu.dot_dimension_numbers<[1], [0], [0], [1], [0, 0, 1, 1], [], []>} : vector<48x32xf32>, vector<32x32xf32>, vector<48x32xf32> -> vector<48x32xf32>
    %c1_79 = arith.constant 1 : index
    %c0_80 = arith.constant 0 : index
    %c0_81 = arith.constant 0 : index
    %126 = vector.load %arg6[%c1_79, %c0_80, %c0_81] : memref<2x1x32xf32, #tpu.memory_space<vmem>>, vector<1x1x32xf32>
    %127 = vector.shape_cast %126 : vector<1x1x32xf32> to vector<1x32xf32>
    %128 = vector.broadcast %127 : vector<1x32xf32> to vector<48x32xf32>
    %129 = arith.addf %125, %128 : vector<48x32xf32>
    %c1_82 = arith.constant 1 : index
    %c0_83 = arith.constant 0 : index
    %c0_84 = arith.constant 0 : index
    %130 = vector.load %arg7[%c1_82, %c0_83, %c0_84] : memref<2x32x32xf32, #tpu.memory_space<vmem>>, vector<1x32x32xf32>
    %131 = vector.shape_cast %130 : vector<1x32x32xf32> to vector<32x32xf32>
    %cst_85 = arith.constant dense<0.000000e+00> : vector<48x32xf32>
    %132 = tpu.matmul %122, %131, %cst_85 {dimension_numbers = #tpu.dot_dimension_numbers<[1], [0], [0], [1], [0, 0, 1, 1], [], []>} : vector<48x32xf32>, vector<32x32xf32>, vector<48x32xf32> -> vector<48x32xf32>
    %c1_86 = arith.constant 1 : index
    %c0_87 = arith.constant 0 : index
    %c0_88 = arith.constant 0 : index
    %133 = vector.load %arg8[%c1_86, %c0_87, %c0_88] : memref<2x1x32xf32, #tpu.memory_space<vmem>>, vector<1x1x32xf32>
    %134 = vector.shape_cast %133 : vector<1x1x32xf32> to vector<1x32xf32>
    %135 = vector.broadcast %134 : vector<1x32xf32> to vector<48x32xf32>
    %136 = arith.addf %132, %135 : vector<48x32xf32>
    %c1_89 = arith.constant 1 : index
    %c0_90 = arith.constant 0 : index
    %c0_91 = arith.constant 0 : index
    %137 = vector.load %arg9[%c1_89, %c0_90, %c0_91] : memref<2x32x32xf32, #tpu.memory_space<vmem>>, vector<1x32x32xf32>
    %138 = vector.shape_cast %137 : vector<1x32x32xf32> to vector<32x32xf32>
    %cst_92 = arith.constant dense<0.000000e+00> : vector<48x32xf32>
    %139 = tpu.matmul %122, %138, %cst_92 {dimension_numbers = #tpu.dot_dimension_numbers<[1], [0], [0], [1], [0, 0, 1, 1], [], []>} : vector<48x32xf32>, vector<32x32xf32>, vector<48x32xf32> -> vector<48x32xf32>
    %c1_93 = arith.constant 1 : index
    %c0_94 = arith.constant 0 : index
    %c0_95 = arith.constant 0 : index
    %140 = vector.load %arg10[%c1_93, %c0_94, %c0_95] : memref<2x1x32xf32, #tpu.memory_space<vmem>>, vector<1x1x32xf32>
    %141 = vector.shape_cast %140 : vector<1x1x32xf32> to vector<1x32xf32>
    %142 = vector.broadcast %141 : vector<1x32xf32> to vector<48x32xf32>
    %143 = arith.addf %139, %142 : vector<48x32xf32>
    %144 = vector.extract_strided_slice %136 {offsets = [24, 0], sizes = [24, 32], strides = [1, 1]} : vector<48x32xf32> to vector<24x32xf32>
    %145 = vector.extract_strided_slice %136 {offsets = [0, 0], sizes = [24, 32], strides = [1, 1]} : vector<48x32xf32> to vector<24x32xf32>
    %146 = tpu.concatenate %144, %145 in 0 : vector<24x32xf32>, vector<24x32xf32> -> vector<48x32xf32>
    %147 = vector.extract_strided_slice %143 {offsets = [24, 0], sizes = [24, 32], strides = [1, 1]} : vector<48x32xf32> to vector<24x32xf32>
    %148 = vector.extract_strided_slice %143 {offsets = [0, 0], sizes = [24, 32], strides = [1, 1]} : vector<48x32xf32> to vector<24x32xf32>
    %149 = tpu.concatenate %147, %148 in 0 : vector<24x32xf32>, vector<24x32xf32> -> vector<48x32xf32>
    %150 = arith.subf %136, %146 : vector<48x32xf32>
    %151 = arith.mulf %129, %150 : vector<48x32xf32>
    %cst_96 = arith.constant dense<0.000000e+00> : vector<48x32xf32>
    %152 = tpu.matmul %151, %9, %cst_96 {dimension_numbers = #tpu.dot_dimension_numbers<[1], [0], [0], [1], [0, 0, 1, 1], [], []>} : vector<48x32xf32>, vector<32x32xf32>, vector<48x32xf32> -> vector<48x32xf32>
    %cst_97 = arith.constant 0.353553385 : f32
    %153 = vector.broadcast %cst_97 : f32 to vector<48x32xf32>
    %154 = arith.mulf %152, %153 : vector<48x32xf32>
    %155 = arith.negf %154 : vector<48x32xf32>
    %156 = math.exp %155 : vector<48x32xf32>
    %cst_98 = arith.constant 1.000000e+00 : f32
    %157 = vector.broadcast %cst_98 : f32 to vector<48x32xf32>
    %158 = arith.addf %157, %156 : vector<48x32xf32>
    %159 = arith.divf %157, %158 : vector<48x32xf32>
    %160 = arith.subf %143, %149 : vector<48x32xf32>
    %161 = arith.mulf %159, %160 : vector<48x32xf32>
    %162 = arith.addf %149, %161 : vector<48x32xf32>
    %c1_99 = arith.constant 1 : index
    %c0_100 = arith.constant 0 : index
    %c0_101 = arith.constant 0 : index
    %163 = vector.load %arg11[%c1_99, %c0_100, %c0_101] : memref<2x32x32xf32, #tpu.memory_space<vmem>>, vector<1x32x32xf32>
    %164 = vector.shape_cast %163 : vector<1x32x32xf32> to vector<32x32xf32>
    %cst_102 = arith.constant dense<0.000000e+00> : vector<48x32xf32>
    %165 = tpu.matmul %162, %164, %cst_102 {dimension_numbers = #tpu.dot_dimension_numbers<[1], [0], [0], [1], [0, 0, 1, 1], [], []>} : vector<48x32xf32>, vector<32x32xf32>, vector<48x32xf32> -> vector<48x32xf32>
    %c1_103 = arith.constant 1 : index
    %c0_104 = arith.constant 0 : index
    %c0_105 = arith.constant 0 : index
    %166 = vector.load %arg12[%c1_103, %c0_104, %c0_105] : memref<2x1x32xf32, #tpu.memory_space<vmem>>, vector<1x1x32xf32>
    %167 = vector.shape_cast %166 : vector<1x1x32xf32> to vector<1x32xf32>
    %168 = vector.broadcast %167 : vector<1x32xf32> to vector<48x32xf32>
    %169 = arith.addf %165, %168 : vector<48x32xf32>
    %170 = arith.addf %122, %169 : vector<48x32xf32>
    %c1_106 = arith.constant 1 : index
    %c0_107 = arith.constant 0 : index
    %c0_108 = arith.constant 0 : index
    %171 = vector.load %arg13[%c1_106, %c0_107, %c0_108] : memref<2x1x32xf32, #tpu.memory_space<vmem>>, vector<1x1x32xf32>
    %172 = vector.shape_cast %171 : vector<1x1x32xf32> to vector<1x32xf32>
    %c1_109 = arith.constant 1 : index
    %c0_110 = arith.constant 0 : index
    %c0_111 = arith.constant 0 : index
    %173 = vector.load %arg14[%c1_109, %c0_110, %c0_111] : memref<2x1x32xf32, #tpu.memory_space<vmem>>, vector<1x1x32xf32>
    %174 = vector.shape_cast %173 : vector<1x1x32xf32> to vector<1x32xf32>
    %cst_112 = arith.constant dense<0.000000e+00> : vector<48xf32>
    %175 = vector.multi_reduction <add>, %170, %cst_112 [1] : vector<48x32xf32> to vector<48xf32>
    %176 = vector.shape_cast %175 : vector<48xf32> to vector<48x1xf32>
    %cst_113 = arith.constant 3.200000e+01 : f32
    %177 = vector.broadcast %cst_113 : f32 to vector<48x1xf32>
    %178 = arith.divf %176, %177 : vector<48x1xf32>
    %179 = vector.broadcast %178 : vector<48x1xf32> to vector<48x32xf32>
    %180 = arith.subf %170, %179 : vector<48x32xf32>
    %181 = arith.mulf %180, %180 : vector<48x32xf32>
    %cst_114 = arith.constant dense<0.000000e+00> : vector<48xf32>
    %182 = vector.multi_reduction <add>, %181, %cst_114 [1] : vector<48x32xf32> to vector<48xf32>
    %183 = vector.shape_cast %182 : vector<48xf32> to vector<48x1xf32>
    %cst_115 = arith.constant 3.200000e+01 : f32
    %184 = vector.broadcast %cst_115 : f32 to vector<48x1xf32>
    %185 = arith.divf %183, %184 : vector<48x1xf32>
    %cst_116 = arith.constant 9.99999974E-6 : f32
    %186 = vector.broadcast %cst_116 : f32 to vector<48x1xf32>
    %187 = arith.addf %185, %186 : vector<48x1xf32>
    %188 = math.rsqrt %187 : vector<48x1xf32>
    %189 = vector.broadcast %188 : vector<48x1xf32> to vector<48x32xf32>
    %190 = arith.mulf %180, %189 : vector<48x32xf32>
    %191 = vector.broadcast %172 : vector<1x32xf32> to vector<48x32xf32>
    %192 = arith.mulf %190, %191 : vector<48x32xf32>
    %193 = vector.broadcast %174 : vector<1x32xf32> to vector<48x32xf32>
    %194 = arith.addf %192, %193 : vector<48x32xf32>
    %c1_117 = arith.constant 1 : index
    %c0_118 = arith.constant 0 : index
    %c0_119 = arith.constant 0 : index
    %195 = vector.load %arg15[%c1_117, %c0_118, %c0_119] : memref<2x32x64xf32, #tpu.memory_space<vmem>>, vector<1x32x64xf32>
    %196 = vector.shape_cast %195 : vector<1x32x64xf32> to vector<32x64xf32>
    %cst_120 = arith.constant dense<0.000000e+00> : vector<48x64xf32>
    %197 = tpu.matmul %194, %196, %cst_120 {dimension_numbers = #tpu.dot_dimension_numbers<[1], [0], [0], [1], [0, 0, 1, 1], [], []>} : vector<48x32xf32>, vector<32x64xf32>, vector<48x64xf32> -> vector<48x64xf32>
    %c1_121 = arith.constant 1 : index
    %c0_122 = arith.constant 0 : index
    %c0_123 = arith.constant 0 : index
    %198 = vector.load %arg16[%c1_121, %c0_122, %c0_123] : memref<2x1x64xf32, #tpu.memory_space<vmem>>, vector<1x1x64xf32>
    %199 = vector.shape_cast %198 : vector<1x1x64xf32> to vector<1x64xf32>
    %200 = vector.broadcast %199 : vector<1x64xf32> to vector<48x64xf32>
    %201 = arith.addf %197, %200 : vector<48x64xf32>
    %cst_124 = arith.constant 0.000000e+00 : f32
    %202 = vector.broadcast %cst_124 : f32 to vector<48x64xf32>
    %203 = arith.maximumf %201, %202 : vector<48x64xf32>
    %c1_125 = arith.constant 1 : index
    %c0_126 = arith.constant 0 : index
    %c0_127 = arith.constant 0 : index
    %204 = vector.load %arg17[%c1_125, %c0_126, %c0_127] : memref<2x64x32xf32, #tpu.memory_space<vmem>>, vector<1x64x32xf32>
    %205 = vector.shape_cast %204 : vector<1x64x32xf32> to vector<64x32xf32>
    %cst_128 = arith.constant dense<0.000000e+00> : vector<48x32xf32>
    %206 = tpu.matmul %203, %205, %cst_128 {dimension_numbers = #tpu.dot_dimension_numbers<[1], [0], [0], [1], [0, 0, 1, 1], [], []>} : vector<48x64xf32>, vector<64x32xf32>, vector<48x32xf32> -> vector<48x32xf32>
    %c1_129 = arith.constant 1 : index
    %c0_130 = arith.constant 0 : index
    %c0_131 = arith.constant 0 : index
    %207 = vector.load %arg18[%c1_129, %c0_130, %c0_131] : memref<2x1x32xf32, #tpu.memory_space<vmem>>, vector<1x1x32xf32>
    %208 = vector.shape_cast %207 : vector<1x1x32xf32> to vector<1x32xf32>
    %209 = vector.broadcast %208 : vector<1x32xf32> to vector<48x32xf32>
    %210 = arith.addf %206, %209 : vector<48x32xf32>
    %211 = arith.addf %194, %210 : vector<48x32xf32>
    %c1_132 = arith.constant 1 : index
    %c0_133 = arith.constant 0 : index
    %c0_134 = arith.constant 0 : index
    %212 = vector.load %arg19[%c1_132, %c0_133, %c0_134] : memref<2x1x32xf32, #tpu.memory_space<vmem>>, vector<1x1x32xf32>
    %213 = vector.shape_cast %212 : vector<1x1x32xf32> to vector<1x32xf32>
    %c1_135 = arith.constant 1 : index
    %c0_136 = arith.constant 0 : index
    %c0_137 = arith.constant 0 : index
    %214 = vector.load %arg20[%c1_135, %c0_136, %c0_137] : memref<2x1x32xf32, #tpu.memory_space<vmem>>, vector<1x1x32xf32>
    %215 = vector.shape_cast %214 : vector<1x1x32xf32> to vector<1x32xf32>
    %cst_138 = arith.constant dense<0.000000e+00> : vector<48xf32>
    %216 = vector.multi_reduction <add>, %211, %cst_138 [1] : vector<48x32xf32> to vector<48xf32>
    %217 = vector.shape_cast %216 : vector<48xf32> to vector<48x1xf32>
    %cst_139 = arith.constant 3.200000e+01 : f32
    %218 = vector.broadcast %cst_139 : f32 to vector<48x1xf32>
    %219 = arith.divf %217, %218 : vector<48x1xf32>
    %220 = vector.broadcast %219 : vector<48x1xf32> to vector<48x32xf32>
    %221 = arith.subf %211, %220 : vector<48x32xf32>
    %222 = arith.mulf %221, %221 : vector<48x32xf32>
    %cst_140 = arith.constant dense<0.000000e+00> : vector<48xf32>
    %223 = vector.multi_reduction <add>, %222, %cst_140 [1] : vector<48x32xf32> to vector<48xf32>
    %224 = vector.shape_cast %223 : vector<48xf32> to vector<48x1xf32>
    %cst_141 = arith.constant 3.200000e+01 : f32
    %225 = vector.broadcast %cst_141 : f32 to vector<48x1xf32>
    %226 = arith.divf %224, %225 : vector<48x1xf32>
    %cst_142 = arith.constant 9.99999974E-6 : f32
    %227 = vector.broadcast %cst_142 : f32 to vector<48x1xf32>
    %228 = arith.addf %226, %227 : vector<48x1xf32>
    %229 = math.rsqrt %228 : vector<48x1xf32>
    %230 = vector.broadcast %229 : vector<48x1xf32> to vector<48x32xf32>
    %231 = arith.mulf %221, %230 : vector<48x32xf32>
    %232 = vector.broadcast %213 : vector<1x32xf32> to vector<48x32xf32>
    %233 = arith.mulf %231, %232 : vector<48x32xf32>
    %234 = vector.broadcast %215 : vector<1x32xf32> to vector<48x32xf32>
    %235 = arith.addf %233, %234 : vector<48x32xf32>
    %236 = vector.extract_strided_slice %235 {offsets = [0, 0], sizes = [24, 32], strides = [1, 1]} : vector<48x32xf32> to vector<24x32xf32>
    %237 = vector.extract_strided_slice %235 {offsets = [24, 0], sizes = [24, 32], strides = [1, 1]} : vector<48x32xf32> to vector<24x32xf32>
    %c0_143 = arith.constant 0 : index
    %c0_144 = arith.constant 0 : index
    %238 = vector.load %arg21[%c0_143, %c0_144] : memref<32x128xf32, #tpu.memory_space<vmem>>, vector<32x128xf32>
    %cst_145 = arith.constant dense<0.000000e+00> : vector<24x128xf32>
    %239 = tpu.matmul %236, %238, %cst_145 {dimension_numbers = #tpu.dot_dimension_numbers<[1], [0], [0], [1], [0, 0, 1, 1], [], []>} : vector<24x32xf32>, vector<32x128xf32>, vector<24x128xf32> -> vector<24x128xf32>
    %c0_146 = arith.constant 0 : index
    %c0_147 = arith.constant 0 : index
    %240 = vector.load %arg22[%c0_146, %c0_147] : memref<32x128xf32, #tpu.memory_space<vmem>>, vector<32x128xf32>
    %cst_148 = arith.constant dense<0.000000e+00> : vector<24x128xf32>
    %241 = tpu.matmul %237, %240, %cst_148 {dimension_numbers = #tpu.dot_dimension_numbers<[1], [0], [0], [1], [0, 0, 1, 1], [], []>} : vector<24x32xf32>, vector<32x128xf32>, vector<24x128xf32> -> vector<24x128xf32>
    %242 = arith.addf %239, %241 : vector<24x128xf32>
    %c0_149 = arith.constant 0 : index
    %c0_150 = arith.constant 0 : index
    %243 = vector.load %arg23[%c0_149, %c0_150] : memref<1x128xf32, #tpu.memory_space<vmem>>, vector<1x128xf32>
    %244 = vector.broadcast %243 : vector<1x128xf32> to vector<24x128xf32>
    %245 = arith.addf %242, %244 : vector<24x128xf32>
    %246 = vector.extract_strided_slice %245 {offsets = [0, 0], sizes = [8, 128], strides = [1, 1]} : vector<24x128xf32> to vector<8x128xf32>
    %247 = vector.extract_strided_slice %245 {offsets = [8, 0], sizes = [16, 128], strides = [1, 1]} : vector<24x128xf32> to vector<16x128xf32>
    %cst_151 = arith.constant dense<0.000000e+00> : vector<16x8xf32>
    %248 = tpu.matmul %247, %246, %cst_151 {dimension_numbers = #tpu.dot_dimension_numbers<[1], [1], [0], [0], [0, 0, 1, 0], [], []>} : vector<16x128xf32>, vector<8x128xf32>, vector<16x8xf32> -> vector<16x8xf32>
    %cst_152 = arith.constant 0.0883883461 : f32
    %249 = vector.broadcast %cst_152 : f32 to vector<16x8xf32>
    %250 = arith.mulf %248, %249 : vector<16x8xf32>
    %c0_153 = arith.constant 0 : index
    %c0_154 = arith.constant 0 : index
    %251 = vector.load %arg3[%c0_153, %c0_154] : memref<1x8xf32, #tpu.memory_space<vmem>>, vector<1x8xf32>
    %252 = vector.broadcast %251 : vector<1x8xf32> to vector<16x8xf32>
    %253 = arith.addf %250, %252 : vector<16x8xf32>
    %cst_155 = arith.constant dense<0xFF800000> : vector<16xf32>
    %254 = vector.multi_reduction <maximumf>, %253, %cst_155 [1] : vector<16x8xf32> to vector<16xf32>
    %255 = vector.shape_cast %254 : vector<16xf32> to vector<16x1xf32>
    %256 = vector.broadcast %255 : vector<16x1xf32> to vector<16x8xf32>
    %257 = arith.subf %253, %256 : vector<16x8xf32>
    %258 = math.exp %257 : vector<16x8xf32>
    %cst_156 = arith.constant dense<0.000000e+00> : vector<16xf32>
    %259 = vector.multi_reduction <add>, %258, %cst_156 [1] : vector<16x8xf32> to vector<16xf32>
    %260 = vector.shape_cast %259 : vector<16xf32> to vector<16x1xf32>
    %261 = tpu.reciprocal %260 {approx = true} : vector<16x1xf32> -> vector<16x1xf32>
    %262 = vector.broadcast %261 : vector<16x1xf32> to vector<16x8xf32>
    %263 = arith.mulf %258, %262 : vector<16x8xf32>
    %cst_157 = arith.constant dense<0.000000e+00> : vector<16x128xf32>
    %264 = tpu.matmul %263, %246, %cst_157 {dimension_numbers = #tpu.dot_dimension_numbers<[1], [0], [0], [1], [0, 0, 1, 1], [], []>} : vector<16x8xf32>, vector<8x128xf32>, vector<16x128xf32> -> vector<16x128xf32>
    %265 = arith.mulf %247, %264 : vector<16x128xf32>
    %cst_158 = arith.constant dense<0.000000e+00> : vector<16xf32>
    %266 = vector.multi_reduction <add>, %265, %cst_158 [1] : vector<16x128xf32> to vector<16xf32>
    %267 = vector.shape_cast %266 : vector<16xf32> to vector<16x1xf32>
    %268 = vector.shape_cast %267 : vector<16x1xf32> to vector<16x1xf32>
    %269 = vector.broadcast %268 : vector<16x1xf32> to vector<16x128xf32>
    %c0_159 = arith.constant 0 : index
    %c0_160 = arith.constant 0 : index
    %270 = vector.load %arg24[%c0_159, %c0_160] : memref<16x128xf32, #tpu.memory_space<vmem>>, vector<16x128xf32>
    tpu.vector_store %arg24[%c0_159, %c0_160], %269 {strides = array<i32>} : memref<16x128xf32, #tpu.memory_space<vmem>>, vector<16x128xf32>,
    return
  }
}

</mosaic_0001>

<llo_original>
// kernel: tpu_custom_call.1
$region0: #{tpu_custom_call.1}
  #allocation0 [shape = 'u32[]', space=smem, size = 0x4, offset = 0x4, fixed_abs, tag = 'smem constant byte address 0x4 - core index']
  #allocation1 [shape = 'u32[144,128]{1,0:T(1,128)}', space=vmem, size = 0x12000, scoped, tag = 'internal scratch']
  %s0 = inlined_call_operand.hbm [shape: f32[24,32], index: 0, kind: input, shape index: {}]
  %s1 = inlined_call_operand.hbm [shape: f32[24,32], index: 1, kind: input, shape index: {}]
  %s2 = inlined_call_operand.hbm [shape: f32[2,32], index: 2, kind: input, shape index: {}]
  %s3 = inlined_call_operand.hbm [shape: f32[1,8], index: 3, kind: input, shape index: {}]
  %s4 = inlined_call_operand.hbm [shape: f32[32,32], index: 4, kind: input, shape index: {}]
  %s5 = inlined_call_operand.vmem [shape: f32[2,32,32], index: 5, kind: input, shape index: {}]
  %s6 = inlined_call_operand.hbm [shape: f32[2,1,32], index: 6, kind: input, shape index: {}]
  %s7 = inlined_call_operand.vmem [shape: f32[2,32,32], index: 7, kind: input, shape index: {}]
  %s8 = inlined_call_operand.hbm [shape: f32[2,1,32], index: 8, kind: input, shape index: {}]
  %s9 = inlined_call_operand.vmem [shape: f32[2,32,32], index: 9, kind: input, shape index: {}]
  %s10 = inlined_call_operand.hbm [shape: f32[2,1,32], index: 10, kind: input, shape index: {}]
  %s11 = inlined_call_operand.hbm [shape: f32[2,32,32], index: 11, kind: input, shape index: {}]
  %s12 = inlined_call_operand.hbm [shape: f32[2,1,32], index: 12, kind: input, shape index: {}]
  %s13 = inlined_call_operand.hbm [shape: f32[2,1,32], index: 13, kind: input, shape index: {}]
  %s14 = inlined_call_operand.hbm [shape: f32[2,1,32], index: 14, kind: input, shape index: {}]
  %s15 = inlined_call_operand.hbm [shape: f32[2,32,64], index: 15, kind: input, shape index: {}]
  %s16 = inlined_call_operand.hbm [shape: f32[2,1,64], index: 16, kind: input, shape index: {}]
  %s17 = inlined_call_operand.vmem [shape: f32[2,64,32], index: 17, kind: input, shape index: {}]
  %s18 = inlined_call_operand.vmem [shape: f32[2,1,32], index: 18, kind: input, shape index: {}]
  %s19 = inlined_call_operand.vmem [shape: f32[2,1,32], index: 19, kind: input, shape index: {}]
  %s20 = inlined_call_operand.vmem [shape: f32[2,1,32], index: 20, kind: input, shape index: {}]
  %s21 = inlined_call_operand.hbm [shape: f32[32,128], index: 21, kind: input, shape index: {}]
  %s22 = inlined_call_operand.hbm [shape: f32[32,128], index: 22, kind: input, shape index: {}]
  %s23 = inlined_call_operand.vmem [shape: f32[1,128], index: 23, kind: input, shape index: {}]
  %s24 = inlined_call_operand.hbm [shape: f32[16,128], index: 24, kind: output, shape index: {}]
  %s25 = sld [smem:[#allocation0]]
  $region170: #{tpu_custom_call.1} parent=0
    _
  %s27 = ssub.s32 1, %s25
  %s28 = scalar_select 0, %s27, %s25
  $region1: #{tpu_custom_call.1} parent=0
    #allocation2 [shape = 'u8[12288]{0}', space=vmem, size = 0x3000, scoped, tag = 'input window, operand 0, single buffered']
    #allocation3 [shape = 's32[1]{0}', space=sflag, size = 0x4, scoped, tag = 'scoped memory for tpu_custom_call.1']
    #allocation4 [shape = 's32[1]{0}', space=sflag, size = 0x4, scoped, tag = 'scoped memory for tpu_custom_call.1']
    #allocation5 [shape = 'u8[12288]{0}', space=vmem, size = 0x3000, scoped, tag = 'input window, operand 1, single buffered']
    #allocation6 [shape = 's32[1]{0}', space=sflag, size = 0x4, scoped, tag = 'scoped memory for tpu_custom_call.1']
    #allocation7 [shape = 'u8[1024]{0}', space=vmem, size = 0x400, scoped, tag = 'input window, operand 2, single buffered']
    #allocation8 [shape = 'u8[512]{0}', space=vmem, size = 0x400, scoped, tag = 'input window, operand 3, single buffered']
    #allocation9 [shape = 's32[1]{0}', space=sflag, size = 0x4, scoped, tag = 'scoped memory for tpu_custom_call.1']
    #allocation10 [shape = 'u8[16384]{0}', space=vmem, size = 0x4000, scoped, tag = 'input window, operand 4, single buffered']
    #allocation11 [shape = 'u8[1024]{0}', space=vmem, size = 0x400, scoped, tag = 'input window, operand 6, single buffered']
    #allocation12 [shape = 's32[1]{0}', space=sflag, size = 0x4, scoped, tag = 'scoped memory for tpu_custom_call.1']
    #allocation13 [shape = 'u8[1024]{0}', space=vmem, size = 0x400, scoped, tag = 'input window, operand 8, single buffered']
    #allocation14 [shape = 'u8[1024]{0}', space=vmem, size = 0x400, scoped, tag = 'input window, operand 10, single buffered']
    #allocation15 [shape = 's32[1]{0}', space=sflag, size = 0x4, scoped, tag = 'scoped memory for tpu_custom_call.1']
    #allocation16 [shape = 'u8[32768]{0}', space=vmem, size = 0x8000, scoped, tag = 'input window, operand 11, single buffered']
    #allocation17 [shape = 'u8[1024]{0}', space=vmem, size = 0x400, scoped, tag = 'input window, operand 12, single buffered']
    #allocation18 [shape = 's32[1]{0}', space=sflag, size = 0x4, scoped, tag = 'scoped memory for tpu_custom_call.1']
    #allocation19 [shape = 'u8[1024]{0}', space=vmem, size = 0x400, scoped, tag = 'input window, operand 13, single buffered']
    #allocation20 [shape = 'u8[1024]{0}', space=vmem, size = 0x400, scoped, tag = 'input window, operand 14, single buffered']
    #allocation21 [shape = 's32[1]{0}', space=sflag, size = 0x4, scoped, tag = 'scoped memory for tpu_custom_call.1']
    #allocation22 [shape = 'u8[32768]{0}', space=vmem, size = 0x8000, scoped, tag = 'input window, operand 15, single buffered']
    #allocation23 [shape = 'u8[1024]{0}', space=vmem, size = 0x400, scoped, tag = 'input window, operand 16, single buffered']
    #allocation24 [shape = 's32[1]{0}', space=sflag, size = 0x4, scoped, tag = 'scoped memory for tpu_custom_call.1']
    #allocation25 [shape = 'u8[16384]{0}', space=vmem, size = 0x4000, scoped, tag = 'input window, operand 21, single buffered']
    #allocation26 [shape = 'u8[16384]{0}', space=vmem, size = 0x4000, scoped, tag = 'input window, operand 22, single buffered']
    #allocation27 [shape = 's32[1]{0}', space=sflag, size = 0x4, scoped, tag = 'scoped memory for tpu_custom_call.1']
    #allocation28 [shape = 'u8[8192]{0}', space=vmem, size = 0x2000, scoped, tag = 'output window, operand 0, single buffered']
    %29 = vsyncpa [#allocation3], 0
    %30 = vsyncpa [#allocation6], 0
    %31 = vsyncpa [#allocation9], 0
    %32 = vsyncpa [#allocation12], 0
    %33 = vsyncpa [#allocation15], 0
    %34 = vsyncpa [#allocation18], 0
    %35 = vsyncpa [#allocation21], 0
    %36 = vsyncpa [#allocation24], 0
    %37 = vsyncpa [#allocation27], 0
    %38 = vsyncpa [#allocation4], 0
    // Predicated region
    $region2: #{tpu_custom_call.1} parent=1 // pred_check
      _
    $region3: #{tpu_custom_call.1} parent=1 // pred_check_branch
      %40 = sbr.rel (0) target = $region5
    $region4: #{tpu_custom_call.1} parent=1 // pred_region
      %s42 = ssub.s32 384, 384
      %43 = vsyncadd [#allocation3], %s42
      %s44 = sshll.u32 [#allocation2], 4
      %s45 = int_to_ptr.vmem [resolvable:$true] %s44
      %50 = dma.hbm_to_vmem [thread:$0]  %s0, 384, %s45, [#allocation3], 128, 128, 8
    $region5: #{tpu_custom_call.1} parent=1 // pred_fallthru
      _
    // Predicated region
    $region6: #{tpu_custom_call.1} parent=1 // pred_check
      _
    $region7: #{tpu_custom_call.1} parent=1 // pred_check_branch
      %52 = sbr.rel (0) target = $region9
    $region8: #{tpu_custom_call.1} parent=1 // pred_region
      %s54 = ssub.s32 384, 384
      %55 = vsyncadd [#allocation6], %s54
      %s56 = sshll.u32 [#allocation5], 4
      %s57 = int_to_ptr.vmem [resolvable:$true] %s56
      %62 = dma.hbm_to_vmem [thread:$0]  %s1, 384, %s57, [#allocation6], 128, 128, 8
    $region9: #{tpu_custom_call.1} parent=1 // pred_fallthru
      _
    // Predicated region
    $region10: #{tpu_custom_call.1} parent=1 // pred_check
      _
    $region11: #{tpu_custom_call.1} parent=1 // pred_check_branch
      %64 = sbr.rel (0) target = $region13
    $region12: #{tpu_custom_call.1} parent=1 // pred_region
      %s66 = ssub.s32 32, 32
      %67 = vsyncadd [#allocation6], %s66
      %s69 = sshll.u32 [#allocation7], 4
      %s70 = int_to_ptr.vmem [resolvable:$true] %s69
      %72 = dma.hbm_to_vmem [thread:$0]  %s2, 32, %s70, [#allocation6]
    $region13: #{tpu_custom_call.1} parent=1 // pred_fallthru
      _
    // Predicated region
    $region14: #{tpu_custom_call.1} parent=1 // pred_check
      _
    $region15: #{tpu_custom_call.1} parent=1 // pred_check_branch
      %74 = sbr.rel (0) target = $region17
    $region16: #{tpu_custom_call.1} parent=1 // pred_region
      %s76 = ssub.s32 16, 16
      %77 = vsyncadd [#allocation9], %s76
      %s79 = sshll.u32 [#allocation8], 4
      %s80 = int_to_ptr.vmem [resolvable:$true] %s79
      %82 = dma.hbm_to_vmem [thread:$0]  %s3, 16, %s80, [#allocation9]
    $region17: #{tpu_custom_call.1} parent=1 // pred_fallthru
      _
    // Predicated region
    $region18: #{tpu_custom_call.1} parent=1 // pred_check
      _
    $region19: #{tpu_custom_call.1} parent=1 // pred_check_branch
      %84 = sbr.rel (0) target = $region21
    $region20: #{tpu_custom_call.1} parent=1 // pred_region
      %s86 = ssub.s32 512, 512
      %87 = vsyncadd [#allocation9], %s86
      %s88 = sshll.u32 [#allocation10], 4
      %s89 = int_to_ptr.vmem [resolvable:$true] %s88
      %94 = dma.hbm_to_vmem [thread:$0]  %s4, 512, %s89, [#allocation9], 128, 128, 8
    $region21: #{tpu_custom_call.1} parent=1 // pred_fallthru
      _
    // Predicated region
    $region22: #{tpu_custom_call.1} parent=1 // pred_check
      _
    $region23: #{tpu_custom_call.1} parent=1 // pred_check_branch
      %96 = sbr.rel (0) target = $region25
    $region24: #{tpu_custom_call.1} parent=1 // pred_region
      _
    $region25: #{tpu_custom_call.1} parent=1 // pred_fallthru
      _
    // Predicated region
    $region26: #{tpu_custom_call.1} parent=1 // pred_check
      _
    $region27: #{tpu_custom_call.1} parent=1 // pred_check_branch
      %98 = sbr.rel (0) target = $region29
    $region28: #{tpu_custom_call.1} parent=1 // pred_region
      %s100 = ssub.s32 32, 32
      %101 = vsyncadd [#allocation12], %s100
      %s102 = sshll.u32 [#allocation11], 4
      %s103 = int_to_ptr.vmem [resolvable:$true] %s102
      %108 = dma.hbm_to_vmem [thread:$0]  %s6, 32, %s103, [#allocation12], 16, 16, 1
    $region29: #{tpu_custom_call.1} parent=1 // pred_fallthru
      _
    // Predicated region
    $region30: #{tpu_custom_call.1} parent=1 // pred_check
      _
    $region31: #{tpu_custom_call.1} parent=1 // pred_check_branch
      %110 = sbr.rel (0) target = $region33
    $region32: #{tpu_custom_call.1} parent=1 // pred_region
      _
    $region33: #{tpu_custom_call.1} parent=1 // pred_fallthru
      _
    // Predicated region
    $region34: #{tpu_custom_call.1} parent=1 // pred_check
      _
    $region35: #{tpu_custom_call.1} parent=1 // pred_check_branch
      %112 = sbr.rel (0) target = $region37
    $region36: #{tpu_custom_call.1} parent=1 // pred_region
      %s114 = ssub.s32 32, 32
      %115 = vsyncadd [#allocation12], %s114
      %s116 = sshll.u32 [#allocation13], 4
      %s117 = int_to_ptr.vmem [resolvable:$true] %s116
      %122 = dma.hbm_to_vmem [thread:$0]  %s8, 32, %s117, [#allocation12], 16, 16, 1
    $region37: #{tpu_custom_call.1} parent=1 // pred_fallthru
      _
    // Predicated region
    $region38: #{tpu_custom_call.1} parent=1 // pred_check
      _
    $region39: #{tpu_custom_call.1} parent=1 // pred_check_branch
      %124 = sbr.rel (0) target = $region41
    $region40: #{tpu_custom_call.1} parent=1 // pred_region
      _
    $region41: #{tpu_custom_call.1} parent=1 // pred_fallthru
      _
    // Predicated region
    $region42: #{tpu_custom_call.1} parent=1 // pred_check
      _
    $region43: #{tpu_custom_call.1} parent=1 // pred_check_branch
      %126 = sbr.rel (0) target = $region45
    $region44: #{tpu_custom_call.1} parent=1 // pred_region
      %s128 = ssub.s32 32, 32
      %129 = vsyncadd [#allocation15], %s128
      %s130 = sshll.u32 [#allocation14], 4
      %s131 = int_to_ptr.vmem [resolvable:$true] %s130
      %136 = dma.hbm_to_vmem [thread:$0]  %s10, 32, %s131, [#allocation15], 16, 16, 1
    $region45: #{tpu_custom_call.1} parent=1 // pred_fallthru
      _
    // Predicated region
    $region46: #{tpu_custom_call.1} parent=1 // pred_check
      _
    $region47: #{tpu_custom_call.1} parent=1 // pred_check_branch
      %138 = sbr.rel (0) target = $region49
    $region48: #{tpu_custom_call.1} parent=1 // pred_region
      %s140 = ssub.s32 1024, 1024
      %141 = vsyncadd [#allocation15], %s140
      %s142 = sshll.u32 [#allocation16], 4
      %s143 = int_to_ptr.vmem [resolvable:$true] %s142
      %148 = dma.hbm_to_vmem [thread:$0]  %s11, 1024, %s143, [#allocation15], 128, 128, 8
    $region49: #{tpu_custom_call.1} parent=1 // pred_fallthru
      _
    // Predicated region
    $region50: #{tpu_custom_call.1} parent=1 // pred_check
      _
    $region51: #{tpu_custom_call.1} parent=1 // pred_check_branch
      %150 = sbr.rel (0) target = $region53
    $region52: #{tpu_custom_call.1} parent=1 // pred_region
      %s152 = ssub.s32 32, 32
      %153 = vsyncadd [#allocation18], %s152
      %s154 = sshll.u32 [#allocation17], 4
      %s155 = int_to_ptr.vmem [resolvable:$true] %s154
      %160 = dma.hbm_to_vmem [thread:$0]  %s12, 32, %s155, [#allocation18], 16, 16, 1
    $region53: #{tpu_custom_call.1} parent=1 // pred_fallthru
      _
    // Predicated region
    $region54: #{tpu_custom_call.1} parent=1 // pred_check
      _
    $region55: #{tpu_custom_call.1} parent=1 // pred_check_branch
      %162 = sbr.rel (0) target = $region57
    $region56: #{tpu_custom_call.1} parent=1 // pred_region
      %s164 = ssub.s32 32, 32
      %165 = vsyncadd [#allocation18], %s164
      %s166 = sshll.u32 [#allocation19], 4
      %s167 = int_to_ptr.vmem [resolvable:$true] %s166
      %172 = dma.hbm_to_vmem [thread:$0]  %s13, 32, %s167, [#allocation18], 16, 16, 1
    $region57: #{tpu_custom_call.1} parent=1 // pred_fallthru
      _
    // Predicated region
    $region58: #{tpu_custom_call.1} parent=1 // pred_check
      _
    $region59: #{tpu_custom_call.1} parent=1 // pred_check_branch
      %174 = sbr.rel (0) target = $region61
    $region60: #{tpu_custom_call.1} parent=1 // pred_region
      %s176 = ssub.s32 32, 32
      %177 = vsyncadd [#allocation21], %s176
      %s178 = sshll.u32 [#allocation20], 4
      %s179 = int_to_ptr.vmem [resolvable:$true] %s178
      %184 = dma.hbm_to_vmem [thread:$0]  %s14, 32, %s179, [#allocation21], 16, 16, 1
    $region61: #{tpu_custom_call.1} parent=1 // pred_fallthru
      _
    // Predicated region
    $region62: #{tpu_custom_call.1} parent=1 // pred_check
      _
    $region63: #{tpu_custom_call.1} parent=1 // pred_check_branch
      %186 = sbr.rel (0) target = $region65
    $region64: #{tpu_custom_call.1} parent=1 // pred_region
      %s188 = ssub.s32 1024, 1024
      %189 = vsyncadd [#allocation21], %s188
      %s190 = sshll.u32 [#allocation22], 4
      %s191 = int_to_ptr.vmem [resolvable:$true] %s190
      %196 = dma.hbm_to_vmem [thread:$0]  %s15, 1024, %s191, [#allocation21], 128, 128, 8
    $region65: #{tpu_custom_call.1} parent=1 // pred_fallthru
      _
    // Predicated region
    $region66: #{tpu_custom_call.1} parent=1 // pred_check
      _
    $region67: #{tpu_custom_call.1} parent=1 // pred_check_branch
      %198 = sbr.rel (0) target = $region69
    $region68: #{tpu_custom_call.1} parent=1 // pred_region
      %s200 = ssub.s32 32, 32
      %201 = vsyncadd [#allocation24], %s200
      %s202 = sshll.u32 [#allocation23], 4
      %s203 = int_to_ptr.vmem [resolvable:$true] %s202
      %208 = dma.hbm_to_vmem [thread:$0]  %s16, 32, %s203, [#allocation24], 16, 16, 1
    $region69: #{tpu_custom_call.1} parent=1 // pred_fallthru
      _
    // Predicated region
    $region70: #{tpu_custom_call.1} parent=1 // pred_check
      _
    $region71: #{tpu_custom_call.1} parent=1 // pred_check_branch
      %210 = sbr.rel (0) target = $region73
    $region72: #{tpu_custom_call.1} parent=1 // pred_region
      _
    $region73: #{tpu_custom_call.1} parent=1 // pred_fallthru
      _
    // Predicated region
    $region74: #{tpu_custom_call.1} parent=1 // pred_check
      _
    $region75: #{tpu_custom_call.1} parent=1 // pred_check_branch
      %212 = sbr.rel (0) target = $region77
    $region76: #{tpu_custom_call.1} parent=1 // pred_region
      _
    $region77: #{tpu_custom_call.1} parent=1 // pred_fallthru
      _
    // Predicated region
    $region78: #{tpu_custom_call.1} parent=1 // pred_check
      _
    $region79: #{tpu_custom_call.1} parent=1 // pred_check_branch
      %214 = sbr.rel (0) target = $region81
    $region80: #{tpu_custom_call.1} parent=1 // pred_region
      _
    $region81: #{tpu_custom_call.1} parent=1 // pred_fallthru
      _
    // Predicated region
    $region82: #{tpu_custom_call.1} parent=1 // pred_check
      _
    $region83: #{tpu_custom_call.1} parent=1 // pred_check_branch
      %216 = sbr.rel (0) target = $region85
    $region84: #{tpu_custom_call.1} parent=1 // pred_region
      _
    $region85: #{tpu_custom_call.1} parent=1 // pred_fallthru
      _
    // Predicated region
    $region86: #{tpu_custom_call.1} parent=1 // pred_check
      _
    $region87: #{tpu_custom_call.1} parent=1 // pred_check_branch
      %218 = sbr.rel (0) target = $region89
    $region88: #{tpu_custom_call.1} parent=1 // pred_region
      %s220 = ssub.s32 512, 512
      %221 = vsyncadd [#allocation24], %s220
      %s222 = sshll.u32 [#allocation25], 4
      %s223 = int_to_ptr.vmem [resolvable:$true] %s222
      %228 = dma.hbm_to_vmem [thread:$0]  %s21, 512, %s223, [#allocation24], 128, 128, 8
    $region89: #{tpu_custom_call.1} parent=1 // pred_fallthru
      _
    // Predicated region
    $region90: #{tpu_custom_call.1} parent=1 // pred_check
      _
    $region91: #{tpu_custom_call.1} parent=1 // pred_check_branch
      %230 = sbr.rel (0) target = $region93
    $region92: #{tpu_custom_call.1} parent=1 // pred_region
      %s232 = ssub.s32 512, 512
      %233 = vsyncadd [#allocation27], %s232
      %s234 = sshll.u32 [#allocation26], 4
      %s235 = int_to_ptr.vmem [resolvable:$true] %s234
      %240 = dma.hbm_to_vmem [thread:$0]  %s22, 512, %s235, [#allocation27], 128, 128, 8
    $region93: #{tpu_custom_call.1} parent=1 // pred_fallthru
      _
    // Predicated region
    $region94: #{tpu_custom_call.1} parent=1 // pred_check
      _
    $region95: #{tpu_custom_call.1} parent=1 // pred_check_branch
      %242 = sbr.rel (0) target = $region97
    $region96: #{tpu_custom_call.1} parent=1 // pred_region
      _
    $region97: #{tpu_custom_call.1} parent=1 // pred_fallthru
      _
    // Predicated region
    $region98: #{tpu_custom_call.1} parent=1 // pred_check
      _
    $region99: #{tpu_custom_call.1} parent=1 // pred_check_branch
      %244 = sbr.rel (0) target = $region101
    $region100: #{tpu_custom_call.1} parent=1 // pred_region
      %245 = dma.done [#allocation3], 384
    $region101: #{tpu_custom_call.1} parent=1 // pred_fallthru
      _
    // Predicated region
    $region102: #{tpu_custom_call.1} parent=1 // pred_check
      _
    $region103: #{tpu_custom_call.1} parent=1 // pred_check_branch
      %247 = sbr.rel (0) target = $region105
    $region104: #{tpu_custom_call.1} parent=1 // pred_region
      %248 = dma.done [#allocation6], 384
    $region105: #{tpu_custom_call.1} parent=1 // pred_fallthru
      _
    // Predicated region
    $region106: #{tpu_custom_call.1} parent=1 // pred_check
      _
    $region107: #{tpu_custom_call.1} parent=1 // pred_check_branch
      %250 = sbr.rel (0) target = $region109
    $region108: #{tpu_custom_call.1} parent=1 // pred_region
      %251 = dma.done [#allocation6], 32
    $region109: #{tpu_custom_call.1} parent=1 // pred_fallthru
      _
    // Predicated region
    $region110: #{tpu_custom_call.1} parent=1 // pred_check
      _
    $region111: #{tpu_custom_call.1} parent=1 // pred_check_branch
      %253 = sbr.rel (0) target = $region113
    $region112: #{tpu_custom_call.1} parent=1 // pred_region
      %254 = dma.done [#allocation9], 16
    $region113: #{tpu_custom_call.1} parent=1 // pred_fallthru
      _
    // Predicated region
    $region114: #{tpu_custom_call.1} parent=1 // pred_check
      _
    $region115: #{tpu_custom_call.1} parent=1 // pred_check_branch
      %256 = sbr.rel (0) target = $region117
    $region116: #{tpu_custom_call.1} parent=1 // pred_region
      %257 = dma.done [#allocation9], 512
    $region117: #{tpu_custom_call.1} parent=1 // pred_fallthru
      _
    // Predicated region
    $region118: #{tpu_custom_call.1} parent=1 // pred_check
      _
    $region119: #{tpu_custom_call.1} parent=1 // pred_check_branch
      %259 = sbr.rel (0) target = $region121
    $region120: #{tpu_custom_call.1} parent=1 // pred_region
      %260 = dma.done [#allocation12], 32
    $region121: #{tpu_custom_call.1} parent=1 // pred_fallthru
      _
    // Predicated region
    $region122: #{tpu_custom_call.1} parent=1 // pred_check
      _
    $region123: #{tpu_custom_call.1} parent=1 // pred_check_branch
      %262 = sbr.rel (0) target = $region125
    $region124: #{tpu_custom_call.1} parent=1 // pred_region
      %263 = dma.done [#allocation12], 32
    $region125: #{tpu_custom_call.1} parent=1 // pred_fallthru
      _
    // Predicated region
    $region126: #{tpu_custom_call.1} parent=1 // pred_check
      _
    $region127: #{tpu_custom_call.1} parent=1 // pred_check_branch
      %265 = sbr.rel (0) target = $region129
    $region128: #{tpu_custom_call.1} parent=1 // pred_region
      %266 = dma.done [#allocation15], 32
    $region129: #{tpu_custom_call.1} parent=1 // pred_fallthru
      _
    // Predicated region
    $region130: #{tpu_custom_call.1} parent=1 // pred_check
      _
    $region131: #{tpu_custom_call.1} parent=1 // pred_check_branch
      %268 = sbr.rel (0) target = $region133
    $region132: #{tpu_custom_call.1} parent=1 // pred_region
      %269 = dma.done [#allocation15], 1024
    $region133: #{tpu_custom_call.1} parent=1 // pred_fallthru
      _
    // Predicated region
    $region134: #{tpu_custom_call.1} parent=1 // pred_check
      _
    $region135: #{tpu_custom_call.1} parent=1 // pred_check_branch
      %271 = sbr.rel (0) target = $region137
    $region136: #{tpu_custom_call.1} parent=1 // pred_region
      %272 = dma.done [#allocation18], 32
    $region137: #{tpu_custom_call.1} parent=1 // pred_fallthru
      _
    // Predicated region
    $region138: #{tpu_custom_call.1} parent=1 // pred_check
      _
    $region139: #{tpu_custom_call.1} parent=1 // pred_check_branch
      %274 = sbr.rel (0) target = $region141
    $region140: #{tpu_custom_call.1} parent=1 // pred_region
      %275 = dma.done [#allocation18], 32
    $region141: #{tpu_custom_call.1} parent=1 // pred_fallthru
      _
    // Predicated region
    $region142: #{tpu_custom_call.1} parent=1 // pred_check
      _
    $region143: #{tpu_custom_call.1} parent=1 // pred_check_branch
      %277 = sbr.rel (0) target = $region145
    $region144: #{tpu_custom_call.1} parent=1 // pred_region
      %278 = dma.done [#allocation21], 32
    $region145: #{tpu_custom_call.1} parent=1 // pred_fallthru
      _
    // Predicated region
    $region146: #{tpu_custom_call.1} parent=1 // pred_check
      _
    $region147: #{tpu_custom_call.1} parent=1 // pred_check_branch
      %280 = sbr.rel (0) target = $region149
    $region148: #{tpu_custom_call.1} parent=1 // pred_region
      %281 = dma.done [#allocation21], 1024
    $region149: #{tpu_custom_call.1} parent=1 // pred_fallthru
      _
    // Predicated region
    $region150: #{tpu_custom_call.1} parent=1 // pred_check
      _
    $region151: #{tpu_custom_call.1} parent=1 // pred_check_branch
      %283 = sbr.rel (0) target = $region153
    $region152: #{tpu_custom_call.1} parent=1 // pred_region
      %284 = dma.done [#allocation24], 32
    $region153: #{tpu_custom_call.1} parent=1 // pred_fallthru
      _
    // Predicated region
    $region154: #{tpu_custom_call.1} parent=1 // pred_check
      _
    $region155: #{tpu_custom_call.1} parent=1 // pred_check_branch
      %286 = sbr.rel (0) target = $region157
    $region156: #{tpu_custom_call.1} parent=1 // pred_region
      %287 = dma.done [#allocation24], 512
    $region157: #{tpu_custom_call.1} parent=1 // pred_fallthru
      _
    // Predicated region
    $region158: #{tpu_custom_call.1} parent=1 // pred_check
      _
    $region159: #{tpu_custom_call.1} parent=1 // pred_check_branch
      %289 = sbr.rel (0) target = $region161
    $region160: #{tpu_custom_call.1} parent=1 // pred_region
      %290 = dma.done [#allocation27], 512
    $region161: #{tpu_custom_call.1} parent=1 // pred_fallthru
      _
    %v291 = vld [vmem:[#allocation2] sm:$0xff]
    %v292 = vld [vmem:[#allocation2 + $0x8] sm:$0xff]
    %v293 = vld [vmem:[#allocation2 + $0x10] sm:$0xff]
    %v294 = vld [vmem:[#allocation7] sm:$0x1]
    %v295 = vlaneseq
    %v296 = vshrl.u32 %v295, 7
    %v297 = vsub.s32 0, %v296
    %v298 = vrot.slane %v294, %v297
    %v299 = vadd.f32 %v291, %v298
    %v300 = vadd.f32 %v292, %v298
    %v301 = vadd.f32 %v293, %v298
    %v302 = vld [vmem:[#allocation5] sm:$0xff]
    %v303 = vld [vmem:[#allocation5 + $0x8] sm:$0xff]
    %v304 = vld [vmem:[#allocation5 + $0x10] sm:$0xff]
    %v305 = vld [vmem:[#allocation7 + $0x1] sm:$0x1]
    %v306 = vlaneseq
    %v307 = vshrl.u32 %v306, 7
    %v308 = vsub.s32 0, %v307
    %v309 = vrot.slane %v305, %v308
    %v310 = vadd.f32 %v302, %v309
    %v311 = vadd.f32 %v303, %v309
    %v312 = vadd.f32 %v304, %v309
    %v313 = vld [vmem:[#allocation10] sm:$0xff]
    %v314 = vld [vmem:[#allocation10 + $0x8] sm:$0xff]
    %v315 = vld [vmem:[#allocation10 + $0x10] sm:$0xff]
    %v316 = vld [vmem:[#allocation10 + $0x18] sm:$0xff]
    %v317 = vld [vmem:[%s5] sm:$0xff]
    %v318 = vld [vmem:[%s5 + $0x8] sm:$0xff]
    %v319 = vld [vmem:[%s5 + $0x10] sm:$0xff]
    %v320 = vld [vmem:[%s5 + $0x18] sm:$0xff]
    %v321 = vld [vmem:[#allocation11] sm:$0x1]
    %v323 = vlaneseq
    %v324 = vshrl.u32 %v323, 7
    %v325 = vsub.s32 0, %v324
    %v326 = vrot.slane %v321, %v325
    %vm328 = vcmask 261120
    %v330 = vsel %vm328, %v299, 0
    %v333 = vsel %vm328, %v300, 0
    %v336 = vsel %vm328, %v301, 0
    %v339 = vsel %vm328, %v310, 0
    %v342 = vsel %vm328, %v311, 0
    %v345 = vsel %vm328, %v312, 0
    %347 = vmatprep.subr.mxu0 0.0
    %348 = vmatpush1.msra.mxu0 %v317
    %349 = vmatprep.subr.mxu0 0.0
    %350 = vmatpush1.msra.mxu0 %v318
    %351 = vmatprep.subr.mxu0 0.0
    %352 = vmatpush1.msra.mxu0 %v319
    %353 = vmatprep.subr.mxu0 0.0
    %354 = vmatpush1.msra.mxu0 %v320
    %355 = vmatprep.subr.mxu0 0.0
    %356 = vmatpush1.msra.mxu0 0.0
    %357 = vmatprep.subr.mxu0 0.0
    %358 = vmatpush1.msra.mxu0 0.0
    %359 = vmatprep.subr.mxu0 0.0
    %360 = vmatpush1.msra.mxu0 0.0
    %361 = vmatprep.subr.mxu0 0.0
    %362 = vmatpush1.msra.mxu0 0.0
    %363 = vmatprep.subr.mxu0 0.0
    %364 = vmatpush1.msra.mxu0 0.0
    %365 = vmatprep.subr.mxu0 0.0
    %366 = vmatpush1.msra.mxu0 0.0
    %367 = vmatprep.subr.mxu0 0.0
    %368 = vmatpush1.msra.mxu0 0.0
    %369 = vmatprep.subr.mxu0 0.0
    %370 = vmatpush1.msra.mxu0 0.0
    %371 = vmatprep.subr.mxu0 0.0
    %372 = vmatpush1.msra.mxu0 0.0
    %373 = vmatprep.subr.mxu0 0.0
    %374 = vmatpush1.msra.mxu0 0.0
    %375 = vmatprep.subr.mxu0 0.0
    %376 = vmatpush1.msra.mxu0 0.0
    %377 = vmatprep.subr.mxu0 0.0
    %378 = vmatpush1.msra.mxu0 0.0
    %379 = vmatprep.subr.mxu0 0.0
    %380 = vmatpush1.msra.mxu0 0.0
    %381 = vmatprep.subr.mxu0 0.0
    %382 = vmatpush1.msra.mxu0 0.0
    %383 = vmatprep.subr.mxu0 0.0
    %384 = vmatpush1.msra.mxu0 0.0
    %385 = vmatprep.subr.mxu0 0.0
    %386 = vmatpush1.msra.mxu0 0.0
    %387 = vmatprep.subr.mxu0 0.0
    %388 = vmatpush1.msra.mxu0 0.0
    %389 = vmatprep.subr.mxu0 0.0
    %390 = vmatpush1.msra.mxu0 0.0
    %391 = vmatprep.subr.mxu0 0.0
    %392 = vmatpush1.msra.mxu0 0.0
    %393 = vmatprep.subr.mxu0 0.0
    %394 = vmatpush1.msra.mxu0 0.0
    %395 = vmatprep.subr.mxu0 0.0
    %396 = vmatpush1.msra.mxu0 0.0
    %397 = vmatprep.subr.mxu0 0.0
    %398 = vmatpush1.msra.mxu0 0.0
    %399 = vmatprep.subr.mxu0 0.0
    %400 = vmatpush1.msra.mxu0 0.0
    %401 = vmatprep.subr.mxu0 0.0
    %402 = vmatpush1.msra.mxu0 0.0
    %403 = vmatprep.subr.mxu0 0.0
    %404 = vmatpush1.msra.mxu0 0.0
    %405 = vmatprep.subr.mxu0 0.0
    %406 = vmatpush1.msra.mxu0 0.0
    %407 = vmatprep.subr.mxu0 0.0
    %408 = vmatpush1.msra.mxu0 0.0
    %409 = vmatprep.subr.mxu0 0.0
    %410 = vmatpush1.msra.mxu0 0.0
    %411 = vmatprep.mubr.f32.mxu0 0.0
    %412 = vmatmul.mubr.f32.gmra.mrb[0].mxu0 %v330
    %v413 = vpop.f32.mrb[0].mxu0
    %v414 = vadd.f32 %v326, %v413
    %v415 = vpop.f32.mrb[0].mxu0
    %416 = vmatprep.mubr.f32.mxu0 0.0
    %417 = vmatmul.mubr.f32.gmra.mrb[0].mxu0 %v333
    %v418 = vpop.f32.mrb[0].mxu0
    %v419 = vadd.f32 %v326, %v418
    %v420 = vpop.f32.mrb[0].mxu0
    %421 = vmatprep.mubr.f32.mxu0 0.0
    %422 = vmatmul.mubr.f32.gmra.mrb[0].mxu0 %v336
    %v423 = vpop.f32.mrb[0].mxu0
    %v424 = vadd.f32 %v326, %v423
    %v425 = vpop.f32.mrb[0].mxu0
    %426 = vmatprep.mubr.f32.mxu0 0.0
    %427 = vmatmul.mubr.f32.gmra.mrb[0].mxu0 %v339
    %v428 = vpop.f32.mrb[0].mxu0
    %v429 = vadd.f32 %v326, %v428
    %v430 = vpop.f32.mrb[0].mxu0
    %431 = vmatprep.mubr.f32.mxu0 0.0
    %432 = vmatmul.mubr.f32.gmra.mrb[0].mxu0 %v342
    %v433 = vpop.f32.mrb[0].mxu0
    %v434 = vadd.f32 %v326, %v433
    %v435 = vpop.f32.mrb[0].mxu0
    %436 = vmatprep.mubr.f32.mxu0 0.0
    %437 = vmatmul.mubr.f32.gmra.mrb[0].mxu0 %v345
    %v438 = vpop.f32.mrb[0].mxu0
    %v439 = vadd.f32 %v326, %v438
    %v440 = vpop.f32.mrb[0].mxu0
    %441 = vdwg.mxu0
    %v442 = vld [vmem:[%s7] sm:$0xff]
    %v443 = vld [vmem:[%s7 + $0x8] sm:$0xff]
    %v444 = vld [vmem:[%s7 + $0x10] sm:$0xff]
    %v445 = vld [vmem:[%s7 + $0x18] sm:$0xff]
    %v446 = vld [vmem:[#allocation13] sm:$0x1]
    %v448 = vlaneseq
    %v449 = vshrl.u32 %v448, 7
    %v450 = vsub.s32 0, %v449
    %v451 = vrot.slane %v446, %v450
    %453 = vmatprep.subr.mxu0 0.0
    %454 = vmatpush1.msra.mxu0 %v442
    %455 = vmatprep.subr.mxu0 0.0
    %456 = vmatpush1.msra.mxu0 %v443
    %457 = vmatprep.subr.mxu0 0.0
    %458 = vmatpush1.msra.mxu0 %v444
    %459 = vmatprep.subr.mxu0 0.0
    %460 = vmatpush1.msra.mxu0 %v445
    %461 = vmatprep.subr.mxu0 0.0
    %462 = vmatpush1.msra.mxu0 0.0
    %463 = vmatprep.subr.mxu0 0.0
    %464 = vmatpush1.msra.mxu0 0.0
    %465 = vmatprep.subr.mxu0 0.0
    %466 = vmatpush1.msra.mxu0 0.0
    %467 = vmatprep.subr.mxu0 0.0
    %468 = vmatpush1.msra.mxu0 0.0
    %469 = vmatprep.subr.mxu0 0.0
    %470 = vmatpush1.msra.mxu0 0.0
    %471 = vmatprep.subr.mxu0 0.0
    %472 = vmatpush1.msra.mxu0 0.0
    %473 = vmatprep.subr.mxu0 0.0
    %474 = vmatpush1.msra.mxu0 0.0
    %475 = vmatprep.subr.mxu0 0.0
    %476 = vmatpush1.msra.mxu0 0.0
    %477 = vmatprep.subr.mxu0 0.0
    %478 = vmatpush1.msra.mxu0 0.0
    %479 = vmatprep.subr.mxu0 0.0
    %480 = vmatpush1.msra.mxu0 0.0
    %481 = vmatprep.subr.mxu0 0.0
    %482 = vmatpush1.msra.mxu0 0.0
    %483 = vmatprep.subr.mxu0 0.0
    %484 = vmatpush1.msra.mxu0 0.0
    %485 = vmatprep.subr.mxu0 0.0
    %486 = vmatpush1.msra.mxu0 0.0
    %487 = vmatprep.subr.mxu0 0.0
    %488 = vmatpush1.msra.mxu0 0.0
    %489 = vmatprep.subr.mxu0 0.0
    %490 = vmatpush1.msra.mxu0 0.0
    %491 = vmatprep.subr.mxu0 0.0
    %492 = vmatpush1.msra.mxu0 0.0
    %493 = vmatprep.subr.mxu0 0.0
    %494 = vmatpush1.msra.mxu0 0.0
    %495 = vmatprep.subr.mxu0 0.0
    %496 = vmatpush1.msra.mxu0 0.0
    %497 = vmatprep.subr.mxu0 0.0
    %498 = vmatpush1.msra.mxu0 0.0
    %499 = vmatprep.subr.mxu0 0.0
    %500 = vmatpush1.msra.mxu0 0.0
    %501 = vmatprep.subr.mxu0 0.0
    %502 = vmatpush1.msra.mxu0 0.0
    %503 = vmatprep.subr.mxu0 0.0
    %504 = vmatpush1.msra.mxu0 0.0
    %505 = vmatprep.subr.mxu0 0.0
    %506 = vmatpush1.msra.mxu0 0.0
    %507 = vmatprep.subr.mxu0 0.0
    %508 = vmatpush1.msra.mxu0 0.0
    %509 = vmatprep.subr.mxu0 0.0
    %510 = vmatpush1.msra.mxu0 0.0
    %511 = vmatprep.subr.mxu0 0.0
    %512 = vmatpush1.msra.mxu0 0.0
    %513 = vmatprep.subr.mxu0 0.0
    %514 = vmatpush1.msra.mxu0 0.0
    %515 = vmatprep.subr.mxu0 0.0
    %516 = vmatpush1.msra.mxu0 0.0
    %517 = vmatprep.mubr.f32.mxu0 0.0
    %518 = vmatmul.mubr.f32.gmra.mrb[0].mxu0 %v330
    %v519 = vpop.f32.mrb[0].mxu0
    %v520 = vadd.f32 %v451, %v519
    %v521 = vpop.f32.mrb[0].mxu0
    %522 = vmatprep.mubr.f32.mxu0 0.0
    %523 = vmatmul.mubr.f32.gmra.mrb[0].mxu0 %v333
    %v524 = vpop.f32.mrb[0].mxu0
    %v525 = vadd.f32 %v451, %v524
    %v526 = vpop.f32.mrb[0].mxu0
    %527 = vmatprep.mubr.f32.mxu0 0.0
    %528 = vmatmul.mubr.f32.gmra.mrb[0].mxu0 %v336
    %v529 = vpop.f32.mrb[0].mxu0
    %v530 = vadd.f32 %v451, %v529
    %v531 = vpop.f32.mrb[0].mxu0
    %532 = vmatprep.mubr.f32.mxu0 0.0
    %533 = vmatmul.mubr.f32.gmra.mrb[0].mxu0 %v339
    %v534 = vpop.f32.mrb[0].mxu0
    %v535 = vadd.f32 %v451, %v534
    %v536 = vpop.f32.mrb[0].mxu0
    %537 = vmatprep.mubr.f32.mxu0 0.0
    %538 = vmatmul.mubr.f32.gmra.mrb[0].mxu0 %v342
    %v539 = vpop.f32.mrb[0].mxu0
    %v540 = vadd.f32 %v451, %v539
    %v541 = vpop.f32.mrb[0].mxu0
    %542 = vmatprep.mubr.f32.mxu0 0.0
    %543 = vmatmul.mubr.f32.gmra.mrb[0].mxu0 %v345
    %v544 = vpop.f32.mrb[0].mxu0
    %v545 = vadd.f32 %v451, %v544
    %v546 = vpop.f32.mrb[0].mxu0
    %547 = vdwg.mxu0
    %v548 = vld [vmem:[%s9] sm:$0xff]
    %v549 = vld [vmem:[%s9 + $0x8] sm:$0xff]
    %v550 = vld [vmem:[%s9 + $0x10] sm:$0xff]
    %v551 = vld [vmem:[%s9 + $0x18] sm:$0xff]
    %v552 = vld [vmem:[#allocation14] sm:$0x1]
    %v554 = vlaneseq
    %v555 = vshrl.u32 %v554, 7
    %v556 = vsub.s32 0, %v555
    %v557 = vrot.slane %v552, %v556
    %559 = vmatprep.subr.mxu0 0.0
    %560 = vmatpush1.msra.mxu0 %v548
    %561 = vmatprep.subr.mxu0 0.0
    %562 = vmatpush1.msra.mxu0 %v549
    %563 = vmatprep.subr.mxu0 0.0
    %564 = vmatpush1.msra.mxu0 %v550
    %565 = vmatprep.subr.mxu0 0.0
    %566 = vmatpush1.msra.mxu0 %v551
    %567 = vmatprep.subr.mxu0 0.0
    %568 = vmatpush1.msra.mxu0 0.0
    %569 = vmatprep.subr.mxu0 0.0
    %570 = vmatpush1.msra.mxu0 0.0
    %571 = vmatprep.subr.mxu0 0.0
    %572 = vmatpush1.msra.mxu0 0.0
    %573 = vmatprep.subr.mxu0 0.0
    %574 = vmatpush1.msra.mxu0 0.0
    %575 = vmatprep.subr.mxu0 0.0
    %576 = vmatpush1.msra.mxu0 0.0
    %577 = vmatprep.subr.mxu0 0.0
    %578 = vmatpush1.msra.mxu0 0.0
    %579 = vmatprep.subr.mxu0 0.0
    %580 = vmatpush1.msra.mxu0 0.0
    %581 = vmatprep.subr.mxu0 0.0
    %582 = vmatpush1.msra.mxu0 0.0
    %583 = vmatprep.subr.mxu0 0.0
    %584 = vmatpush1.msra.mxu0 0.0
    %585 = vmatprep.subr.mxu0 0.0
    %586 = vmatpush1.msra.mxu0 0.0
    %587 = vmatprep.subr.mxu0 0.0
    %588 = vmatpush1.msra.mxu0 0.0
    %589 = vmatprep.subr.mxu0 0.0
    %590 = vmatpush1.msra.mxu0 0.0
    %591 = vmatprep.subr.mxu0 0.0
    %592 = vmatpush1.msra.mxu0 0.0
    %593 = vmatprep.subr.mxu0 0.0
    %594 = vmatpush1.msra.mxu0 0.0
    %595 = vmatprep.subr.mxu0 0.0
    %596 = vmatpush1.msra.mxu0 0.0
    %597 = vmatprep.subr.mxu0 0.0
    %598 = vmatpush1.msra.mxu0 0.0
    %599 = vmatprep.subr.mxu0 0.0
    %600 = vmatpush1.msra.mxu0 0.0
    %601 = vmatprep.subr.mxu0 0.0
    %602 = vmatpush1.msra.mxu0 0.0
    %603 = vmatprep.subr.mxu0 0.0
    %604 = vmatpush1.msra.mxu0 0.0
    %605 = vmatprep.subr.mxu0 0.0
    %606 = vmatpush1.msra.mxu0 0.0
    %607 = vmatprep.subr.mxu0 0.0
    %608 = vmatpush1.msra.mxu0 0.0
    %609 = vmatprep.subr.mxu0 0.0
    %610 = vmatpush1.msra.mxu0 0.0
    %611 = vmatprep.subr.mxu0 0.0
    %612 = vmatpush1.msra.mxu0 0.0
    %613 = vmatprep.subr.mxu0 0.0
    %614 = vmatpush1.msra.mxu0 0.0
    %615 = vmatprep.subr.mxu0 0.0
    %616 = vmatpush1.msra.mxu0 0.0
    %617 = vmatprep.subr.mxu0 0.0
    %618 = vmatpush1.msra.mxu0 0.0
    %619 = vmatprep.subr.mxu0 0.0
    %620 = vmatpush1.msra.mxu0 0.0
    %621 = vmatprep.subr.mxu0 0.0
    %622 = vmatpush1.msra.mxu0 0.0
    %623 = vmatprep.mubr.f32.mxu0 0.0
    %624 = vmatmul.mubr.f32.gmra.mrb[0].mxu0 %v330
    %v625 = vpop.f32.mrb[0].mxu0
    %v626 = vadd.f32 %v557, %v625
    %v627 = vpop.f32.mrb[0].mxu0
    %628 = vmatprep.mubr.f32.mxu0 0.0
    %629 = vmatmul.mubr.f32.gmra.mrb[0].mxu0 %v333
    %v630 = vpop.f32.mrb[0].mxu0
    %v631 = vadd.f32 %v557, %v630
    %v632 = vpop.f32.mrb[0].mxu0
    %633 = vmatprep.mubr.f32.mxu0 0.0
    %634 = vmatmul.mubr.f32.gmra.mrb[0].mxu0 %v336
    %v635 = vpop.f32.mrb[0].mxu0
    %v636 = vadd.f32 %v557, %v635
    %v637 = vpop.f32.mrb[0].mxu0
    %638 = vmatprep.mubr.f32.mxu0 0.0
    %639 = vmatmul.mubr.f32.gmra.mrb[0].mxu0 %v339
    %v640 = vpop.f32.mrb[0].mxu0
    %v641 = vadd.f32 %v557, %v640
    %v642 = vpop.f32.mrb[0].mxu0
    %643 = vmatprep.mubr.f32.mxu0 0.0
    %644 = vmatmul.mubr.f32.gmra.mrb[0].mxu0 %v342
    %v645 = vpop.f32.mrb[0].mxu0
    %v646 = vadd.f32 %v557, %v645
    %v647 = vpop.f32.mrb[0].mxu0
    %648 = vmatprep.mubr.f32.mxu0 0.0
    %649 = vmatmul.mubr.f32.gmra.mrb[0].mxu0 %v345
    %v650 = vpop.f32.mrb[0].mxu0
    %v651 = vadd.f32 %v557, %v650
    %v652 = vpop.f32.mrb[0].mxu0
    %653 = vdwg.mxu0
    %v654 = vsub.f32 %v520, %v535
    %v655 = vsub.f32 %v525, %v540
    %v656 = vsub.f32 %v530, %v545
    %v657 = vsub.f32 %v535, %v520
    %v658 = vsub.f32 %v540, %v525
    %v659 = vsub.f32 %v545, %v530
    %v660 = vmul.f32 %v414, %v654
    %v661 = vmul.f32 %v419, %v655
    %v662 = vmul.f32 %v424, %v656
    %v663 = vmul.f32 %v429, %v657
    %v664 = vmul.f32 %v434, %v658
    %v665 = vmul.f32 %v439, %v659
    %v667 = vsel %vm328, %v660, 0
    %v670 = vsel %vm328, %v661, 0
    %v673 = vsel %vm328, %v662, 0
    %v676 = vsel %vm328, %v663, 0
    %v679 = vsel %vm328, %v664, 0
    %v682 = vsel %vm328, %v665, 0
    %684 = vmatprep.subr.mxu0 0.0
    %685 = vmatpush1.msra.mxu0 %v313
    %686 = vmatprep.subr.mxu0 0.0
    %687 = vmatpush1.msra.mxu0 %v314
    %688 = vmatprep.subr.mxu0 0.0
    %689 = vmatpush1.msra.mxu0 %v315
    %690 = vmatprep.subr.mxu0 0.0
    %691 = vmatpush1.msra.mxu0 %v316
    %692 = vmatprep.subr.mxu0 0.0
    %693 = vmatpush1.msra.mxu0 0.0
    %694 = vmatprep.subr.mxu0 0.0
    %695 = vmatpush1.msra.mxu0 0.0
    %696 = vmatprep.subr.mxu0 0.0
    %697 = vmatpush1.msra.mxu0 0.0
    %698 = vmatprep.subr.mxu0 0.0
    %699 = vmatpush1.msra.mxu0 0.0
    %700 = vmatprep.subr.mxu0 0.0
    %701 = vmatpush1.msra.mxu0 0.0
    %702 = vmatprep.subr.mxu0 0.0
    %703 = vmatpush1.msra.mxu0 0.0
    %704 = vmatprep.subr.mxu0 0.0
    %705 = vmatpush1.msra.mxu0 0.0
    %706 = vmatprep.subr.mxu0 0.0
    %707 = vmatpush1.msra.mxu0 0.0
    %708 = vmatprep.subr.mxu0 0.0
    %709 = vmatpush1.msra.mxu0 0.0
    %710 = vmatprep.subr.mxu0 0.0
    %711 = vmatpush1.msra.mxu0 0.0
    %712 = vmatprep.subr.mxu0 0.0
    %713 = vmatpush1.msra.mxu0 0.0
    %714 = vmatprep.subr.mxu0 0.0
    %715 = vmatpush1.msra.mxu0 0.0
    %716 = vmatprep.subr.mxu0 0.0
    %717 = vmatpush1.msra.mxu0 0.0
    %718 = vmatprep.subr.mxu0 0.0
    %719 = vmatpush1.msra.mxu0 0.0
    %720 = vmatprep.subr.mxu0 0.0
    %721 = vmatpush1.msra.mxu0 0.0
    %722 = vmatprep.subr.mxu0 0.0
    %723 = vmatpush1.msra.mxu0 0.0
    %724 = vmatprep.subr.mxu0 0.0
    %725 = vmatpush1.msra.mxu0 0.0
    %726 = vmatprep.subr.mxu0 0.0
    %727 = vmatpush1.msra.mxu0 0.0
    %728 = vmatprep.subr.mxu0 0.0
    %729 = vmatpush1.msra.mxu0 0.0
    %730 = vmatprep.subr.mxu0 0.0
    %731 = vmatpush1.msra.mxu0 0.0
    %732 = vmatprep.subr.mxu0 0.0
    %733 = vmatpush1.msra.mxu0 0.0
    %734 = vmatprep.subr.mxu0 0.0
    %735 = vmatpush1.msra.mxu0 0.0
    %736 = vmatprep.subr.mxu0 0.0
    %737 = vmatpush1.msra.mxu0 0.0
    %738 = vmatprep.subr.mxu0 0.0
    %739 = vmatpush1.msra.mxu0 0.0
    %740 = vmatprep.subr.mxu0 0.0
    %741 = vmatpush1.msra.mxu0 0.0
    %742 = vmatprep.subr.mxu0 0.0
    %743 = vmatpush1.msra.mxu0 0.0
    %744 = vmatprep.subr.mxu0 0.0
    %745 = vmatpush1.msra.mxu0 0.0
    %746 = vmatprep.subr.mxu0 0.0
    %747 = vmatpush1.msra.mxu0 0.0
    %748 = vmatprep.mubr.f32.mxu0 0.0
    %749 = vmatmul.mubr.f32.gmra.mrb[0].mxu0 %v667
    %v750 = vpop.f32.mrb[0].mxu0
    %v751 = vadd.f32 0.0, %v750
    %v752 = vpop.f32.mrb[0].mxu0
    %753 = vmatprep.mubr.f32.mxu0 0.0
    %754 = vmatmul.mubr.f32.gmra.mrb[0].mxu0 %v670
    %v755 = vpop.f32.mrb[0].mxu0
    %v756 = vadd.f32 0.0, %v755
    %v757 = vpop.f32.mrb[0].mxu0
    %758 = vmatprep.mubr.f32.mxu0 0.0
    %759 = vmatmul.mubr.f32.gmra.mrb[0].mxu0 %v673
    %v760 = vpop.f32.mrb[0].mxu0
    %v761 = vadd.f32 0.0, %v760
    %v762 = vpop.f32.mrb[0].mxu0
    %763 = vmatprep.mubr.f32.mxu0 0.0
    %764 = vmatmul.mubr.f32.gmra.mrb[0].mxu0 %v676
    %v765 = vpop.f32.mrb[0].mxu0
    %v766 = vadd.f32 0.0, %v765
    %v767 = vpop.f32.mrb[0].mxu0
    %768 = vmatprep.mubr.f32.mxu0 0.0
    %769 = vmatmul.mubr.f32.gmra.mrb[0].mxu0 %v679
    %v770 = vpop.f32.mrb[0].mxu0
    %v771 = vadd.f32 0.0, %v770
    %v772 = vpop.f32.mrb[0].mxu0
    %773 = vmatprep.mubr.f32.mxu0 0.0
    %774 = vmatmul.mubr.f32.gmra.mrb[0].mxu0 %v682
    %v775 = vpop.f32.mrb[0].mxu0
    %v776 = vadd.f32 0.0, %v775
    %v777 = vpop.f32.mrb[0].mxu0
    %778 = vdwg.mxu0
    %v779 = vmul.f32 %v751, 0.35355338
    %v780 = vmul.f32 %v756, 0.35355338
    %v781 = vmul.f32 %v761, 0.35355338
    %v782 = vmul.f32 %v766, 0.35355338
    %v783 = vmul.f32 %v771, 0.35355338
    %v784 = vmul.f32 %v776, 0.35355338
    %v785 = vxor.u32 %v779, 2147483648
    %v786 = vxor.u32 %v780, 2147483648
    %v787 = vxor.u32 %v781, 2147483648
    %v788 = vxor.u32 %v782, 2147483648
    %v789 = vxor.u32 %v783, 2147483648
    %v790 = vxor.u32 %v784, 2147483648
    %v791 = vmul.f32 %v785, 1.442695
    %v792 = vpow.pop %v791
    %v793 = vmul.f32 %v786, 1.442695
    %v794 = vpow.pop %v793
    %v795 = vmul.f32 %v787, 1.442695
    %v796 = vpow.pop %v795
    %v797 = vmul.f32 %v788, 1.442695
    %v798 = vpow.pop %v797
    %v799 = vmul.f32 %v789, 1.442695
    %v800 = vpow.pop %v799
    %v801 = vmul.f32 %v790, 1.442695
    %v802 = vpow.pop %v801
    %v803 = vadd.f32 %v792, 1.0
    %v804 = vadd.f32 %v794, 1.0
    %v805 = vadd.f32 %v796, 1.0
    %v806 = vadd.f32 %v798, 1.0
    %v807 = vadd.f32 %v800, 1.0
    %v808 = vadd.f32 %v802, 1.0
    %v809 = vrcp.pop %v803
    %v810 = vmul.f32 1.0, %v809
    %v811 = vrcp.pop %v804
    %v812 = vmul.f32 1.0, %v811
    %v813 = vrcp.pop %v805
    %v814 = vmul.f32 1.0, %v813
    %v815 = vrcp.pop %v806
    %v816 = vmul.f32 1.0, %v815
    %v817 = vrcp.pop %v807
    %v818 = vmul.f32 1.0, %v817
    %v819 = vrcp.pop %v808
    %v820 = vmul.f32 1.0, %v819
    %v821 = vsub.f32 %v626, %v641
    %v822 = vsub.f32 %v631, %v646
    %v823 = vsub.f32 %v636, %v651
    %v824 = vsub.f32 %v641, %v626
    %v825 = vsub.f32 %v646, %v631
    %v826 = vsub.f32 %v651, %v636
    %v827 = vmul.f32 %v810, %v821
    %v828 = vmul.f32 %v812, %v822
    %v829 = vmul.f32 %v814, %v823
    %v830 = vmul.f32 %v816, %v824
    %v831 = vmul.f32 %v818, %v825
    %v832 = vmul.f32 %v820, %v826
    %v833 = vadd.f32 %v641, %v827
    %v834 = vadd.f32 %v646, %v828
    %v835 = vadd.f32 %v651, %v829
    %v836 = vadd.f32 %v626, %v830
    %v837 = vadd.f32 %v631, %v831
    %v838 = vadd.f32 %v636, %v832
    %v839 = vld [vmem:[#allocation16] sm:$0xff]
    %v840 = vld [vmem:[#allocation16 + $0x8] sm:$0xff]
    %v841 = vld [vmem:[#allocation16 + $0x10] sm:$0xff]
    %v842 = vld [vmem:[#allocation16 + $0x18] sm:$0xff]
    %v843 = vld [vmem:[#allocation17] sm:$0x1]
    %v845 = vlaneseq
    %v846 = vshrl.u32 %v845, 7
    %v847 = vsub.s32 0, %v846
    %v848 = vrot.slane %v843, %v847
    %v851 = vsel %vm328, %v833, 0
    %v854 = vsel %vm328, %v834, 0
    %v857 = vsel %vm328, %v835, 0
    %v860 = vsel %vm328, %v836, 0
    %v863 = vsel %vm328, %v837, 0
    %v866 = vsel %vm328, %v838, 0
    %868 = vmatprep.subr.mxu0 0.0
    %869 = vmatpush1.msra.mxu0 %v839
    %870 = vmatprep.subr.mxu0 0.0
    %871 = vmatpush1.msra.mxu0 %v840
    %872 = vmatprep.subr.mxu0 0.0
    %873 = vmatpush1.msra.mxu0 %v841
    %874 = vmatprep.subr.mxu0 0.0
    %875 = vmatpush1.msra.mxu0 %v842
    %876 = vmatprep.subr.mxu0 0.0
    %877 = vmatpush1.msra.mxu0 0.0
    %878 = vmatprep.subr.mxu0 0.0
    %879 = vmatpush1.msra.mxu0 0.0
    %880 = vmatprep.subr.mxu0 0.0
    %881 = vmatpush1.msra.mxu0 0.0
    %882 = vmatprep.subr.mxu0 0.0
    %883 = vmatpush1.msra.mxu0 0.0
    %884 = vmatprep.subr.mxu0 0.0
    %885 = vmatpush1.msra.mxu0 0.0
    %886 = vmatprep.subr.mxu0 0.0
    %887 = vmatpush1.msra.mxu0 0.0
    %888 = vmatprep.subr.mxu0 0.0
    %889 = vmatpush1.msra.mxu0 0.0
    %890 = vmatprep.subr.mxu0 0.0
    %891 = vmatpush1.msra.mxu0 0.0
    %892 = vmatprep.subr.mxu0 0.0
    %893 = vmatpush1.msra.mxu0 0.0
    %894 = vmatprep.subr.mxu0 0.0
    %895 = vmatpush1.msra.mxu0 0.0
    %896 = vmatprep.subr.mxu0 0.0
    %897 = vmatpush1.msra.mxu0 0.0
    %898 = vmatprep.subr.mxu0 0.0
    %899 = vmatpush1.msra.mxu0 0.0
    %900 = vmatprep.subr.mxu0 0.0
    %901 = vmatpush1.msra.mxu0 0.0
    %902 = vmatprep.subr.mxu0 0.0
    %903 = vmatpush1.msra.mxu0 0.0
    %904 = vmatprep.subr.mxu0 0.0
    %905 = vmatpush1.msra.mxu0 0.0
    %906 = vmatprep.subr.mxu0 0.0
    %907 = vmatpush1.msra.mxu0 0.0
    %908 = vmatprep.subr.mxu0 0.0
    %909 = vmatpush1.msra.mxu0 0.0
    %910 = vmatprep.subr.mxu0 0.0
    %911 = vmatpush1.msra.mxu0 0.0
    %912 = vmatprep.subr.mxu0 0.0
    %913 = vmatpush1.msra.mxu0 0.0
    %914 = vmatprep.subr.mxu0 0.0
    %915 = vmatpush1.msra.mxu0 0.0
    %916 = vmatprep.subr.mxu0 0.0
    %917 = vmatpush1.msra.mxu0 0.0
    %918 = vmatprep.subr.mxu0 0.0
    %919 = vmatpush1.msra.mxu0 0.0
    %920 = vmatprep.subr.mxu0 0.0
    %921 = vmatpush1.msra.mxu0 0.0
    %922 = vmatprep.subr.mxu0 0.0
    %923 = vmatpush1.msra.mxu0 0.0
    %924 = vmatprep.subr.mxu0 0.0
    %925 = vmatpush1.msra.mxu0 0.0
    %926 = vmatprep.subr.mxu0 0.0
    %927 = vmatpush1.msra.mxu0 0.0
    %928 = vmatprep.subr.mxu0 0.0
    %929 = vmatpush1.msra.mxu0 0.0
    %930 = vmatprep.subr.mxu0 0.0
    %931 = vmatpush1.msra.mxu0 0.0
    %932 = vmatprep.mubr.f32.mxu0 0.0
    %933 = vmatmul.mubr.f32.gmra.mrb[0].mxu0 %v851
    %v934 = vpop.f32.mrb[0].mxu0
    %v935 = vadd.f32 %v848, %v934
    %v936 = vpop.f32.mrb[0].mxu0
    %937 = vmatprep.mubr.f32.mxu0 0.0
    %938 = vmatmul.mubr.f32.gmra.mrb[0].mxu0 %v854
    %v939 = vpop.f32.mrb[0].mxu0
    %v940 = vadd.f32 %v848, %v939
    %v941 = vpop.f32.mrb[0].mxu0
    %942 = vmatprep.mubr.f32.mxu0 0.0
    %943 = vmatmul.mubr.f32.gmra.mrb[0].mxu0 %v857
    %v944 = vpop.f32.mrb[0].mxu0
    %v945 = vadd.f32 %v848, %v944
    %v946 = vpop.f32.mrb[0].mxu0
    %947 = vmatprep.mubr.f32.mxu0 0.0
    %948 = vmatmul.mubr.f32.gmra.mrb[0].mxu0 %v860
    %v949 = vpop.f32.mrb[0].mxu0
    %v950 = vadd.f32 %v848, %v949
    %v951 = vpop.f32.mrb[0].mxu0
    %952 = vmatprep.mubr.f32.mxu0 0.0
    %953 = vmatmul.mubr.f32.gmra.mrb[0].mxu0 %v863
    %v954 = vpop.f32.mrb[0].mxu0
    %v955 = vadd.f32 %v848, %v954
    %v956 = vpop.f32.mrb[0].mxu0
    %957 = vmatprep.mubr.f32.mxu0 0.0
    %958 = vmatmul.mubr.f32.gmra.mrb[0].mxu0 %v866
    %v959 = vpop.f32.mrb[0].mxu0
    %v960 = vadd.f32 %v848, %v959
    %v961 = vpop.f32.mrb[0].mxu0
    %962 = vdwg.mxu0
    %v963 = vadd.f32 %v299, %v935
    %v964 = vadd.f32 %v300, %v940
    %v965 = vadd.f32 %v301, %v945
    %v966 = vadd.f32 %v310, %v950
    %v967 = vadd.f32 %v311, %v955
    %v968 = vadd.f32 %v312, %v960
    %v969 = vld [vmem:[#allocation19] sm:$0x1]
    %v970 = vld [vmem:[#allocation20] sm:$0x1]
    %v971 = vsel %vm328, %v963, 0.0
    %972 = vadd.xlane.f32.xlu0 %v971
    %v973 = vpop.xlane.xlu0 %972
    %v974 = vsel %vm328, %v964, 0.0
    %975 = vadd.xlane.f32.xlu0 %v974
    %v976 = vpop.xlane.xlu0 %975
    %v977 = vsel %vm328, %v965, 0.0
    %978 = vadd.xlane.f32.xlu0 %v977
    %v979 = vpop.xlane.xlu0 %978
    %v980 = vsel %vm328, %v966, 0.0
    %981 = vadd.xlane.f32.xlu0 %v980
    %v982 = vpop.xlane.xlu0 %981
    %v983 = vsel %vm328, %v967, 0.0
    %984 = vadd.xlane.f32.xlu0 %v983
    %v985 = vpop.xlane.xlu0 %984
    %v986 = vsel %vm328, %v968, 0.0
    %987 = vadd.xlane.f32.xlu0 %v986
    %v988 = vpop.xlane.xlu0 %987
    %v989 = vrcp.pop 32.0
    %v990 = vmul.f32 %v973, %v989
    %v991 = vmul.f32 %v976, %v989
    %v992 = vmul.f32 %v979, %v989
    %v993 = vmul.f32 %v982, %v989
    %v994 = vmul.f32 %v985, %v989
    %v995 = vmul.f32 %v988, %v989
    %v996 = vsub.f32 %v963, %v990
    %v997 = vsub.f32 %v964, %v991
    %v998 = vsub.f32 %v965, %v992
    %v999 = vsub.f32 %v966, %v993
    %v1000 = vsub.f32 %v967, %v994
    %v1001 = vsub.f32 %v968, %v995
    %v1002 = vmul.f32 %v996, %v996
    %v1003 = vmul.f32 %v997, %v997
    %v1004 = vmul.f32 %v998, %v998
    %v1005 = vmul.f32 %v999, %v999
    %v1006 = vmul.f32 %v1000, %v1000
    %v1007 = vmul.f32 %v1001, %v1001
    %v1008 = vsel %vm328, %v1002, 0.0
    %1009 = vadd.xlane.f32.xlu0 %v1008
    %v1010 = vpop.xlane.xlu0 %1009
    %v1011 = vsel %vm328, %v1003, 0.0
    %1012 = vadd.xlane.f32.xlu0 %v1011
    %v1013 = vpop.xlane.xlu0 %1012
    %v1014 = vsel %vm328, %v1004, 0.0
    %1015 = vadd.xlane.f32.xlu0 %v1014
    %v1016 = vpop.xlane.xlu0 %1015
    %v1017 = vsel %vm328, %v1005, 0.0
    %1018 = vadd.xlane.f32.xlu0 %v1017
    %v1019 = vpop.xlane.xlu0 %1018
    %v1020 = vsel %vm328, %v1006, 0.0
    %1021 = vadd.xlane.f32.xlu0 %v1020
    %v1022 = vpop.xlane.xlu0 %1021
    %v1023 = vsel %vm328, %v1007, 0.0
    %1024 = vadd.xlane.f32.xlu0 %v1023
    %v1025 = vpop.xlane.xlu0 %1024
    %v1026 = vmul.f32 %v1010, %v989
    %v1027 = vmul.f32 %v1013, %v989
    %v1028 = vmul.f32 %v1016, %v989
    %v1029 = vmul.f32 %v1019, %v989
    %v1030 = vmul.f32 %v1022, %v989
    %v1031 = vmul.f32 %v1025, %v989
    %v1032 = vadd.f32 %v1026, 1e-05
    %v1033 = vadd.f32 %v1027, 1e-05
    %v1034 = vadd.f32 %v1028, 1e-05
    %v1035 = vadd.f32 %v1029, 1e-05
    %v1036 = vadd.f32 %v1030, 1e-05
    %v1037 = vadd.f32 %v1031, 1e-05
    %v1038 = vrsqrt.pop %v1032
    %v1039 = vrsqrt.pop %v1033
    %v1040 = vrsqrt.pop %v1034
    %v1041 = vrsqrt.pop %v1035
    %v1042 = vrsqrt.pop %v1036
    %v1043 = vrsqrt.pop %v1037
    %v1044 = vmul.f32 %v996, %v1038
    %v1045 = vmul.f32 %v997, %v1039
    %v1046 = vmul.f32 %v998, %v1040
    %v1047 = vmul.f32 %v999, %v1041
    %v1048 = vmul.f32 %v1000, %v1042
    %v1049 = vmul.f32 %v1001, %v1043
    %v1051 = vlaneseq
    %v1052 = vshrl.u32 %v1051, 7
    %v1053 = vsub.s32 0, %v1052
    %v1054 = vrot.slane %v969, %v1053
    %v1056 = vmul.f32 %v1044, %v1054
    %v1057 = vmul.f32 %v1045, %v1054
    %v1058 = vmul.f32 %v1046, %v1054
    %v1059 = vmul.f32 %v1047, %v1054
    %v1060 = vmul.f32 %v1048, %v1054
    %v1061 = vmul.f32 %v1049, %v1054
    %v1063 = vlaneseq
    %v1064 = vshrl.u32 %v1063, 7
    %v1065 = vsub.s32 0, %v1064
    %v1066 = vrot.slane %v970, %v1065
    %v1068 = vadd.f32 %v1056, %v1066
    %v1069 = vadd.f32 %v1057, %v1066
    %v1070 = vadd.f32 %v1058, %v1066
    %v1071 = vadd.f32 %v1059, %v1066
    %v1072 = vadd.f32 %v1060, %v1066
    %v1073 = vadd.f32 %v1061, %v1066
    %v1074 = vld [vmem:[#allocation22] sm:$0xff]
    %v1075 = vld [vmem:[#allocation22 + $0x8] sm:$0xff]
    %v1076 = vld [vmem:[#allocation22 + $0x10] sm:$0xff]
    %v1077 = vld [vmem:[#allocation22 + $0x18] sm:$0xff]
    %v1078 = vld [vmem:[#allocation23] sm:$0x1]
    %v1080 = vlaneseq
    %v1081 = vshrl.u32 %v1080, 7
    %v1082 = vsub.s32 0, %v1081
    %v1083 = vrot.slane %v1078, %v1082
    %v1086 = vsel %vm328, %v1068, 0
    %v1089 = vsel %vm328, %v1069, 0
    %v1092 = vsel %vm328, %v1070, 0
    %v1095 = vsel %vm328, %v1071, 0
    %v1098 = vsel %vm328, %v1072, 0
    %v1101 = vsel %vm328, %v1073, 0
    %1103 = vmatprep.subr.mxu0 0.0
    %1104 = vmatpush1.msra.mxu0 %v1074
    %1105 = vmatprep.subr.mxu0 0.0
    %1106 = vmatpush1.msra.mxu0 %v1075
    %1107 = vmatprep.subr.mxu0 0.0
    %1108 = vmatpush1.msra.mxu0 %v1076
    %1109 = vmatprep.subr.mxu0 0.0
    %1110 = vmatpush1.msra.mxu0 %v1077
    %1111 = vmatprep.subr.mxu0 0.0
    %1112 = vmatpush1.msra.mxu0 0.0
    %1113 = vmatprep.subr.mxu0 0.0
    %1114 = vmatpush1.msra.mxu0 0.0
    %1115 = vmatprep.subr.mxu0 0.0
    %1116 = vmatpush1.msra.mxu0 0.0
    %1117 = vmatprep.subr.mxu0 0.0
    %1118 = vmatpush1.msra.mxu0 0.0
    %1119 = vmatprep.subr.mxu0 0.0
    %1120 = vmatpush1.msra.mxu0 0.0
    %1121 = vmatprep.subr.mxu0 0.0
    %1122 = vmatpush1.msra.mxu0 0.0
    %1123 = vmatprep.subr.mxu0 0.0
    %1124 = vmatpush1.msra.mxu0 0.0
    %1125 = vmatprep.subr.mxu0 0.0
    %1126 = vmatpush1.msra.mxu0 0.0
    %1127 = vmatprep.subr.mxu0 0.0
    %1128 = vmatpush1.msra.mxu0 0.0
    %1129 = vmatprep.subr.mxu0 0.0
    %1130 = vmatpush1.msra.mxu0 0.0
    %1131 = vmatprep.subr.mxu0 0.0
    %1132 = vmatpush1.msra.mxu0 0.0
    %1133 = vmatprep.subr.mxu0 0.0
    %1134 = vmatpush1.msra.mxu0 0.0
    %1135 = vmatprep.subr.mxu0 0.0
    %1136 = vmatpush1.msra.mxu0 0.0
    %1137 = vmatprep.subr.mxu0 0.0
    %1138 = vmatpush1.msra.mxu0 0.0
    %1139 = vmatprep.subr.mxu0 0.0
    %1140 = vmatpush1.msra.mxu0 0.0
    %1141 = vmatprep.subr.mxu0 0.0
    %1142 = vmatpush1.msra.mxu0 0.0
    %1143 = vmatprep.subr.mxu0 0.0
    %1144 = vmatpush1.msra.mxu0 0.0
    %1145 = vmatprep.subr.mxu0 0.0
    %1146 = vmatpush1.msra.mxu0 0.0
    %1147 = vmatprep.subr.mxu0 0.0
    %1148 = vmatpush1.msra.mxu0 0.0
    %1149 = vmatprep.subr.mxu0 0.0
    %1150 = vmatpush1.msra.mxu0 0.0
    %1151 = vmatprep.subr.mxu0 0.0
    %1152 = vmatpush1.msra.mxu0 0.0
    %1153 = vmatprep.subr.mxu0 0.0
    %1154 = vmatpush1.msra.mxu0 0.0
    %1155 = vmatprep.subr.mxu0 0.0
    %1156 = vmatpush1.msra.mxu0 0.0
    %1157 = vmatprep.subr.mxu0 0.0
    %1158 = vmatpush1.msra.mxu0 0.0
    %1159 = vmatprep.subr.mxu0 0.0
    %1160 = vmatpush1.msra.mxu0 0.0
    %1161 = vmatprep.subr.mxu0 0.0
    %1162 = vmatpush1.msra.mxu0 0.0
    %1163 = vmatprep.subr.mxu0 0.0
    %1164 = vmatpush1.msra.mxu0 0.0
    %1165 = vmatprep.subr.mxu0 0.0
    %1166 = vmatpush1.msra.mxu0 0.0
    %1167 = vmatprep.mubr.f32.mxu0 0.0
    %1168 = vmatmul.mubr.f32.gmra.mrb[0].mxu0 %v1086
    %v1169 = vpop.f32.mrb[0].mxu0
    %v1170 = vadd.f32 %v1083, %v1169
    %v1171 = vpop.f32.mrb[0].mxu0
    %1172 = vmatprep.mubr.f32.mxu0 0.0
    %1173 = vmatmul.mubr.f32.gmra.mrb[0].mxu0 %v1089
    %v1174 = vpop.f32.mrb[0].mxu0
    %v1175 = vadd.f32 %v1083, %v1174
    %v1176 = vpop.f32.mrb[0].mxu0
    %1177 = vmatprep.mubr.f32.mxu0 0.0
    %1178 = vmatmul.mubr.f32.gmra.mrb[0].mxu0 %v1092
    %v1179 = vpop.f32.mrb[0].mxu0
    %v1180 = vadd.f32 %v1083, %v1179
    %v1181 = vpop.f32.mrb[0].mxu0
    %1182 = vmatprep.mubr.f32.mxu0 0.0
    %1183 = vmatmul.mubr.f32.gmra.mrb[0].mxu0 %v1095
    %v1184 = vpop.f32.mrb[0].mxu0
    %v1185 = vadd.f32 %v1083, %v1184
    %v1186 = vpop.f32.mrb[0].mxu0
    %1187 = vmatprep.mubr.f32.mxu0 0.0
    %1188 = vmatmul.mubr.f32.gmra.mrb[0].mxu0 %v1098
    %v1189 = vpop.f32.mrb[0].mxu0
    %v1190 = vadd.f32 %v1083, %v1189
    %v1191 = vpop.f32.mrb[0].mxu0
    %1192 = vmatprep.mubr.f32.mxu0 0.0
    %1193 = vmatmul.mubr.f32.gmra.mrb[0].mxu0 %v1101
    %v1194 = vpop.f32.mrb[0].mxu0
    %v1195 = vadd.f32 %v1083, %v1194
    %v1196 = vpop.f32.mrb[0].mxu0
    %1197 = vdwg.mxu0
    %v1198 = vmax.f32 %v1170, 0.0
    %v1199 = vmax.f32 %v1175, 0.0
    %v1200 = vmax.f32 %v1180, 0.0
    %v1201 = vmax.f32 %v1185, 0.0
    %v1202 = vmax.f32 %v1190, 0.0
    %v1203 = vmax.f32 %v1195, 0.0
    %v1204 = vld [vmem:[%s17] sm:$0xff]
    %v1205 = vld [vmem:[%s17 + $0x8] sm:$0xff]
    %v1206 = vld [vmem:[%s17 + $0x10] sm:$0xff]
    %v1207 = vld [vmem:[%s17 + $0x18] sm:$0xff]
    %v1208 = vld [vmem:[%s17 + $0x20] sm:$0xff]
    %v1209 = vld [vmem:[%s17 + $0x28] sm:$0xff]
    %v1210 = vld [vmem:[%s17 + $0x30] sm:$0xff]
    %v1211 = vld [vmem:[%s17 + $0x38] sm:$0xff]
    %v1212 = vld [vmem:[%s18] sm:$0x1]
    %v1214 = vlaneseq
    %v1215 = vshrl.u32 %v1214, 7
    %v1216 = vsub.s32 0, %v1215
    %v1217 = vrot.slane %v1212, %v1216
    %vm1219 = vcmask 523264
    %v1221 = vsel %vm1219, %v1198, 0
    %v1224 = vsel %vm1219, %v1199, 0
    %v1227 = vsel %vm1219, %v1200, 0
    %v1230 = vsel %vm1219, %v1201, 0
    %v1233 = vsel %vm1219, %v1202, 0
    %v1236 = vsel %vm1219, %v1203, 0
    %1238 = vmatprep.subr.mxu0 0.0
    %1239 = vmatpush1.msra.mxu0 %v1204
    %1240 = vmatprep.subr.mxu0 0.0
    %1241 = vmatpush1.msra.mxu0 %v1205
    %1242 = vmatprep.subr.mxu0 0.0
    %1243 = vmatpush1.msra.mxu0 %v1206
    %1244 = vmatprep.subr.mxu0 0.0
    %1245 = vmatpush1.msra.mxu0 %v1207
    %1246 = vmatprep.subr.mxu0 0.0
    %1247 = vmatpush1.msra.mxu0 %v1208
    %1248 = vmatprep.subr.mxu0 0.0
    %1249 = vmatpush1.msra.mxu0 %v1209
    %1250 = vmatprep.subr.mxu0 0.0
    %1251 = vmatpush1.msra.mxu0 %v1210
    %1252 = vmatprep.subr.mxu0 0.0
    %1253 = vmatpush1.msra.mxu0 %v1211
    %1254 = vmatprep.subr.mxu0 0.0
    %1255 = vmatpush1.msra.mxu0 0.0
    %1256 = vmatprep.subr.mxu0 0.0
    %1257 = vmatpush1.msra.mxu0 0.0
    %1258 = vmatprep.subr.mxu0 0.0
    %1259 = vmatpush1.msra.mxu0 0.0
    %1260 = vmatprep.subr.mxu0 0.0
    %1261 = vmatpush1.msra.mxu0 0.0
    %1262 = vmatprep.subr.mxu0 0.0
    %1263 = vmatpush1.msra.mxu0 0.0
    %1264 = vmatprep.subr.mxu0 0.0
    %1265 = vmatpush1.msra.mxu0 0.0
    %1266 = vmatprep.subr.mxu0 0.0
    %1267 = vmatpush1.msra.mxu0 0.0
    %1268 = vmatprep.subr.mxu0 0.0
    %1269 = vmatpush1.msra.mxu0 0.0
    %1270 = vmatprep.subr.mxu0 0.0
    %1271 = vmatpush1.msra.mxu0 0.0
    %1272 = vmatprep.subr.mxu0 0.0
    %1273 = vmatpush1.msra.mxu0 0.0
    %1274 = vmatprep.subr.mxu0 0.0
    %1275 = vmatpush1.msra.mxu0 0.0
    %1276 = vmatprep.subr.mxu0 0.0
    %1277 = vmatpush1.msra.mxu0 0.0
    %1278 = vmatprep.subr.mxu0 0.0
    %1279 = vmatpush1.msra.mxu0 0.0
    %1280 = vmatprep.subr.mxu0 0.0
    %1281 = vmatpush1.msra.mxu0 0.0
    %1282 = vmatprep.subr.mxu0 0.0
    %1283 = vmatpush1.msra.mxu0 0.0
    %1284 = vmatprep.subr.mxu0 0.0
    %1285 = vmatpush1.msra.mxu0 0.0
    %1286 = vmatprep.subr.mxu0 0.0
    %1287 = vmatpush1.msra.mxu0 0.0
    %1288 = vmatprep.subr.mxu0 0.0
    %1289 = vmatpush1.msra.mxu0 0.0
    %1290 = vmatprep.subr.mxu0 0.0
    %1291 = vmatpush1.msra.mxu0 0.0
    %1292 = vmatprep.subr.mxu0 0.0
    %1293 = vmatpush1.msra.mxu0 0.0
    %1294 = vmatprep.subr.mxu0 0.0
    %1295 = vmatpush1.msra.mxu0 0.0
    %1296 = vmatprep.subr.mxu0 0.0
    %1297 = vmatpush1.msra.mxu0 0.0
    %1298 = vmatprep.subr.mxu0 0.0
    %1299 = vmatpush1.msra.mxu0 0.0
    %1300 = vmatprep.subr.mxu0 0.0
    %1301 = vmatpush1.msra.mxu0 0.0
    %1302 = vmatprep.mubr.f32.mxu0 0.0
    %1303 = vmatmul.mubr.f32.gmra.mrb[0].mxu0 %v1221
    %v1304 = vpop.f32.mrb[0].mxu0
    %v1305 = vadd.f32 %v1217, %v1304
    %v1306 = vpop.f32.mrb[0].mxu0
    %1307 = vmatprep.mubr.f32.mxu0 0.0
    %1308 = vmatmul.mubr.f32.gmra.mrb[0].mxu0 %v1224
    %v1309 = vpop.f32.mrb[0].mxu0
    %v1310 = vadd.f32 %v1217, %v1309
    %v1311 = vpop.f32.mrb[0].mxu0
    %1312 = vmatprep.mubr.f32.mxu0 0.0
    %1313 = vmatmul.mubr.f32.gmra.mrb[0].mxu0 %v1227
    %v1314 = vpop.f32.mrb[0].mxu0
    %v1315 = vadd.f32 %v1217, %v1314
    %v1316 = vpop.f32.mrb[0].mxu0
    %1317 = vmatprep.mubr.f32.mxu0 0.0
    %1318 = vmatmul.mubr.f32.gmra.mrb[0].mxu0 %v1230
    %v1319 = vpop.f32.mrb[0].mxu0
    %v1320 = vadd.f32 %v1217, %v1319
    %v1321 = vpop.f32.mrb[0].mxu0
    %1322 = vmatprep.mubr.f32.mxu0 0.0
    %1323 = vmatmul.mubr.f32.gmra.mrb[0].mxu0 %v1233
    %v1324 = vpop.f32.mrb[0].mxu0
    %v1325 = vadd.f32 %v1217, %v1324
    %v1326 = vpop.f32.mrb[0].mxu0
    %1327 = vmatprep.mubr.f32.mxu0 0.0
    %1328 = vmatmul.mubr.f32.gmra.mrb[0].mxu0 %v1236
    %v1329 = vpop.f32.mrb[0].mxu0
    %v1330 = vadd.f32 %v1217, %v1329
    %v1331 = vpop.f32.mrb[0].mxu0
    %1332 = vdwg.mxu0
    %v1333 = vadd.f32 %v1068, %v1305
    %v1334 = vadd.f32 %v1069, %v1310
    %v1335 = vadd.f32 %v1070, %v1315
    %v1336 = vadd.f32 %v1071, %v1320
    %v1337 = vadd.f32 %v1072, %v1325
    %v1338 = vadd.f32 %v1073, %v1330
    %v1339 = vld [vmem:[%s19] sm:$0x1]
    %v1340 = vld [vmem:[%s20] sm:$0x1]
    %v1341 = vsel %vm328, %v1333, 0.0
    %1342 = vadd.xlane.f32.xlu0 %v1341
    %v1343 = vpop.xlane.xlu0 %1342
    %v1344 = vsel %vm328, %v1334, 0.0
    %1345 = vadd.xlane.f32.xlu0 %v1344
    %v1346 = vpop.xlane.xlu0 %1345
    %v1347 = vsel %vm328, %v1335, 0.0
    %1348 = vadd.xlane.f32.xlu0 %v1347
    %v1349 = vpop.xlane.xlu0 %1348
    %v1350 = vsel %vm328, %v1336, 0.0
    %1351 = vadd.xlane.f32.xlu0 %v1350
    %v1352 = vpop.xlane.xlu0 %1351
    %v1353 = vsel %vm328, %v1337, 0.0
    %1354 = vadd.xlane.f32.xlu0 %v1353
    %v1355 = vpop.xlane.xlu0 %1354
    %v1356 = vsel %vm328, %v1338, 0.0
    %1357 = vadd.xlane.f32.xlu0 %v1356
    %v1358 = vpop.xlane.xlu0 %1357
    %v1359 = vmul.f32 %v1343, %v989
    %v1360 = vmul.f32 %v1346, %v989
    %v1361 = vmul.f32 %v1349, %v989
    %v1362 = vmul.f32 %v1352, %v989
    %v1363 = vmul.f32 %v1355, %v989
    %v1364 = vmul.f32 %v1358, %v989
    %v1365 = vsub.f32 %v1333, %v1359
    %v1366 = vsub.f32 %v1334, %v1360
    %v1367 = vsub.f32 %v1335, %v1361
    %v1368 = vsub.f32 %v1336, %v1362
    %v1369 = vsub.f32 %v1337, %v1363
    %v1370 = vsub.f32 %v1338, %v1364
    %v1371 = vmul.f32 %v1365, %v1365
    %v1372 = vmul.f32 %v1366, %v1366
    %v1373 = vmul.f32 %v1367, %v1367
    %v1374 = vmul.f32 %v1368, %v1368
    %v1375 = vmul.f32 %v1369, %v1369
    %v1376 = vmul.f32 %v1370, %v1370
    %v1377 = vsel %vm328, %v1371, 0.0
    %1378 = vadd.xlane.f32.xlu0 %v1377
    %v1379 = vpop.xlane.xlu0 %1378
    %v1380 = vsel %vm328, %v1372, 0.0
    %1381 = vadd.xlane.f32.xlu0 %v1380
    %v1382 = vpop.xlane.xlu0 %1381
    %v1383 = vsel %vm328, %v1373, 0.0
    %1384 = vadd.xlane.f32.xlu0 %v1383
    %v1385 = vpop.xlane.xlu0 %1384
    %v1386 = vsel %vm328, %v1374, 0.0
    %1387 = vadd.xlane.f32.xlu0 %v1386
    %v1388 = vpop.xlane.xlu0 %1387
    %v1389 = vsel %vm328, %v1375, 0.0
    %1390 = vadd.xlane.f32.xlu0 %v1389
    %v1391 = vpop.xlane.xlu0 %1390
    %v1392 = vsel %vm328, %v1376, 0.0
    %1393 = vadd.xlane.f32.xlu0 %v1392
    %v1394 = vpop.xlane.xlu0 %1393
    %v1395 = vmul.f32 %v1379, %v989
    %v1396 = vmul.f32 %v1382, %v989
    %v1397 = vmul.f32 %v1385, %v989
    %v1398 = vmul.f32 %v1388, %v989
    %v1399 = vmul.f32 %v1391, %v989
    %v1400 = vmul.f32 %v1394, %v989
    %v1401 = vadd.f32 %v1395, 1e-05
    %v1402 = vadd.f32 %v1396, 1e-05
    %v1403 = vadd.f32 %v1397, 1e-05
    %v1404 = vadd.f32 %v1398, 1e-05
    %v1405 = vadd.f32 %v1399, 1e-05
    %v1406 = vadd.f32 %v1400, 1e-05
    %v1407 = vrsqrt.pop %v1401
    %v1408 = vrsqrt.pop %v1402
    %v1409 = vrsqrt.pop %v1403
    %v1410 = vrsqrt.pop %v1404
    %v1411 = vrsqrt.pop %v1405
    %v1412 = vrsqrt.pop %v1406
    %v1413 = vmul.f32 %v1365, %v1407
    %v1414 = vmul.f32 %v1366, %v1408
    %v1415 = vmul.f32 %v1367, %v1409
    %v1416 = vmul.f32 %v1368, %v1410
    %v1417 = vmul.f32 %v1369, %v1411
    %v1418 = vmul.f32 %v1370, %v1412
    %v1420 = vlaneseq
    %v1421 = vshrl.u32 %v1420, 7
    %v1422 = vsub.s32 0, %v1421
    %v1423 = vrot.slane %v1339, %v1422
    %v1425 = vmul.f32 %v1413, %v1423
    %v1426 = vmul.f32 %v1414, %v1423
    %v1427 = vmul.f32 %v1415, %v1423
    %v1428 = vmul.f32 %v1416, %v1423
    %v1429 = vmul.f32 %v1417, %v1423
    %v1430 = vmul.f32 %v1418, %v1423
    %v1432 = vlaneseq
    %v1433 = vshrl.u32 %v1432, 7
    %v1434 = vsub.s32 0, %v1433
    %v1435 = vrot.slane %v1340, %v1434
    %v1437 = vadd.f32 %v1425, %v1435
    %v1438 = vadd.f32 %v1426, %v1435
    %v1439 = vadd.f32 %v1427, %v1435
    %v1440 = vadd.f32 %v1428, %v1435
    %v1441 = vadd.f32 %v1429, %v1435
    %v1442 = vadd.f32 %v1430, %v1435
    %s1443 = scalar_lea.vmem %s5, 32
    %v1444 = vld [vmem:[%s1443] sm:$0xff]
    %v1445 = vld [vmem:[%s1443 + $0x8] sm:$0xff]
    %v1446 = vld [vmem:[%s1443 + $0x10] sm:$0xff]
    %v1447 = vld [vmem:[%s1443 + $0x18] sm:$0xff]
    %s1448 = scalar_lea.vmem [#allocation11], 1
    %v1449 = vld [vmem:[%s1448] sm:$0x1]
    %v1451 = vlaneseq
    %v1452 = vshrl.u32 %v1451, 7
    %v1453 = vsub.s32 0, %v1452
    %v1454 = vrot.slane %v1449, %v1453
    %v1457 = vsel %vm328, %v1437, 0
    %v1460 = vsel %vm328, %v1438, 0
    %v1463 = vsel %vm328, %v1439, 0
    %v1466 = vsel %vm328, %v1440, 0
    %v1469 = vsel %vm328, %v1441, 0
    %v1472 = vsel %vm328, %v1442, 0
    %1474 = vmatprep.subr.mxu0 0.0
    %1475 = vmatpush1.msra.mxu0 %v1444
    %1476 = vmatprep.subr.mxu0 0.0
    %1477 = vmatpush1.msra.mxu0 %v1445
    %1478 = vmatprep.subr.mxu0 0.0
    %1479 = vmatpush1.msra.mxu0 %v1446
    %1480 = vmatprep.subr.mxu0 0.0
    %1481 = vmatpush1.msra.mxu0 %v1447
    %1482 = vmatprep.subr.mxu0 0.0
    %1483 = vmatpush1.msra.mxu0 0.0
    %1484 = vmatprep.subr.mxu0 0.0
    %1485 = vmatpush1.msra.mxu0 0.0
    %1486 = vmatprep.subr.mxu0 0.0
    %1487 = vmatpush1.msra.mxu0 0.0
    %1488 = vmatprep.subr.mxu0 0.0
    %1489 = vmatpush1.msra.mxu0 0.0
    %1490 = vmatprep.subr.mxu0 0.0
    %1491 = vmatpush1.msra.mxu0 0.0
    %1492 = vmatprep.subr.mxu0 0.0
    %1493 = vmatpush1.msra.mxu0 0.0
    %1494 = vmatprep.subr.mxu0 0.0
    %1495 = vmatpush1.msra.mxu0 0.0
    %1496 = vmatprep.subr.mxu0 0.0
    %1497 = vmatpush1.msra.mxu0 0.0
    %1498 = vmatprep.subr.mxu0 0.0
    %1499 = vmatpush1.msra.mxu0 0.0
    %1500 = vmatprep.subr.mxu0 0.0
    %1501 = vmatpush1.msra.mxu0 0.0
    %1502 = vmatprep.subr.mxu0 0.0
    %1503 = vmatpush1.msra.mxu0 0.0
    %1504 = vmatprep.subr.mxu0 0.0
    %1505 = vmatpush1.msra.mxu0 0.0
    %1506 = vmatprep.subr.mxu0 0.0
    %1507 = vmatpush1.msra.mxu0 0.0
    %1508 = vmatprep.subr.mxu0 0.0
    %1509 = vmatpush1.msra.mxu0 0.0
    %1510 = vmatprep.subr.mxu0 0.0
    %1511 = vmatpush1.msra.mxu0 0.0
    %1512 = vmatprep.subr.mxu0 0.0
    %1513 = vmatpush1.msra.mxu0 0.0
    %1514 = vmatprep.subr.mxu0 0.0
    %1515 = vmatpush1.msra.mxu0 0.0
    %1516 = vmatprep.subr.mxu0 0.0
    %1517 = vmatpush1.msra.mxu0 0.0
    %1518 = vmatprep.subr.mxu0 0.0
    %1519 = vmatpush1.msra.mxu0 0.0
    %1520 = vmatprep.subr.mxu0 0.0
    %1521 = vmatpush1.msra.mxu0 0.0
    %1522 = vmatprep.subr.mxu0 0.0
    %1523 = vmatpush1.msra.mxu0 0.0
    %1524 = vmatprep.subr.mxu0 0.0
    %1525 = vmatpush1.msra.mxu0 0.0
    %1526 = vmatprep.subr.mxu0 0.0
    %1527 = vmatpush1.msra.mxu0 0.0
    %1528 = vmatprep.subr.mxu0 0.0
    %1529 = vmatpush1.msra.mxu0 0.0
    %1530 = vmatprep.subr.mxu0 0.0
    %1531 = vmatpush1.msra.mxu0 0.0
    %1532 = vmatprep.subr.mxu0 0.0
    %1533 = vmatpush1.msra.mxu0 0.0
    %1534 = vmatprep.subr.mxu0 0.0
    %1535 = vmatpush1.msra.mxu0 0.0
    %1536 = vmatprep.subr.mxu0 0.0
    %1537 = vmatpush1.msra.mxu0 0.0
    %1538 = vmatprep.mubr.f32.mxu0 0.0
    %1539 = vmatmul.mubr.f32.gmra.mrb[0].mxu0 %v1457
    %v1540 = vpop.f32.mrb[0].mxu0
    %v1541 = vadd.f32 %v1454, %v1540
    %v1542 = vpop.f32.mrb[0].mxu0
    %1543 = vmatprep.mubr.f32.mxu0 0.0
    %1544 = vmatmul.mubr.f32.gmra.mrb[0].mxu0 %v1460
    %v1545 = vpop.f32.mrb[0].mxu0
    %v1546 = vadd.f32 %v1454, %v1545
    %v1547 = vpop.f32.mrb[0].mxu0
    %1548 = vmatprep.mubr.f32.mxu0 0.0
    %1549 = vmatmul.mubr.f32.gmra.mrb[0].mxu0 %v1463
    %v1550 = vpop.f32.mrb[0].mxu0
    %v1551 = vadd.f32 %v1454, %v1550
    %v1552 = vpop.f32.mrb[0].mxu0
    %1553 = vmatprep.mubr.f32.mxu0 0.0
    %1554 = vmatmul.mubr.f32.gmra.mrb[0].mxu0 %v1466
    %v1555 = vpop.f32.mrb[0].mxu0
    %v1556 = vadd.f32 %v1454, %v1555
    %v1557 = vpop.f32.mrb[0].mxu0
    %1558 = vmatprep.mubr.f32.mxu0 0.0
    %1559 = vmatmul.mubr.f32.gmra.mrb[0].mxu0 %v1469
    %v1560 = vpop.f32.mrb[0].mxu0
    %v1561 = vadd.f32 %v1454, %v1560
    %v1562 = vpop.f32.mrb[0].mxu0
    %1563 = vmatprep.mubr.f32.mxu0 0.0
    %1564 = vmatmul.mubr.f32.gmra.mrb[0].mxu0 %v1472
    %v1565 = vpop.f32.mrb[0].mxu0
    %v1566 = vadd.f32 %v1454, %v1565
    %v1567 = vpop.f32.mrb[0].mxu0
    %1568 = vdwg.mxu0
    %s1569 = scalar_lea.vmem %s7, 32
    %v1570 = vld [vmem:[%s1569] sm:$0xff]
    %v1571 = vld [vmem:[%s1569 + $0x8] sm:$0xff]
    %v1572 = vld [vmem:[%s1569 + $0x10] sm:$0xff]
    %v1573 = vld [vmem:[%s1569 + $0x18] sm:$0xff]
    %s1574 = scalar_lea.vmem [#allocation13], 1
    %v1575 = vld [vmem:[%s1574] sm:$0x1]
    %v1577 = vlaneseq
    %v1578 = vshrl.u32 %v1577, 7
    %v1579 = vsub.s32 0, %v1578
    %v1580 = vrot.slane %v1575, %v1579
    %1582 = vmatprep.subr.mxu0 0.0
    %1583 = vmatpush1.msra.mxu0 %v1570
    %1584 = vmatprep.subr.mxu0 0.0
    %1585 = vmatpush1.msra.mxu0 %v1571
    %1586 = vmatprep.subr.mxu0 0.0
    %1587 = vmatpush1.msra.mxu0 %v1572
    %1588 = vmatprep.subr.mxu0 0.0
    %1589 = vmatpush1.msra.mxu0 %v1573
    %1590 = vmatprep.subr.mxu0 0.0
    %1591 = vmatpush1.msra.mxu0 0.0
    %1592 = vmatprep.subr.mxu0 0.0
    %1593 = vmatpush1.msra.mxu0 0.0
    %1594 = vmatprep.subr.mxu0 0.0
    %1595 = vmatpush1.msra.mxu0 0.0
    %1596 = vmatprep.subr.mxu0 0.0
    %1597 = vmatpush1.msra.mxu0 0.0
    %1598 = vmatprep.subr.mxu0 0.0
    %1599 = vmatpush1.msra.mxu0 0.0
    %1600 = vmatprep.subr.mxu0 0.0
    %1601 = vmatpush1.msra.mxu0 0.0
    %1602 = vmatprep.subr.mxu0 0.0
    %1603 = vmatpush1.msra.mxu0 0.0
    %1604 = vmatprep.subr.mxu0 0.0
    %1605 = vmatpush1.msra.mxu0 0.0
    %1606 = vmatprep.subr.mxu0 0.0
    %1607 = vmatpush1.msra.mxu0 0.0
    %1608 = vmatprep.subr.mxu0 0.0
    %1609 = vmatpush1.msra.mxu0 0.0
    %1610 = vmatprep.subr.mxu0 0.0
    %1611 = vmatpush1.msra.mxu0 0.0
    %1612 = vmatprep.subr.mxu0 0.0
    %1613 = vmatpush1.msra.mxu0 0.0
    %1614 = vmatprep.subr.mxu0 0.0
    %1615 = vmatpush1.msra.mxu0 0.0
    %1616 = vmatprep.subr.mxu0 0.0
    %1617 = vmatpush1.msra.mxu0 0.0
    %1618 = vmatprep.subr.mxu0 0.0
    %1619 = vmatpush1.msra.mxu0 0.0
    %1620 = vmatprep.subr.mxu0 0.0
    %1621 = vmatpush1.msra.mxu0 0.0
    %1622 = vmatprep.subr.mxu0 0.0
    %1623 = vmatpush1.msra.mxu0 0.0
    %1624 = vmatprep.subr.mxu0 0.0
    %1625 = vmatpush1.msra.mxu0 0.0
    %1626 = vmatprep.subr.mxu0 0.0
    %1627 = vmatpush1.msra.mxu0 0.0
    %1628 = vmatprep.subr.mxu0 0.0
    %1629 = vmatpush1.msra.mxu0 0.0
    %1630 = vmatprep.subr.mxu0 0.0
    %1631 = vmatpush1.msra.mxu0 0.0
    %1632 = vmatprep.subr.mxu0 0.0
    %1633 = vmatpush1.msra.mxu0 0.0
    %1634 = vmatprep.subr.mxu0 0.0
    %1635 = vmatpush1.msra.mxu0 0.0
    %1636 = vmatprep.subr.mxu0 0.0
    %1637 = vmatpush1.msra.mxu0 0.0
    %1638 = vmatprep.subr.mxu0 0.0
    %1639 = vmatpush1.msra.mxu0 0.0
    %1640 = vmatprep.subr.mxu0 0.0
    %1641 = vmatpush1.msra.mxu0 0.0
    %1642 = vmatprep.subr.mxu0 0.0
    %1643 = vmatpush1.msra.mxu0 0.0
    %1644 = vmatprep.subr.mxu0 0.0
    %1645 = vmatpush1.msra.mxu0 0.0
    %1646 = vmatprep.mubr.f32.mxu0 0.0
    %1647 = vmatmul.mubr.f32.gmra.mrb[0].mxu0 %v1457
    %v1648 = vpop.f32.mrb[0].mxu0
    %v1649 = vadd.f32 %v1580, %v1648
    %v1650 = vpop.f32.mrb[0].mxu0
    %1651 = vmatprep.mubr.f32.mxu0 0.0
    %1652 = vmatmul.mubr.f32.gmra.mrb[0].mxu0 %v1460
    %v1653 = vpop.f32.mrb[0].mxu0
    %v1654 = vadd.f32 %v1580, %v1653
    %v1655 = vpop.f32.mrb[0].mxu0
    %1656 = vmatprep.mubr.f32.mxu0 0.0
    %1657 = vmatmul.mubr.f32.gmra.mrb[0].mxu0 %v1463
    %v1658 = vpop.f32.mrb[0].mxu0
    %v1659 = vadd.f32 %v1580, %v1658
    %v1660 = vpop.f32.mrb[0].mxu0
    %1661 = vmatprep.mubr.f32.mxu0 0.0
    %1662 = vmatmul.mubr.f32.gmra.mrb[0].mxu0 %v1466
    %v1663 = vpop.f32.mrb[0].mxu0
    %v1664 = vadd.f32 %v1580, %v1663
    %v1665 = vpop.f32.mrb[0].mxu0
    %1666 = vmatprep.mubr.f32.mxu0 0.0
    %1667 = vmatmul.mubr.f32.gmra.mrb[0].mxu0 %v1469
    %v1668 = vpop.f32.mrb[0].mxu0
    %v1669 = vadd.f32 %v1580, %v1668
    %v1670 = vpop.f32.mrb[0].mxu0
    %1671 = vmatprep.mubr.f32.mxu0 0.0
    %1672 = vmatmul.mubr.f32.gmra.mrb[0].mxu0 %v1472
    %v1673 = vpop.f32.mrb[0].mxu0
    %v1674 = vadd.f32 %v1580, %v1673
    %v1675 = vpop.f32.mrb[0].mxu0
    %1676 = vdwg.mxu0
    %s1677 = scalar_lea.vmem %s9, 32
    %v1678 = vld [vmem:[%s1677] sm:$0xff]
    %v1679 = vld [vmem:[%s1677 + $0x8] sm:$0xff]
    %v1680 = vld [vmem:[%s1677 + $0x10] sm:$0xff]
    %v1681 = vld [vmem:[%s1677 + $0x18] sm:$0xff]
    %s1682 = scalar_lea.vmem [#allocation14], 1
    %v1683 = vld [vmem:[%s1682] sm:$0x1]
    %v1685 = vlaneseq
    %v1686 = vshrl.u32 %v1685, 7
    %v1687 = vsub.s32 0, %v1686
    %v1688 = vrot.slane %v1683, %v1687
    %1690 = vmatprep.subr.mxu0 0.0
    %1691 = vmatpush1.msra.mxu0 %v1678
    %1692 = vmatprep.subr.mxu0 0.0
    %1693 = vmatpush1.msra.mxu0 %v1679
    %1694 = vmatprep.subr.mxu0 0.0
    %1695 = vmatpush1.msra.mxu0 %v1680
    %1696 = vmatprep.subr.mxu0 0.0
    %1697 = vmatpush1.msra.mxu0 %v1681
    %1698 = vmatprep.subr.mxu0 0.0
    %1699 = vmatpush1.msra.mxu0 0.0
    %1700 = vmatprep.subr.mxu0 0.0
    %1701 = vmatpush1.msra.mxu0 0.0
    %1702 = vmatprep.subr.mxu0 0.0
    %1703 = vmatpush1.msra.mxu0 0.0
    %1704 = vmatprep.subr.mxu0 0.0
    %1705 = vmatpush1.msra.mxu0 0.0
    %1706 = vmatprep.subr.mxu0 0.0
    %1707 = vmatpush1.msra.mxu0 0.0
    %1708 = vmatprep.subr.mxu0 0.0
    %1709 = vmatpush1.msra.mxu0 0.0
    %1710 = vmatprep.subr.mxu0 0.0
    %1711 = vmatpush1.msra.mxu0 0.0
    %1712 = vmatprep.subr.mxu0 0.0
    %1713 = vmatpush1.msra.mxu0 0.0
    %1714 = vmatprep.subr.mxu0 0.0
    %1715 = vmatpush1.msra.mxu0 0.0
    %1716 = vmatprep.subr.mxu0 0.0
    %1717 = vmatpush1.msra.mxu0 0.0
    %1718 = vmatprep.subr.mxu0 0.0
    %1719 = vmatpush1.msra.mxu0 0.0
    %1720 = vmatprep.subr.mxu0 0.0
    %1721 = vmatpush1.msra.mxu0 0.0
    %1722 = vmatprep.subr.mxu0 0.0
    %1723 = vmatpush1.msra.mxu0 0.0
    %1724 = vmatprep.subr.mxu0 0.0
    %1725 = vmatpush1.msra.mxu0 0.0
    %1726 = vmatprep.subr.mxu0 0.0
    %1727 = vmatpush1.msra.mxu0 0.0
    %1728 = vmatprep.subr.mxu0 0.0
    %1729 = vmatpush1.msra.mxu0 0.0
    %1730 = vmatprep.subr.mxu0 0.0
    %1731 = vmatpush1.msra.mxu0 0.0
    %1732 = vmatprep.subr.mxu0 0.0
    %1733 = vmatpush1.msra.mxu0 0.0
    %1734 = vmatprep.subr.mxu0 0.0
    %1735 = vmatpush1.msra.mxu0 0.0
    %1736 = vmatprep.subr.mxu0 0.0
    %1737 = vmatpush1.msra.mxu0 0.0
    %1738 = vmatprep.subr.mxu0 0.0
    %1739 = vmatpush1.msra.mxu0 0.0
    %1740 = vmatprep.subr.mxu0 0.0
    %1741 = vmatpush1.msra.mxu0 0.0
    %1742 = vmatprep.subr.mxu0 0.0
    %1743 = vmatpush1.msra.mxu0 0.0
    %1744 = vmatprep.subr.mxu0 0.0
    %1745 = vmatpush1.msra.mxu0 0.0
    %1746 = vmatprep.subr.mxu0 0.0
    %1747 = vmatpush1.msra.mxu0 0.0
    %1748 = vmatprep.subr.mxu0 0.0
    %1749 = vmatpush1.msra.mxu0 0.0
    %1750 = vmatprep.subr.mxu0 0.0
    %1751 = vmatpush1.msra.mxu0 0.0
    %1752 = vmatprep.subr.mxu0 0.0
    %1753 = vmatpush1.msra.mxu0 0.0
    %1754 = vmatprep.mubr.f32.mxu0 0.0
    %1755 = vmatmul.mubr.f32.gmra.mrb[0].mxu0 %v1457
    %v1756 = vpop.f32.mrb[0].mxu0
    %v1757 = vadd.f32 %v1688, %v1756
    %v1758 = vpop.f32.mrb[0].mxu0
    %1759 = vmatprep.mubr.f32.mxu0 0.0
    %1760 = vmatmul.mubr.f32.gmra.mrb[0].mxu0 %v1460
    %v1761 = vpop.f32.mrb[0].mxu0
    %v1762 = vadd.f32 %v1688, %v1761
    %v1763 = vpop.f32.mrb[0].mxu0
    %1764 = vmatprep.mubr.f32.mxu0 0.0
    %1765 = vmatmul.mubr.f32.gmra.mrb[0].mxu0 %v1463
    %v1766 = vpop.f32.mrb[0].mxu0
    %v1767 = vadd.f32 %v1688, %v1766
    %v1768 = vpop.f32.mrb[0].mxu0
    %1769 = vmatprep.mubr.f32.mxu0 0.0
    %1770 = vmatmul.mubr.f32.gmra.mrb[0].mxu0 %v1466
    %v1771 = vpop.f32.mrb[0].mxu0
    %v1772 = vadd.f32 %v1688, %v1771
    %v1773 = vpop.f32.mrb[0].mxu0
    %1774 = vmatprep.mubr.f32.mxu0 0.0
    %1775 = vmatmul.mubr.f32.gmra.mrb[0].mxu0 %v1469
    %v1776 = vpop.f32.mrb[0].mxu0
    %v1777 = vadd.f32 %v1688, %v1776
    %v1778 = vpop.f32.mrb[0].mxu0
    %1779 = vmatprep.mubr.f32.mxu0 0.0
    %1780 = vmatmul.mubr.f32.gmra.mrb[0].mxu0 %v1472
    %v1781 = vpop.f32.mrb[0].mxu0
    %v1782 = vadd.f32 %v1688, %v1781
    %v1783 = vpop.f32.mrb[0].mxu0
    %1784 = vdwg.mxu0
    %v1785 = vsub.f32 %v1649, %v1664
    %v1786 = vsub.f32 %v1654, %v1669
    %v1787 = vsub.f32 %v1659, %v1674
    %v1788 = vsub.f32 %v1664, %v1649
    %v1789 = vsub.f32 %v1669, %v1654
    %v1790 = vsub.f32 %v1674, %v1659
    %v1791 = vmul.f32 %v1541, %v1785
    %v1792 = vmul.f32 %v1546, %v1786
    %v1793 = vmul.f32 %v1551, %v1787
    %v1794 = vmul.f32 %v1556, %v1788
    %v1795 = vmul.f32 %v1561, %v1789
    %v1796 = vmul.f32 %v1566, %v1790
    %v1798 = vsel %vm328, %v1791, 0
    %v1801 = vsel %vm328, %v1792, 0
    %v1804 = vsel %vm328, %v1793, 0
    %v1807 = vsel %vm328, %v1794, 0
    %v1810 = vsel %vm328, %v1795, 0
    %v1813 = vsel %vm328, %v1796, 0
    %1815 = vmatprep.subr.mxu0 0.0
    %1816 = vmatpush1.msra.mxu0 %v313
    %1817 = vmatprep.subr.mxu0 0.0
    %1818 = vmatpush1.msra.mxu0 %v314
    %1819 = vmatprep.subr.mxu0 0.0
    %1820 = vmatpush1.msra.mxu0 %v315
    %1821 = vmatprep.subr.mxu0 0.0
    %1822 = vmatpush1.msra.mxu0 %v316
    %1823 = vmatprep.subr.mxu0 0.0
    %1824 = vmatpush1.msra.mxu0 0.0
    %1825 = vmatprep.subr.mxu0 0.0
    %1826 = vmatpush1.msra.mxu0 0.0
    %1827 = vmatprep.subr.mxu0 0.0
    %1828 = vmatpush1.msra.mxu0 0.0
    %1829 = vmatprep.subr.mxu0 0.0
    %1830 = vmatpush1.msra.mxu0 0.0
    %1831 = vmatprep.subr.mxu0 0.0
    %1832 = vmatpush1.msra.mxu0 0.0
    %1833 = vmatprep.subr.mxu0 0.0
    %1834 = vmatpush1.msra.mxu0 0.0
    %1835 = vmatprep.subr.mxu0 0.0
    %1836 = vmatpush1.msra.mxu0 0.0
    %1837 = vmatprep.subr.mxu0 0.0
    %1838 = vmatpush1.msra.mxu0 0.0
    %1839 = vmatprep.subr.mxu0 0.0
    %1840 = vmatpush1.msra.mxu0 0.0
    %1841 = vmatprep.subr.mxu0 0.0
    %1842 = vmatpush1.msra.mxu0 0.0
    %1843 = vmatprep.subr.mxu0 0.0
    %1844 = vmatpush1.msra.mxu0 0.0
    %1845 = vmatprep.subr.mxu0 0.0
    %1846 = vmatpush1.msra.mxu0 0.0
    %1847 = vmatprep.subr.mxu0 0.0
    %1848 = vmatpush1.msra.mxu0 0.0
    %1849 = vmatprep.subr.mxu0 0.0
    %1850 = vmatpush1.msra.mxu0 0.0
    %1851 = vmatprep.subr.mxu0 0.0
    %1852 = vmatpush1.msra.mxu0 0.0
    %1853 = vmatprep.subr.mxu0 0.0
    %1854 = vmatpush1.msra.mxu0 0.0
    %1855 = vmatprep.subr.mxu0 0.0
    %1856 = vmatpush1.msra.mxu0 0.0
    %1857 = vmatprep.subr.mxu0 0.0
    %1858 = vmatpush1.msra.mxu0 0.0
    %1859 = vmatprep.subr.mxu0 0.0
    %1860 = vmatpush1.msra.mxu0 0.0
    %1861 = vmatprep.subr.mxu0 0.0
    %1862 = vmatpush1.msra.mxu0 0.0
    %1863 = vmatprep.subr.mxu0 0.0
    %1864 = vmatpush1.msra.mxu0 0.0
    %1865 = vmatprep.subr.mxu0 0.0
    %1866 = vmatpush1.msra.mxu0 0.0
    %1867 = vmatprep.subr.mxu0 0.0
    %1868 = vmatpush1.msra.mxu0 0.0
    %1869 = vmatprep.subr.mxu0 0.0
    %1870 = vmatpush1.msra.mxu0 0.0
    %1871 = vmatprep.subr.mxu0 0.0
    %1872 = vmatpush1.msra.mxu0 0.0
    %1873 = vmatprep.subr.mxu0 0.0
    %1874 = vmatpush1.msra.mxu0 0.0
    %1875 = vmatprep.subr.mxu0 0.0
    %1876 = vmatpush1.msra.mxu0 0.0
    %1877 = vmatprep.subr.mxu0 0.0
    %1878 = vmatpush1.msra.mxu0 0.0
    %1879 = vmatprep.mubr.f32.mxu0 0.0
    %1880 = vmatmul.mubr.f32.gmra.mrb[0].mxu0 %v1798
    %v1881 = vpop.f32.mrb[0].mxu0
    %v1882 = vadd.f32 0.0, %v1881
    %v1883 = vpop.f32.mrb[0].mxu0
    %1884 = vmatprep.mubr.f32.mxu0 0.0
    %1885 = vmatmul.mubr.f32.gmra.mrb[0].mxu0 %v1801
    %v1886 = vpop.f32.mrb[0].mxu0
    %v1887 = vadd.f32 0.0, %v1886
    %v1888 = vpop.f32.mrb[0].mxu0
    %1889 = vmatprep.mubr.f32.mxu0 0.0
    %1890 = vmatmul.mubr.f32.gmra.mrb[0].mxu0 %v1804
    %v1891 = vpop.f32.mrb[0].mxu0
    %v1892 = vadd.f32 0.0, %v1891
    %v1893 = vpop.f32.mrb[0].mxu0
    %1894 = vmatprep.mubr.f32.mxu0 0.0
    %1895 = vmatmul.mubr.f32.gmra.mrb[0].mxu0 %v1807
    %v1896 = vpop.f32.mrb[0].mxu0
    %v1897 = vadd.f32 0.0, %v1896
    %v1898 = vpop.f32.mrb[0].mxu0
    %1899 = vmatprep.mubr.f32.mxu0 0.0
    %1900 = vmatmul.mubr.f32.gmra.mrb[0].mxu0 %v1810
    %v1901 = vpop.f32.mrb[0].mxu0
    %v1902 = vadd.f32 0.0, %v1901
    %v1903 = vpop.f32.mrb[0].mxu0
    %1904 = vmatprep.mubr.f32.mxu0 0.0
    %1905 = vmatmul.mubr.f32.gmra.mrb[0].mxu0 %v1813
    %v1906 = vpop.f32.mrb[0].mxu0
    %v1907 = vadd.f32 0.0, %v1906
    %v1908 = vpop.f32.mrb[0].mxu0
    %1909 = vdwg.mxu0
    %v1910 = vmul.f32 %v1882, 0.35355338
    %v1911 = vmul.f32 %v1887, 0.35355338
    %v1912 = vmul.f32 %v1892, 0.35355338
    %v1913 = vmul.f32 %v1897, 0.35355338
    %v1914 = vmul.f32 %v1902, 0.35355338
    %v1915 = vmul.f32 %v1907, 0.35355338
    %v1916 = vxor.u32 %v1910, 2147483648
    %v1917 = vxor.u32 %v1911, 2147483648
    %v1918 = vxor.u32 %v1912, 2147483648
    %v1919 = vxor.u32 %v1913, 2147483648
    %v1920 = vxor.u32 %v1914, 2147483648
    %v1921 = vxor.u32 %v1915, 2147483648
    %v1922 = vmul.f32 %v1916, 1.442695
    %v1923 = vpow.pop %v1922
    %v1924 = vmul.f32 %v1917, 1.442695
    %v1925 = vpow.pop %v1924
    %v1926 = vmul.f32 %v1918, 1.442695
    %v1927 = vpow.pop %v1926
    %v1928 = vmul.f32 %v1919, 1.442695
    %v1929 = vpow.pop %v1928
    %v1930 = vmul.f32 %v1920, 1.442695
    %v1931 = vpow.pop %v1930
    %v1932 = vmul.f32 %v1921, 1.442695
    %v1933 = vpow.pop %v1932
    %v1934 = vadd.f32 %v1923, 1.0
    %v1935 = vadd.f32 %v1925, 1.0
    %v1936 = vadd.f32 %v1927, 1.0
    %v1937 = vadd.f32 %v1929, 1.0
    %v1938 = vadd.f32 %v1931, 1.0
    %v1939 = vadd.f32 %v1933, 1.0
    %v1940 = vrcp.pop %v1934
    %v1941 = vmul.f32 1.0, %v1940
    %v1942 = vrcp.pop %v1935
    %v1943 = vmul.f32 1.0, %v1942
    %v1944 = vrcp.pop %v1936
    %v1945 = vmul.f32 1.0, %v1944
    %v1946 = vrcp.pop %v1937
    %v1947 = vmul.f32 1.0, %v1946
    %v1948 = vrcp.pop %v1938
    %v1949 = vmul.f32 1.0, %v1948
    %v1950 = vrcp.pop %v1939
    %v1951 = vmul.f32 1.0, %v1950
    %v1952 = vsub.f32 %v1757, %v1772
    %v1953 = vsub.f32 %v1762, %v1777
    %v1954 = vsub.f32 %v1767, %v1782
    %v1955 = vsub.f32 %v1772, %v1757
    %v1956 = vsub.f32 %v1777, %v1762
    %v1957 = vsub.f32 %v1782, %v1767
    %v1958 = vmul.f32 %v1941, %v1952
    %v1959 = vmul.f32 %v1943, %v1953
    %v1960 = vmul.f32 %v1945, %v1954
    %v1961 = vmul.f32 %v1947, %v1955
    %v1962 = vmul.f32 %v1949, %v1956
    %v1963 = vmul.f32 %v1951, %v1957
    %v1964 = vadd.f32 %v1772, %v1958
    %v1965 = vadd.f32 %v1777, %v1959
    %v1966 = vadd.f32 %v1782, %v1960
    %v1967 = vadd.f32 %v1757, %v1961
    %v1968 = vadd.f32 %v1762, %v1962
    %v1969 = vadd.f32 %v1767, %v1963
    %s1970 = scalar_lea.vmem [#allocation16], 32
    %v1971 = vld [vmem:[%s1970] sm:$0xff]
    %v1972 = vld [vmem:[%s1970 + $0x8] sm:$0xff]
    %v1973 = vld [vmem:[%s1970 + $0x10] sm:$0xff]
    %v1974 = vld [vmem:[%s1970 + $0x18] sm:$0xff]
    %s1975 = scalar_lea.vmem [#allocation17], 1
    %v1976 = vld [vmem:[%s1975] sm:$0x1]
    %v1978 = vlaneseq
    %v1979 = vshrl.u32 %v1978, 7
    %v1980 = vsub.s32 0, %v1979
    %v1981 = vrot.slane %v1976, %v1980
    %v1984 = vsel %vm328, %v1964, 0
    %v1987 = vsel %vm328, %v1965, 0
    %v1990 = vsel %vm328, %v1966, 0
    %v1993 = vsel %vm328, %v1967, 0
    %v1996 = vsel %vm328, %v1968, 0
    %v1999 = vsel %vm328, %v1969, 0
    %2001 = vmatprep.subr.mxu0 0.0
    %2002 = vmatpush1.msra.mxu0 %v1971
    %2003 = vmatprep.subr.mxu0 0.0
    %2004 = vmatpush1.msra.mxu0 %v1972
    %2005 = vmatprep.subr.mxu0 0.0
    %2006 = vmatpush1.msra.mxu0 %v1973
    %2007 = vmatprep.subr.mxu0 0.0
    %2008 = vmatpush1.msra.mxu0 %v1974
    %2009 = vmatprep.subr.mxu0 0.0
    %2010 = vmatpush1.msra.mxu0 0.0
    %2011 = vmatprep.subr.mxu0 0.0
    %2012 = vmatpush1.msra.mxu0 0.0
    %2013 = vmatprep.subr.mxu0 0.0
    %2014 = vmatpush1.msra.mxu0 0.0
    %2015 = vmatprep.subr.mxu0 0.0
    %2016 = vmatpush1.msra.mxu0 0.0
    %2017 = vmatprep.subr.mxu0 0.0
    %2018 = vmatpush1.msra.mxu0 0.0
    %2019 = vmatprep.subr.mxu0 0.0
    %2020 = vmatpush1.msra.mxu0 0.0
    %2021 = vmatprep.subr.mxu0 0.0
    %2022 = vmatpush1.msra.mxu0 0.0
    %2023 = vmatprep.subr.mxu0 0.0
    %2024 = vmatpush1.msra.mxu0 0.0
    %2025 = vmatprep.subr.mxu0 0.0
    %2026 = vmatpush1.msra.mxu0 0.0
    %2027 = vmatprep.subr.mxu0 0.0
    %2028 = vmatpush1.msra.mxu0 0.0
    %2029 = vmatprep.subr.mxu0 0.0
    %2030 = vmatpush1.msra.mxu0 0.0
    %2031 = vmatprep.subr.mxu0 0.0
    %2032 = vmatpush1.msra.mxu0 0.0
    %2033 = vmatprep.subr.mxu0 0.0
    %2034 = vmatpush1.msra.mxu0 0.0
    %2035 = vmatprep.subr.mxu0 0.0
    %2036 = vmatpush1.msra.mxu0 0.0
    %2037 = vmatprep.subr.mxu0 0.0
    %2038 = vmatpush1.msra.mxu0 0.0
    %2039 = vmatprep.subr.mxu0 0.0
    %2040 = vmatpush1.msra.mxu0 0.0
    %2041 = vmatprep.subr.mxu0 0.0
    %2042 = vmatpush1.msra.mxu0 0.0
    %2043 = vmatprep.subr.mxu0 0.0
    %2044 = vmatpush1.msra.mxu0 0.0
    %2045 = vmatprep.subr.mxu0 0.0
    %2046 = vmatpush1.msra.mxu0 0.0
    %2047 = vmatprep.subr.mxu0 0.0
    %2048 = vmatpush1.msra.mxu0 0.0
    %2049 = vmatprep.subr.mxu0 0.0
    %2050 = vmatpush1.msra.mxu0 0.0
    %2051 = vmatprep.subr.mxu0 0.0
    %2052 = vmatpush1.msra.mxu0 0.0
    %2053 = vmatprep.subr.mxu0 0.0
    %2054 = vmatpush1.msra.mxu0 0.0
    %2055 = vmatprep.subr.mxu0 0.0
    %2056 = vmatpush1.msra.mxu0 0.0
    %2057 = vmatprep.subr.mxu0 0.0
    %2058 = vmatpush1.msra.mxu0 0.0
    %2059 = vmatprep.subr.mxu0 0.0
    %2060 = vmatpush1.msra.mxu0 0.0
    %2061 = vmatprep.subr.mxu0 0.0
    %2062 = vmatpush1.msra.mxu0 0.0
    %2063 = vmatprep.subr.mxu0 0.0
    %2064 = vmatpush1.msra.mxu0 0.0
    %2065 = vmatprep.mubr.f32.mxu0 0.0
    %2066 = vmatmul.mubr.f32.gmra.mrb[0].mxu0 %v1984
    %v2067 = vpop.f32.mrb[0].mxu0
    %v2068 = vadd.f32 %v1981, %v2067
    %v2069 = vpop.f32.mrb[0].mxu0
    %2070 = vmatprep.mubr.f32.mxu0 0.0
    %2071 = vmatmul.mubr.f32.gmra.mrb[0].mxu0 %v1987
    %v2072 = vpop.f32.mrb[0].mxu0
    %v2073 = vadd.f32 %v1981, %v2072
    %v2074 = vpop.f32.mrb[0].mxu0
    %2075 = vmatprep.mubr.f32.mxu0 0.0
    %2076 = vmatmul.mubr.f32.gmra.mrb[0].mxu0 %v1990
    %v2077 = vpop.f32.mrb[0].mxu0
    %v2078 = vadd.f32 %v1981, %v2077
    %v2079 = vpop.f32.mrb[0].mxu0
    %2080 = vmatprep.mubr.f32.mxu0 0.0
    %2081 = vmatmul.mubr.f32.gmra.mrb[0].mxu0 %v1993
    %v2082 = vpop.f32.mrb[0].mxu0
    %v2083 = vadd.f32 %v1981, %v2082
    %v2084 = vpop.f32.mrb[0].mxu0
    %2085 = vmatprep.mubr.f32.mxu0 0.0
    %2086 = vmatmul.mubr.f32.gmra.mrb[0].mxu0 %v1996
    %v2087 = vpop.f32.mrb[0].mxu0
    %v2088 = vadd.f32 %v1981, %v2087
    %v2089 = vpop.f32.mrb[0].mxu0
    %2090 = vmatprep.mubr.f32.mxu0 0.0
    %2091 = vmatmul.mubr.f32.gmra.mrb[0].mxu0 %v1999
    %v2092 = vpop.f32.mrb[0].mxu0
    %v2093 = vadd.f32 %v1981, %v2092
    %v2094 = vpop.f32.mrb[0].mxu0
    %2095 = vdwg.mxu0
    %v2096 = vadd.f32 %v1437, %v2068
    %v2097 = vadd.f32 %v1438, %v2073
    %v2098 = vadd.f32 %v1439, %v2078
    %v2099 = vadd.f32 %v1440, %v2083
    %v2100 = vadd.f32 %v1441, %v2088
    %v2101 = vadd.f32 %v1442, %v2093
    %s2102 = scalar_lea.vmem [#allocation19], 1
    %v2103 = vld [vmem:[%s2102] sm:$0x1]
    %s2104 = scalar_lea.vmem [#allocation20], 1
    %v2105 = vld [vmem:[%s2104] sm:$0x1]
    %v2106 = vsel %vm328, %v2096, 0.0
    %2107 = vadd.xlane.f32.xlu0 %v2106
    %v2108 = vpop.xlane.xlu0 %2107
    %v2109 = vsel %vm328, %v2097, 0.0
    %2110 = vadd.xlane.f32.xlu0 %v2109
    %v2111 = vpop.xlane.xlu0 %2110
    %v2112 = vsel %vm328, %v2098, 0.0
    %2113 = vadd.xlane.f32.xlu0 %v2112
    %v2114 = vpop.xlane.xlu0 %2113
    %v2115 = vsel %vm328, %v2099, 0.0
    %2116 = vadd.xlane.f32.xlu0 %v2115
    %v2117 = vpop.xlane.xlu0 %2116
    %v2118 = vsel %vm328, %v2100, 0.0
    %2119 = vadd.xlane.f32.xlu0 %v2118
    %v2120 = vpop.xlane.xlu0 %2119
    %v2121 = vsel %vm328, %v2101, 0.0
    %2122 = vadd.xlane.f32.xlu0 %v2121
    %v2123 = vpop.xlane.xlu0 %2122
    %v2124 = vmul.f32 %v2108, %v989
    %v2125 = vmul.f32 %v2111, %v989
    %v2126 = vmul.f32 %v2114, %v989
    %v2127 = vmul.f32 %v2117, %v989
    %v2128 = vmul.f32 %v2120, %v989
    %v2129 = vmul.f32 %v2123, %v989
    %v2130 = vsub.f32 %v2096, %v2124
    %v2131 = vsub.f32 %v2097, %v2125
    %v2132 = vsub.f32 %v2098, %v2126
    %v2133 = vsub.f32 %v2099, %v2127
    %v2134 = vsub.f32 %v2100, %v2128
    %v2135 = vsub.f32 %v2101, %v2129
    %v2136 = vmul.f32 %v2130, %v2130
    %v2137 = vmul.f32 %v2131, %v2131
    %v2138 = vmul.f32 %v2132, %v2132
    %v2139 = vmul.f32 %v2133, %v2133
    %v2140 = vmul.f32 %v2134, %v2134
    %v2141 = vmul.f32 %v2135, %v2135
    %v2142 = vsel %vm328, %v2136, 0.0
    %2143 = vadd.xlane.f32.xlu0 %v2142
    %v2144 = vpop.xlane.xlu0 %2143
    %v2145 = vsel %vm328, %v2137, 0.0
    %2146 = vadd.xlane.f32.xlu0 %v2145
    %v2147 = vpop.xlane.xlu0 %2146
    %v2148 = vsel %vm328, %v2138, 0.0
    %2149 = vadd.xlane.f32.xlu0 %v2148
    %v2150 = vpop.xlane.xlu0 %2149
    %v2151 = vsel %vm328, %v2139, 0.0
    %2152 = vadd.xlane.f32.xlu0 %v2151
    %v2153 = vpop.xlane.xlu0 %2152
    %v2154 = vsel %vm328, %v2140, 0.0
    %2155 = vadd.xlane.f32.xlu0 %v2154
    %v2156 = vpop.xlane.xlu0 %2155
    %v2157 = vsel %vm328, %v2141, 0.0
    %2158 = vadd.xlane.f32.xlu0 %v2157
    %v2159 = vpop.xlane.xlu0 %2158
    %v2160 = vmul.f32 %v2144, %v989
    %v2161 = vmul.f32 %v2147, %v989
    %v2162 = vmul.f32 %v2150, %v989
    %v2163 = vmul.f32 %v2153, %v989
    %v2164 = vmul.f32 %v2156, %v989
    %v2165 = vmul.f32 %v2159, %v989
    %v2166 = vadd.f32 %v2160, 1e-05
    %v2167 = vadd.f32 %v2161, 1e-05
    %v2168 = vadd.f32 %v2162, 1e-05
    %v2169 = vadd.f32 %v2163, 1e-05
    %v2170 = vadd.f32 %v2164, 1e-05
    %v2171 = vadd.f32 %v2165, 1e-05
    %v2172 = vrsqrt.pop %v2166
    %v2173 = vrsqrt.pop %v2167
    %v2174 = vrsqrt.pop %v2168
    %v2175 = vrsqrt.pop %v2169
    %v2176 = vrsqrt.pop %v2170
    %v2177 = vrsqrt.pop %v2171
    %v2178 = vmul.f32 %v2130, %v2172
    %v2179 = vmul.f32 %v2131, %v2173
    %v2180 = vmul.f32 %v2132, %v2174
    %v2181 = vmul.f32 %v2133, %v2175
    %v2182 = vmul.f32 %v2134, %v2176
    %v2183 = vmul.f32 %v2135, %v2177
    %v2185 = vlaneseq
    %v2186 = vshrl.u32 %v2185, 7
    %v2187 = vsub.s32 0, %v2186
    %v2188 = vrot.slane %v2103, %v2187
    %v2190 = vmul.f32 %v2178, %v2188
    %v2191 = vmul.f32 %v2179, %v2188
    %v2192 = vmul.f32 %v2180, %v2188
    %v2193 = vmul.f32 %v2181, %v2188
    %v2194 = vmul.f32 %v2182, %v2188
    %v2195 = vmul.f32 %v2183, %v2188
    %v2197 = vlaneseq
    %v2198 = vshrl.u32 %v2197, 7
    %v2199 = vsub.s32 0, %v2198
    %v2200 = vrot.slane %v2105, %v2199
    %v2202 = vadd.f32 %v2190, %v2200
    %v2203 = vadd.f32 %v2191, %v2200
    %v2204 = vadd.f32 %v2192, %v2200
    %v2205 = vadd.f32 %v2193, %v2200
    %v2206 = vadd.f32 %v2194, %v2200
    %v2207 = vadd.f32 %v2195, %v2200
    %s2208 = scalar_lea.vmem [#allocation22], 32
    %v2209 = vld [vmem:[%s2208] sm:$0xff]
    %v2210 = vld [vmem:[%s2208 + $0x8] sm:$0xff]
    %v2211 = vld [vmem:[%s2208 + $0x10] sm:$0xff]
    %v2212 = vld [vmem:[%s2208 + $0x18] sm:$0xff]
    %s2213 = scalar_lea.vmem [#allocation23], 1
    %v2214 = vld [vmem:[%s2213] sm:$0x1]
    %v2216 = vlaneseq
    %v2217 = vshrl.u32 %v2216, 7
    %v2218 = vsub.s32 0, %v2217
    %v2219 = vrot.slane %v2214, %v2218
    %v2222 = vsel %vm328, %v2202, 0
    %v2225 = vsel %vm328, %v2203, 0
    %v2228 = vsel %vm328, %v2204, 0
    %v2231 = vsel %vm328, %v2205, 0
    %v2234 = vsel %vm328, %v2206, 0
    %v2237 = vsel %vm328, %v2207, 0
    %2239 = vmatprep.subr.mxu0 0.0
    %2240 = vmatpush1.msra.mxu0 %v2209
    %2241 = vmatprep.subr.mxu0 0.0
    %2242 = vmatpush1.msra.mxu0 %v2210
    %2243 = vmatprep.subr.mxu0 0.0
    %2244 = vmatpush1.msra.mxu0 %v2211
    %2245 = vmatprep.subr.mxu0 0.0
    %2246 = vmatpush1.msra.mxu0 %v2212
    %2247 = vmatprep.subr.mxu0 0.0
    %2248 = vmatpush1.msra.mxu0 0.0
    %2249 = vmatprep.subr.mxu0 0.0
    %2250 = vmatpush1.msra.mxu0 0.0
    %2251 = vmatprep.subr.mxu0 0.0
    %2252 = vmatpush1.msra.mxu0 0.0
    %2253 = vmatprep.subr.mxu0 0.0
    %2254 = vmatpush1.msra.mxu0 0.0
    %2255 = vmatprep.subr.mxu0 0.0
    %2256 = vmatpush1.msra.mxu0 0.0
    %2257 = vmatprep.subr.mxu0 0.0
    %2258 = vmatpush1.msra.mxu0 0.0
    %2259 = vmatprep.subr.mxu0 0.0
    %2260 = vmatpush1.msra.mxu0 0.0
    %2261 = vmatprep.subr.mxu0 0.0
    %2262 = vmatpush1.msra.mxu0 0.0
    %2263 = vmatprep.subr.mxu0 0.0
    %2264 = vmatpush1.msra.mxu0 0.0
    %2265 = vmatprep.subr.mxu0 0.0
    %2266 = vmatpush1.msra.mxu0 0.0
    %2267 = vmatprep.subr.mxu0 0.0
    %2268 = vmatpush1.msra.mxu0 0.0
    %2269 = vmatprep.subr.mxu0 0.0
    %2270 = vmatpush1.msra.mxu0 0.0
    %2271 = vmatprep.subr.mxu0 0.0
    %2272 = vmatpush1.msra.mxu0 0.0
    %2273 = vmatprep.subr.mxu0 0.0
    %2274 = vmatpush1.msra.mxu0 0.0
    %2275 = vmatprep.subr.mxu0 0.0
    %2276 = vmatpush1.msra.mxu0 0.0
    %2277 = vmatprep.subr.mxu0 0.0
    %2278 = vmatpush1.msra.mxu0 0.0
    %2279 = vmatprep.subr.mxu0 0.0
    %2280 = vmatpush1.msra.mxu0 0.0
    %2281 = vmatprep.subr.mxu0 0.0
    %2282 = vmatpush1.msra.mxu0 0.0
    %2283 = vmatprep.subr.mxu0 0.0
    %2284 = vmatpush1.msra.mxu0 0.0
    %2285 = vmatprep.subr.mxu0 0.0
    %2286 = vmatpush1.msra.mxu0 0.0
    %2287 = vmatprep.subr.mxu0 0.0
    %2288 = vmatpush1.msra.mxu0 0.0
    %2289 = vmatprep.subr.mxu0 0.0
    %2290 = vmatpush1.msra.mxu0 0.0
    %2291 = vmatprep.subr.mxu0 0.0
    %2292 = vmatpush1.msra.mxu0 0.0
    %2293 = vmatprep.subr.mxu0 0.0
    %2294 = vmatpush1.msra.mxu0 0.0
    %2295 = vmatprep.subr.mxu0 0.0
    %2296 = vmatpush1.msra.mxu0 0.0
    %2297 = vmatprep.subr.mxu0 0.0
    %2298 = vmatpush1.msra.mxu0 0.0
    %2299 = vmatprep.subr.mxu0 0.0
    %2300 = vmatpush1.msra.mxu0 0.0
    %2301 = vmatprep.subr.mxu0 0.0
    %2302 = vmatpush1.msra.mxu0 0.0
    %2303 = vmatprep.mubr.f32.mxu0 0.0
    %2304 = vmatmul.mubr.f32.gmra.mrb[0].mxu0 %v2222
    %v2305 = vpop.f32.mrb[0].mxu0
    %v2306 = vadd.f32 %v2219, %v2305
    %v2307 = vpop.f32.mrb[0].mxu0
    %2308 = vmatprep.mubr.f32.mxu0 0.0
    %2309 = vmatmul.mubr.f32.gmra.mrb[0].mxu0 %v2225
    %v2310 = vpop.f32.mrb[0].mxu0
    %v2311 = vadd.f32 %v2219, %v2310
    %v2312 = vpop.f32.mrb[0].mxu0
    %2313 = vmatprep.mubr.f32.mxu0 0.0
    %2314 = vmatmul.mubr.f32.gmra.mrb[0].mxu0 %v2228
    %v2315 = vpop.f32.mrb[0].mxu0
    %v2316 = vadd.f32 %v2219, %v2315
    %v2317 = vpop.f32.mrb[0].mxu0
    %2318 = vmatprep.mubr.f32.mxu0 0.0
    %2319 = vmatmul.mubr.f32.gmra.mrb[0].mxu0 %v2231
    %v2320 = vpop.f32.mrb[0].mxu0
    %v2321 = vadd.f32 %v2219, %v2320
    %v2322 = vpop.f32.mrb[0].mxu0
    %2323 = vmatprep.mubr.f32.mxu0 0.0
    %2324 = vmatmul.mubr.f32.gmra.mrb[0].mxu0 %v2234
    %v2325 = vpop.f32.mrb[0].mxu0
    %v2326 = vadd.f32 %v2219, %v2325
    %v2327 = vpop.f32.mrb[0].mxu0
    %2328 = vmatprep.mubr.f32.mxu0 0.0
    %2329 = vmatmul.mubr.f32.gmra.mrb[0].mxu0 %v2237
    %v2330 = vpop.f32.mrb[0].mxu0
    %v2331 = vadd.f32 %v2219, %v2330
    %v2332 = vpop.f32.mrb[0].mxu0
    %2333 = vdwg.mxu0
    %v2334 = vmax.f32 %v2306, 0.0
    %v2335 = vmax.f32 %v2311, 0.0
    %v2336 = vmax.f32 %v2316, 0.0
    %v2337 = vmax.f32 %v2321, 0.0
    %v2338 = vmax.f32 %v2326, 0.0
    %v2339 = vmax.f32 %v2331, 0.0
    %s2340 = scalar_lea.vmem %s17, 64
    %v2341 = vld [vmem:[%s2340] sm:$0xff]
    %v2342 = vld [vmem:[%s2340 + $0x8] sm:$0xff]
    %v2343 = vld [vmem:[%s2340 + $0x10] sm:$0xff]
    %v2344 = vld [vmem:[%s2340 + $0x18] sm:$0xff]
    %v2345 = vld [vmem:[%s2340 + $0x20] sm:$0xff]
    %v2346 = vld [vmem:[%s2340 + $0x28] sm:$0xff]
    %v2347 = vld [vmem:[%s2340 + $0x30] sm:$0xff]
    %v2348 = vld [vmem:[%s2340 + $0x38] sm:$0xff]
    %s2349 = scalar_lea.vmem %s18, 1
    %v2350 = vld [vmem:[%s2349] sm:$0x1]
    %v2352 = vlaneseq
    %v2353 = vshrl.u32 %v2352, 7
    %v2354 = vsub.s32 0, %v2353
    %v2355 = vrot.slane %v2350, %v2354
    %v2358 = vsel %vm1219, %v2334, 0
    %v2361 = vsel %vm1219, %v2335, 0
    %v2364 = vsel %vm1219, %v2336, 0
    %v2367 = vsel %vm1219, %v2337, 0
    %v2370 = vsel %vm1219, %v2338, 0
    %v2373 = vsel %vm1219, %v2339, 0
    %2375 = vmatprep.subr.mxu0 0.0
    %2376 = vmatpush1.msra.mxu0 %v2341
    %2377 = vmatprep.subr.mxu0 0.0
    %2378 = vmatpush1.msra.mxu0 %v2342
    %2379 = vmatprep.subr.mxu0 0.0
    %2380 = vmatpush1.msra.mxu0 %v2343
    %2381 = vmatprep.subr.mxu0 0.0
    %2382 = vmatpush1.msra.mxu0 %v2344
    %2383 = vmatprep.subr.mxu0 0.0
    %2384 = vmatpush1.msra.mxu0 %v2345
    %2385 = vmatprep.subr.mxu0 0.0
    %2386 = vmatpush1.msra.mxu0 %v2346
    %2387 = vmatprep.subr.mxu0 0.0
    %2388 = vmatpush1.msra.mxu0 %v2347
    %2389 = vmatprep.subr.mxu0 0.0
    %2390 = vmatpush1.msra.mxu0 %v2348
    %2391 = vmatprep.subr.mxu0 0.0
    %2392 = vmatpush1.msra.mxu0 0.0
    %2393 = vmatprep.subr.mxu0 0.0
    %2394 = vmatpush1.msra.mxu0 0.0
    %2395 = vmatprep.subr.mxu0 0.0
    %2396 = vmatpush1.msra.mxu0 0.0
    %2397 = vmatprep.subr.mxu0 0.0
    %2398 = vmatpush1.msra.mxu0 0.0
    %2399 = vmatprep.subr.mxu0 0.0
    %2400 = vmatpush1.msra.mxu0 0.0
    %2401 = vmatprep.subr.mxu0 0.0
    %2402 = vmatpush1.msra.mxu0 0.0
    %2403 = vmatprep.subr.mxu0 0.0
    %2404 = vmatpush1.msra.mxu0 0.0
    %2405 = vmatprep.subr.mxu0 0.0
    %2406 = vmatpush1.msra.mxu0 0.0
    %2407 = vmatprep.subr.mxu0 0.0
    %2408 = vmatpush1.msra.mxu0 0.0
    %2409 = vmatprep.subr.mxu0 0.0
    %2410 = vmatpush1.msra.mxu0 0.0
    %2411 = vmatprep.subr.mxu0 0.0
    %2412 = vmatpush1.msra.mxu0 0.0
    %2413 = vmatprep.subr.mxu0 0.0
    %2414 = vmatpush1.msra.mxu0 0.0
    %2415 = vmatprep.subr.mxu0 0.0
    %2416 = vmatpush1.msra.mxu0 0.0
    %2417 = vmatprep.subr.mxu0 0.0
    %2418 = vmatpush1.msra.mxu0 0.0
    %2419 = vmatprep.subr.mxu0 0.0
    %2420 = vmatpush1.msra.mxu0 0.0
    %2421 = vmatprep.subr.mxu0 0.0
    %2422 = vmatpush1.msra.mxu0 0.0
    %2423 = vmatprep.subr.mxu0 0.0
    %2424 = vmatpush1.msra.mxu0 0.0
    %2425 = vmatprep.subr.mxu0 0.0
    %2426 = vmatpush1.msra.mxu0 0.0
    %2427 = vmatprep.subr.mxu0 0.0
    %2428 = vmatpush1.msra.mxu0 0.0
    %2429 = vmatprep.subr.mxu0 0.0
    %2430 = vmatpush1.msra.mxu0 0.0
    %2431 = vmatprep.subr.mxu0 0.0
    %2432 = vmatpush1.msra.mxu0 0.0
    %2433 = vmatprep.subr.mxu0 0.0
    %2434 = vmatpush1.msra.mxu0 0.0
    %2435 = vmatprep.subr.mxu0 0.0
    %2436 = vmatpush1.msra.mxu0 0.0
    %2437 = vmatprep.subr.mxu0 0.0
    %2438 = vmatpush1.msra.mxu0 0.0
    %2439 = vmatprep.mubr.f32.mxu0 0.0
    %2440 = vmatmul.mubr.f32.gmra.mrb[0].mxu0 %v2358
    %v2441 = vpop.f32.mrb[0].mxu0
    %v2442 = vadd.f32 %v2355, %v2441
    %v2443 = vpop.f32.mrb[0].mxu0
    %2444 = vmatprep.mubr.f32.mxu0 0.0
    %2445 = vmatmul.mubr.f32.gmra.mrb[0].mxu0 %v2361
    %v2446 = vpop.f32.mrb[0].mxu0
    %v2447 = vadd.f32 %v2355, %v2446
    %v2448 = vpop.f32.mrb[0].mxu0
    %2449 = vmatprep.mubr.f32.mxu0 0.0
    %2450 = vmatmul.mubr.f32.gmra.mrb[0].mxu0 %v2364
    %v2451 = vpop.f32.mrb[0].mxu0
    %v2452 = vadd.f32 %v2355, %v2451
    %v2453 = vpop.f32.mrb[0].mxu0
    %2454 = vmatprep.mubr.f32.mxu0 0.0
    %2455 = vmatmul.mubr.f32.gmra.mrb[0].mxu0 %v2367
    %v2456 = vpop.f32.mrb[0].mxu0
    %v2457 = vadd.f32 %v2355, %v2456
    %v2458 = vpop.f32.mrb[0].mxu0
    %2459 = vmatprep.mubr.f32.mxu0 0.0
    %2460 = vmatmul.mubr.f32.gmra.mrb[0].mxu0 %v2370
    %v2461 = vpop.f32.mrb[0].mxu0
    %v2462 = vadd.f32 %v2355, %v2461
    %v2463 = vpop.f32.mrb[0].mxu0
    %2464 = vmatprep.mubr.f32.mxu0 0.0
    %2465 = vmatmul.mubr.f32.gmra.mrb[0].mxu0 %v2373
    %v2466 = vpop.f32.mrb[0].mxu0
    %v2467 = vadd.f32 %v2355, %v2466
    %v2468 = vpop.f32.mrb[0].mxu0
    %2469 = vdwg.mxu0
    %v2470 = vadd.f32 %v2202, %v2442
    %v2471 = vadd.f32 %v2203, %v2447
    %v2472 = vadd.f32 %v2204, %v2452
    %v2473 = vadd.f32 %v2205, %v2457
    %v2474 = vadd.f32 %v2206, %v2462
    %v2475 = vadd.f32 %v2207, %v2467
    %s2476 = scalar_lea.vmem %s19, 1
    %v2477 = vld [vmem:[%s2476] sm:$0x1]
    %s2478 = scalar_lea.vmem %s20, 1
    %v2479 = vld [vmem:[%s2478] sm:$0x1]
    %v2480 = vsel %vm328, %v2470, 0.0
    %2481 = vadd.xlane.f32.xlu0 %v2480
    %v2482 = vpop.xlane.xlu0 %2481
    %v2483 = vsel %vm328, %v2471, 0.0
    %2484 = vadd.xlane.f32.xlu0 %v2483
    %v2485 = vpop.xlane.xlu0 %2484
    %v2486 = vsel %vm328, %v2472, 0.0
    %2487 = vadd.xlane.f32.xlu0 %v2486
    %v2488 = vpop.xlane.xlu0 %2487
    %v2489 = vsel %vm328, %v2473, 0.0
    %2490 = vadd.xlane.f32.xlu0 %v2489
    %v2491 = vpop.xlane.xlu0 %2490
    %v2492 = vsel %vm328, %v2474, 0.0
    %2493 = vadd.xlane.f32.xlu0 %v2492
    %v2494 = vpop.xlane.xlu0 %2493
    %v2495 = vsel %vm328, %v2475, 0.0
    %2496 = vadd.xlane.f32.xlu0 %v2495
    %v2497 = vpop.xlane.xlu0 %2496
    %v2498 = vmul.f32 %v2482, %v989
    %v2499 = vmul.f32 %v2485, %v989
    %v2500 = vmul.f32 %v2488, %v989
    %v2501 = vmul.f32 %v2491, %v989
    %v2502 = vmul.f32 %v2494, %v989
    %v2503 = vmul.f32 %v2497, %v989
    %v2504 = vsub.f32 %v2470, %v2498
    %v2505 = vsub.f32 %v2471, %v2499
    %v2506 = vsub.f32 %v2472, %v2500
    %v2507 = vsub.f32 %v2473, %v2501
    %v2508 = vsub.f32 %v2474, %v2502
    %v2509 = vsub.f32 %v2475, %v2503
    %v2510 = vmul.f32 %v2504, %v2504
    %v2511 = vmul.f32 %v2505, %v2505
    %v2512 = vmul.f32 %v2506, %v2506
    %v2513 = vmul.f32 %v2507, %v2507
    %v2514 = vmul.f32 %v2508, %v2508
    %v2515 = vmul.f32 %v2509, %v2509
    %v2516 = vsel %vm328, %v2510, 0.0
    %2517 = vadd.xlane.f32.xlu0 %v2516
    %v2518 = vpop.xlane.xlu0 %2517
    %v2519 = vsel %vm328, %v2511, 0.0
    %2520 = vadd.xlane.f32.xlu0 %v2519
    %v2521 = vpop.xlane.xlu0 %2520
    %v2522 = vsel %vm328, %v2512, 0.0
    %2523 = vadd.xlane.f32.xlu0 %v2522
    %v2524 = vpop.xlane.xlu0 %2523
    %v2525 = vsel %vm328, %v2513, 0.0
    %2526 = vadd.xlane.f32.xlu0 %v2525
    %v2527 = vpop.xlane.xlu0 %2526
    %v2528 = vsel %vm328, %v2514, 0.0
    %2529 = vadd.xlane.f32.xlu0 %v2528
    %v2530 = vpop.xlane.xlu0 %2529
    %v2531 = vsel %vm328, %v2515, 0.0
    %2532 = vadd.xlane.f32.xlu0 %v2531
    %v2533 = vpop.xlane.xlu0 %2532
    %v2534 = vmul.f32 %v2518, %v989
    %v2535 = vmul.f32 %v2521, %v989
    %v2536 = vmul.f32 %v2524, %v989
    %v2537 = vmul.f32 %v2527, %v989
    %v2538 = vmul.f32 %v2530, %v989
    %v2539 = vmul.f32 %v2533, %v989
    %v2540 = vadd.f32 %v2534, 1e-05
    %v2541 = vadd.f32 %v2535, 1e-05
    %v2542 = vadd.f32 %v2536, 1e-05
    %v2543 = vadd.f32 %v2537, 1e-05
    %v2544 = vadd.f32 %v2538, 1e-05
    %v2545 = vadd.f32 %v2539, 1e-05
    %v2546 = vrsqrt.pop %v2540
    %v2547 = vrsqrt.pop %v2541
    %v2548 = vrsqrt.pop %v2542
    %v2549 = vrsqrt.pop %v2543
    %v2550 = vrsqrt.pop %v2544
    %v2551 = vrsqrt.pop %v2545
    %v2552 = vmul.f32 %v2504, %v2546
    %v2553 = vmul.f32 %v2505, %v2547
    %v2554 = vmul.f32 %v2506, %v2548
    %v2555 = vmul.f32 %v2507, %v2549
    %v2556 = vmul.f32 %v2508, %v2550
    %v2557 = vmul.f32 %v2509, %v2551
    %v2559 = vlaneseq
    %v2560 = vshrl.u32 %v2559, 7
    %v2561 = vsub.s32 0, %v2560
    %v2562 = vrot.slane %v2477, %v2561
    %v2564 = vmul.f32 %v2552, %v2562
    %v2565 = vmul.f32 %v2553, %v2562
    %v2566 = vmul.f32 %v2554, %v2562
    %v2567 = vmul.f32 %v2555, %v2562
    %v2568 = vmul.f32 %v2556, %v2562
    %v2569 = vmul.f32 %v2557, %v2562
    %v2571 = vlaneseq
    %v2572 = vshrl.u32 %v2571, 7
    %v2573 = vsub.s32 0, %v2572
    %v2574 = vrot.slane %v2479, %v2573
    %v2576 = vadd.f32 %v2564, %v2574
    %v2577 = vadd.f32 %v2565, %v2574
    %v2578 = vadd.f32 %v2566, %v2574
    %v2579 = vadd.f32 %v2567, %v2574
    %v2580 = vadd.f32 %v2568, %v2574
    %v2581 = vadd.f32 %v2569, %v2574
    %v2582 = vld [vmem:[#allocation25] sm:$0xff]
    %v2583 = vld [vmem:[#allocation25 + $0x8] sm:$0xff]
    %v2584 = vld [vmem:[#allocation25 + $0x10] sm:$0xff]
    %v2585 = vld [vmem:[#allocation25 + $0x18] sm:$0xff]
    %v2586 = vld [vmem:[#allocation26] sm:$0xff]
    %v2587 = vld [vmem:[#allocation26 + $0x8] sm:$0xff]
    %v2588 = vld [vmem:[#allocation26 + $0x10] sm:$0xff]
    %v2589 = vld [vmem:[#allocation26 + $0x18] sm:$0xff]
    %v2591 = vsel %vm328, %v2579, 0
    %v2594 = vsel %vm328, %v2580, 0
    %v2597 = vsel %vm328, %v2581, 0
    %2599 = vmatprep.subr.mxu0 0.0
    %2600 = vmatpush1.msra.mxu0 %v2586
    %2601 = vmatprep.subr.mxu0 0.0
    %2602 = vmatpush1.msra.mxu0 %v2587
    %2603 = vmatprep.subr.mxu0 0.0
    %2604 = vmatpush1.msra.mxu0 %v2588
    %2605 = vmatprep.subr.mxu0 0.0
    %2606 = vmatpush1.msra.mxu0 %v2589
    %2607 = vmatprep.subr.mxu0 0.0
    %2608 = vmatpush1.msra.mxu0 0.0
    %2609 = vmatprep.subr.mxu0 0.0
    %2610 = vmatpush1.msra.mxu0 0.0
    %2611 = vmatprep.subr.mxu0 0.0
    %2612 = vmatpush1.msra.mxu0 0.0
    %2613 = vmatprep.subr.mxu0 0.0
    %2614 = vmatpush1.msra.mxu0 0.0
    %2615 = vmatprep.subr.mxu0 0.0
    %2616 = vmatpush1.msra.mxu0 0.0
    %2617 = vmatprep.subr.mxu0 0.0
    %2618 = vmatpush1.msra.mxu0 0.0
    %2619 = vmatprep.subr.mxu0 0.0
    %2620 = vmatpush1.msra.mxu0 0.0
    %2621 = vmatprep.subr.mxu0 0.0
    %2622 = vmatpush1.msra.mxu0 0.0
    %2623 = vmatprep.subr.mxu0 0.0
    %2624 = vmatpush1.msra.mxu0 0.0
    %2625 = vmatprep.subr.mxu0 0.0
    %2626 = vmatpush1.msra.mxu0 0.0
    %2627 = vmatprep.subr.mxu0 0.0
    %2628 = vmatpush1.msra.mxu0 0.0
    %2629 = vmatprep.subr.mxu0 0.0
    %2630 = vmatpush1.msra.mxu0 0.0
    %2631 = vmatprep.subr.mxu0 0.0
    %2632 = vmatpush1.msra.mxu0 0.0
    %2633 = vmatprep.subr.mxu0 0.0
    %2634 = vmatpush1.msra.mxu0 0.0
    %2635 = vmatprep.subr.mxu0 0.0
    %2636 = vmatpush1.msra.mxu0 0.0
    %2637 = vmatprep.subr.mxu0 0.0
    %2638 = vmatpush1.msra.mxu0 0.0
    %2639 = vmatprep.subr.mxu0 0.0
    %2640 = vmatpush1.msra.mxu0 0.0
    %2641 = vmatprep.subr.mxu0 0.0
    %2642 = vmatpush1.msra.mxu0 0.0
    %2643 = vmatprep.subr.mxu0 0.0
    %2644 = vmatpush1.msra.mxu0 0.0
    %2645 = vmatprep.subr.mxu0 0.0
    %2646 = vmatpush1.msra.mxu0 0.0
    %2647 = vmatprep.subr.mxu0 0.0
    %2648 = vmatpush1.msra.mxu0 0.0
    %2649 = vmatprep.subr.mxu0 0.0
    %2650 = vmatpush1.msra.mxu0 0.0
    %2651 = vmatprep.subr.mxu0 0.0
    %2652 = vmatpush1.msra.mxu0 0.0
    %2653 = vmatprep.subr.mxu0 0.0
    %2654 = vmatpush1.msra.mxu0 0.0
    %2655 = vmatprep.subr.mxu0 0.0
    %2656 = vmatpush1.msra.mxu0 0.0
    %2657 = vmatprep.subr.mxu0 0.0
    %2658 = vmatpush1.msra.mxu0 0.0
    %2659 = vmatprep.subr.mxu0 0.0
    %2660 = vmatpush1.msra.mxu0 0.0
    %2661 = vmatprep.subr.mxu0 0.0
    %2662 = vmatpush1.msra.mxu0 0.0
    %2663 = vmatprep.mubr.f32.mxu0 0.0
    %2664 = vmatmul.mubr.f32.gmra.mrb[0].mxu0 %v2591
    %v2665 = vpop.f32.mrb[0].mxu0
    %v2666 = vadd.f32 0.0, %v2665
    %v2667 = vpop.f32.mrb[0].mxu0
    %2668 = vmatprep.mubr.f32.mxu0 0.0
    %2669 = vmatmul.mubr.f32.gmra.mrb[0].mxu0 %v2594
    %v2670 = vpop.f32.mrb[0].mxu0
    %v2671 = vadd.f32 0.0, %v2670
    %v2672 = vpop.f32.mrb[0].mxu0
    %2673 = vmatprep.mubr.f32.mxu0 0.0
    %2674 = vmatmul.mubr.f32.gmra.mrb[0].mxu0 %v2597
    %v2675 = vpop.f32.mrb[0].mxu0
    %v2676 = vadd.f32 0.0, %v2675
    %v2677 = vpop.f32.mrb[0].mxu0
    %2678 = vdwg.mxu0
    %v2680 = vsel %vm328, %v2576, 0
    %v2683 = vsel %vm328, %v2577, 0
    %v2686 = vsel %vm328, %v2578, 0
    %2688 = vmatprep.subr.mxu0 0.0
    %2689 = vmatpush1.msra.mxu0 %v2582
    %2690 = vmatprep.subr.mxu0 0.0
    %2691 = vmatpush1.msra.mxu0 %v2583
    %2692 = vmatprep.subr.mxu0 0.0
    %2693 = vmatpush1.msra.mxu0 %v2584
    %2694 = vmatprep.subr.mxu0 0.0
    %2695 = vmatpush1.msra.mxu0 %v2585
    %2696 = vmatprep.subr.mxu0 0.0
    %2697 = vmatpush1.msra.mxu0 0.0
    %2698 = vmatprep.subr.mxu0 0.0
    %2699 = vmatpush1.msra.mxu0 0.0
    %2700 = vmatprep.subr.mxu0 0.0
    %2701 = vmatpush1.msra.mxu0 0.0
    %2702 = vmatprep.subr.mxu0 0.0
    %2703 = vmatpush1.msra.mxu0 0.0
    %2704 = vmatprep.subr.mxu0 0.0
    %2705 = vmatpush1.msra.mxu0 0.0
    %2706 = vmatprep.subr.mxu0 0.0
    %2707 = vmatpush1.msra.mxu0 0.0
    %2708 = vmatprep.subr.mxu0 0.0
    %2709 = vmatpush1.msra.mxu0 0.0
    %2710 = vmatprep.subr.mxu0 0.0
    %2711 = vmatpush1.msra.mxu0 0.0
    %2712 = vmatprep.subr.mxu0 0.0
    %2713 = vmatpush1.msra.mxu0 0.0
    %2714 = vmatprep.subr.mxu0 0.0
    %2715 = vmatpush1.msra.mxu0 0.0
    %2716 = vmatprep.subr.mxu0 0.0
    %2717 = vmatpush1.msra.mxu0 0.0
    %2718 = vmatprep.subr.mxu0 0.0
    %2719 = vmatpush1.msra.mxu0 0.0
    %2720 = vmatprep.subr.mxu0 0.0
    %2721 = vmatpush1.msra.mxu0 0.0
    %2722 = vmatprep.subr.mxu0 0.0
    %2723 = vmatpush1.msra.mxu0 0.0
    %2724 = vmatprep.subr.mxu0 0.0
    %2725 = vmatpush1.msra.mxu0 0.0
    %2726 = vmatprep.subr.mxu0 0.0
    %2727 = vmatpush1.msra.mxu0 0.0
    %2728 = vmatprep.subr.mxu0 0.0
    %2729 = vmatpush1.msra.mxu0 0.0
    %2730 = vmatprep.subr.mxu0 0.0
    %2731 = vmatpush1.msra.mxu0 0.0
    %2732 = vmatprep.subr.mxu0 0.0
    %2733 = vmatpush1.msra.mxu0 0.0
    %2734 = vmatprep.subr.mxu0 0.0
    %2735 = vmatpush1.msra.mxu0 0.0
    %2736 = vmatprep.subr.mxu0 0.0
    %2737 = vmatpush1.msra.mxu0 0.0
    %2738 = vmatprep.subr.mxu0 0.0
    %2739 = vmatpush1.msra.mxu0 0.0
    %2740 = vmatprep.subr.mxu0 0.0
    %2741 = vmatpush1.msra.mxu0 0.0
    %2742 = vmatprep.subr.mxu0 0.0
    %2743 = vmatpush1.msra.mxu0 0.0
    %2744 = vmatprep.subr.mxu0 0.0
    %2745 = vmatpush1.msra.mxu0 0.0
    %2746 = vmatprep.subr.mxu0 0.0
    %2747 = vmatpush1.msra.mxu0 0.0
    %2748 = vmatprep.subr.mxu0 0.0
    %2749 = vmatpush1.msra.mxu0 0.0
    %2750 = vmatprep.subr.mxu0 0.0
    %2751 = vmatpush1.msra.mxu0 0.0
    %2752 = vmatprep.mubr.f32.mxu0 0.0
    %2753 = vmatmul.mubr.f32.gmra.mrb[0].mxu0 %v2680
    %v2754 = vpop.f32.mrb[0].mxu0
    %v2755 = vadd.f32 %v2666, %v2754
    %v2756 = vpop.f32.mrb[0].mxu0
    %2757 = vmatprep.mubr.f32.mxu0 0.0
    %2758 = vmatmul.mubr.f32.gmra.mrb[0].mxu0 %v2683
    %v2759 = vpop.f32.mrb[0].mxu0
    %v2760 = vadd.f32 %v2671, %v2759
    %v2761 = vpop.f32.mrb[0].mxu0
    %2762 = vmatprep.mubr.f32.mxu0 0.0
    %2763 = vmatmul.mubr.f32.gmra.mrb[0].mxu0 %v2686
    %v2764 = vpop.f32.mrb[0].mxu0
    %v2765 = vadd.f32 %v2676, %v2764
    %v2766 = vpop.f32.mrb[0].mxu0
    %2767 = vdwg.mxu0
    %v2768 = vld [vmem:[%s23] sm:$0x1]
    %v2770 = vlaneseq
    %v2771 = vshrl.u32 %v2770, 7
    %v2772 = vsub.s32 0, %v2771
    %v2773 = vrot.slane %v2768, %v2772
    %v2775 = vadd.f32 %v2755, %v2773
    %v2776 = vadd.f32 %v2760, %v2773
    %v2777 = vadd.f32 %v2765, %v2773
    %2778 = vmatprep.subr.mxu0 0.0
    %2779 = vmatpush1.xpose.msra.mxu0 %v2775
    %2780 = vmatprep.subr.mxu0 0.0
    %2781 = vmatpush1.xpose.msra.mxu0 0.0
    %2782 = vmatprep.subr.mxu0 0.0
    %2783 = vmatpush1.xpose.msra.mxu0 0.0
    %2784 = vmatprep.subr.mxu0 0.0
    %2785 = vmatpush1.xpose.msra.mxu0 0.0
    %2786 = vmatprep.subr.mxu0 0.0
    %2787 = vmatpush1.xpose.msra.mxu0 0.0
    %2788 = vmatprep.subr.mxu0 0.0
    %2789 = vmatpush1.xpose.msra.mxu0 0.0
    %2790 = vmatprep.subr.mxu0 0.0
    %2791 = vmatpush1.xpose.msra.mxu0 0.0
    %2792 = vmatprep.subr.mxu0 0.0
    %2793 = vmatpush1.xpose.msra.mxu0 0.0
    %2794 = vmatprep.subr.mxu0 0.0
    %2795 = vmatpush1.xpose.msra.mxu0 0.0
    %2796 = vmatprep.subr.mxu0 0.0
    %2797 = vmatpush1.xpose.msra.mxu0 0.0
    %2798 = vmatprep.subr.mxu0 0.0
    %2799 = vmatpush1.xpose.msra.mxu0 0.0
    %2800 = vmatprep.subr.mxu0 0.0
    %2801 = vmatpush1.xpose.msra.mxu0 0.0
    %2802 = vmatprep.subr.mxu0 0.0
    %2803 = vmatpush1.xpose.msra.mxu0 0.0
    %2804 = vmatprep.subr.mxu0 0.0
    %2805 = vmatpush1.xpose.msra.mxu0 0.0
    %2806 = vmatprep.subr.mxu0 0.0
    %2807 = vmatpush1.xpose.msra.mxu0 0.0
    %2808 = vmatprep.subr.mxu0 0.0
    %2809 = vmatpush1.xpose.msra.mxu0 0.0
    %2810 = vmatprep.subr.mxu0 0.0
    %2811 = vmatpush1.xpose.msra.mxu0 0.0
    %2812 = vmatprep.subr.mxu0 0.0
    %2813 = vmatpush1.xpose.msra.mxu0 0.0
    %2814 = vmatprep.subr.mxu0 0.0
    %2815 = vmatpush1.xpose.msra.mxu0 0.0
    %2816 = vmatprep.subr.mxu0 0.0
    %2817 = vmatpush1.xpose.msra.mxu0 0.0
    %2818 = vmatprep.subr.mxu0 0.0
    %2819 = vmatpush1.xpose.msra.mxu0 0.0
    %2820 = vmatprep.subr.mxu0 0.0
    %2821 = vmatpush1.xpose.msra.mxu0 0.0
    %2822 = vmatprep.subr.mxu0 0.0
    %2823 = vmatpush1.xpose.msra.mxu0 0.0
    %2824 = vmatprep.subr.mxu0 0.0
    %2825 = vmatpush1.xpose.msra.mxu0 0.0
    %2826 = vmatprep.subr.mxu0 0.0
    %2827 = vmatpush1.xpose.msra.mxu0 0.0
    %2828 = vmatprep.subr.mxu0 0.0
    %2829 = vmatpush1.xpose.msra.mxu0 0.0
    %2830 = vmatprep.subr.mxu0 0.0
    %2831 = vmatpush1.xpose.msra.mxu0 0.0
    %2832 = vmatprep.subr.mxu0 0.0
    %2833 = vmatpush1.xpose.msra.mxu0 0.0
    %2834 = vmatprep.subr.mxu0 0.0
    %2835 = vmatpush1.xpose.msra.mxu0 0.0
    %2836 = vmatprep.subr.mxu0 0.0
    %2837 = vmatpush1.xpose.msra.mxu0 0.0
    %2838 = vmatprep.subr.mxu0 0.0
    %2839 = vmatpush1.xpose.msra.mxu0 0.0
    %2840 = vmatprep.subr.mxu0 0.0
    %2841 = vmatpush1.xpose.msra.mxu0 0.0
    %2842 = vmatprep.mubr.f32.mxu0 0.0
    %2843 = vmatmul.mubr.f32.gmra.mrb[0].mxu0 %v2776
    %v2844 = vpop.f32.mrb[0].mxu0
    %v2845 = vadd.f32 0.0, %v2844
    %v2846 = vpop.f32.mrb[0].mxu0
    %2847 = vmatprep.mubr.f32.mxu0 0.0
    %2848 = vmatmul.mubr.f32.gmra.mrb[0].mxu0 %v2777
    %v2849 = vpop.f32.mrb[0].mxu0
    %v2850 = vadd.f32 0.0, %v2849
    %v2851 = vpop.f32.mrb[0].mxu0
    %2852 = vdwg.mxu0
    %v2853 = vmul.f32 %v2845, 0.088388346
    %v2854 = vmul.f32 %v2850, 0.088388346
    %v2855 = vld [vmem:[#allocation8] sm:$0x1]
    %v2857 = vlaneseq
    %v2858 = vshrl.u32 %v2857, 7
    %v2859 = vsub.s32 0, %v2858
    %v2860 = vrot.slane %v2855, %v2859
    %v2862 = vadd.f32 %v2853, %v2860
    %v2863 = vadd.f32 %v2854, %v2860
    %vm2864 = vcmask 64512
    %v2865 = vsel %vm2864, %v2862, -inf
    %2866 = vmax.xlane.f32.xlu0 %v2865
    %v2867 = vpop.xlane.xlu0 %2866
    %v2868 = vsel %vm2864, %v2863, -inf
    %2869 = vmax.xlane.f32.xlu0 %v2868
    %v2870 = vpop.xlane.xlu0 %2869
    %v2871 = vsub.f32 %v2862, %v2867
    %v2872 = vsub.f32 %v2863, %v2870
    %v2873 = vmul.f32 %v2871, 1.442695
    %v2874 = vpow.pop %v2873
    %v2875 = vmul.f32 %v2872, 1.442695
    %v2876 = vpow.pop %v2875
    %v2877 = vsel %vm2864, %v2874, 0.0
    %2878 = vadd.xlane.f32.xlu0 %v2877
    %v2879 = vpop.xlane.xlu0 %2878
    %v2880 = vsel %vm2864, %v2876, 0.0
    %2881 = vadd.xlane.f32.xlu0 %v2880
    %v2882 = vpop.xlane.xlu0 %2881
    %v2883 = vrcp.pop %v2879
    %v2884 = vrcp.pop %v2882
    %v2885 = vmul.f32 %v2874, %v2883
    %v2886 = vmul.f32 %v2876, %v2884
    %v2888 = vsel %vm2864, %v2885, 0
    %v2891 = vsel %vm2864, %v2886, 0
    %2893 = vmatprep.subr.mxu0 0.0
    %2894 = vmatpush1.msra.mxu0 %v2775
    %2895 = vmatprep.subr.mxu0 0.0
    %2896 = vmatpush1.msra.mxu0 0.0
    %2897 = vmatprep.subr.mxu0 0.0
    %2898 = vmatpush1.msra.mxu0 0.0
    %2899 = vmatprep.subr.mxu0 0.0
    %2900 = vmatpush1.msra.mxu0 0.0
    %2901 = vmatprep.subr.mxu0 0.0
    %2902 = vmatpush1.msra.mxu0 0.0
    %2903 = vmatprep.subr.mxu0 0.0
    %2904 = vmatpush1.msra.mxu0 0.0
    %2905 = vmatprep.subr.mxu0 0.0
    %2906 = vmatpush1.msra.mxu0 0.0
    %2907 = vmatprep.subr.mxu0 0.0
    %2908 = vmatpush1.msra.mxu0 0.0
    %2909 = vmatprep.subr.mxu0 0.0
    %2910 = vmatpush1.msra.mxu0 0.0
    %2911 = vmatprep.subr.mxu0 0.0
    %2912 = vmatpush1.msra.mxu0 0.0
    %2913 = vmatprep.subr.mxu0 0.0
    %2914 = vmatpush1.msra.mxu0 0.0
    %2915 = vmatprep.subr.mxu0 0.0
    %2916 = vmatpush1.msra.mxu0 0.0
    %2917 = vmatprep.subr.mxu0 0.0
    %2918 = vmatpush1.msra.mxu0 0.0
    %2919 = vmatprep.subr.mxu0 0.0
    %2920 = vmatpush1.msra.mxu0 0.0
    %2921 = vmatprep.subr.mxu0 0.0
    %2922 = vmatpush1.msra.mxu0 0.0
    %2923 = vmatprep.subr.mxu0 0.0
    %2924 = vmatpush1.msra.mxu0 0.0
    %2925 = vmatprep.subr.mxu0 0.0
    %2926 = vmatpush1.msra.mxu0 0.0
    %2927 = vmatprep.subr.mxu0 0.0
    %2928 = vmatpush1.msra.mxu0 0.0
    %2929 = vmatprep.subr.mxu0 0.0
    %2930 = vmatpush1.msra.mxu0 0.0
    %2931 = vmatprep.subr.mxu0 0.0
    %2932 = vmatpush1.msra.mxu0 0.0
    %2933 = vmatprep.subr.mxu0 0.0
    %2934 = vmatpush1.msra.mxu0 0.0
    %2935 = vmatprep.subr.mxu0 0.0
    %2936 = vmatpush1.msra.mxu0 0.0
    %2937 = vmatprep.subr.mxu0 0.0
    %2938 = vmatpush1.msra.mxu0 0.0
    %2939 = vmatprep.subr.mxu0 0.0
    %2940 = vmatpush1.msra.mxu0 0.0
    %2941 = vmatprep.subr.mxu0 0.0
    %2942 = vmatpush1.msra.mxu0 0.0
    %2943 = vmatprep.subr.mxu0 0.0
    %2944 = vmatpush1.msra.mxu0 0.0
    %2945 = vmatprep.subr.mxu0 0.0
    %2946 = vmatpush1.msra.mxu0 0.0
    %2947 = vmatprep.subr.mxu0 0.0
    %2948 = vmatpush1.msra.mxu0 0.0
    %2949 = vmatprep.subr.mxu0 0.0
    %2950 = vmatpush1.msra.mxu0 0.0
    %2951 = vmatprep.subr.mxu0 0.0
    %2952 = vmatpush1.msra.mxu0 0.0
    %2953 = vmatprep.subr.mxu0 0.0
    %2954 = vmatpush1.msra.mxu0 0.0
    %2955 = vmatprep.subr.mxu0 0.0
    %2956 = vmatpush1.msra.mxu0 0.0
    %2957 = vmatprep.mubr.f32.mxu0 0.0
    %2958 = vmatmul.mubr.f32.gmra.mrb[0].mxu0 %v2888
    %v2959 = vpop.f32.mrb[0].mxu0
    %v2960 = vadd.f32 0.0, %v2959
    %v2961 = vpop.f32.mrb[0].mxu0
    %2962 = vmatprep.mubr.f32.mxu0 0.0
    %2963 = vmatmul.mubr.f32.gmra.mrb[0].mxu0 %v2891
    %v2964 = vpop.f32.mrb[0].mxu0
    %v2965 = vadd.f32 0.0, %v2964
    %v2966 = vpop.f32.mrb[0].mxu0
    %2967 = vdwg.mxu0
    %v2968 = vmul.f32 %v2776, %v2960
    %v2969 = vmul.f32 %v2777, %v2965
    %2970 = vadd.xlane.f32.xlu0 %v2968
    %v2971 = vpop.xlane.xlu0 %2970
    %2972 = vadd.xlane.f32.xlu0 %v2969
    %v2973 = vpop.xlane.xlu0 %2972
    %2974 = vst [vmem:[#allocation28] sm:$0xff] %v2971
    %2975 = vst [vmem:[#allocation28 + $0x8] sm:$0xff] %v2973
    // Predicated region
    $region162: #{tpu_custom_call.1} parent=1 // pred_check
      _
    $region163: #{tpu_custom_call.1} parent=1 // pred_check_branch
      %2977 = sbr.rel (0) target = $region165
    $region164: #{tpu_custom_call.1} parent=1 // pred_region
      %s2979 = ssub.s32 256, 256
      %2980 = vsyncadd [#allocation4], %s2979
      %s2981 = sshll.u32 [#allocation28], 4
      %s2982 = int_to_ptr.vmem [resolvable:$true] %s2981
      %2987 = dma.vmem_to_hbm [thread:$0]  %s2982, 256, %s24, [#allocation4], 128, 128, 8
    $region165: #{tpu_custom_call.1} parent=1 // pred_fallthru
      _
    // Predicated region
    $region166: #{tpu_custom_call.1} parent=1 // pred_check
      _
    $region167: #{tpu_custom_call.1} parent=1 // pred_check_branch
      %2989 = sbr.rel (0) target = $region169
    $region168: #{tpu_custom_call.1} parent=1 // pred_region
      %2990 = dma.done [#allocation4], 256
    $region169: #{tpu_custom_call.1} parent=1 // pred_fallthru
      _
    %2991 = vsyncpa [#allocation3], 1
    %2992 = vsyncpa [#allocation6], 1
    %2993 = vsyncpa [#allocation9], 1
    %2994 = vsyncpa [#allocation12], 1
    %2995 = vsyncpa [#allocation15], 1
    %2996 = vsyncpa [#allocation18], 1
    %2997 = vsyncpa [#allocation21], 1
    %2998 = vsyncpa [#allocation24], 1
    %2999 = vsyncpa [#allocation27], 1
    %3000 = vsyncpa [#allocation4], 1

</llo_original>
